<compile_context>
chip_gen: v7x
topology: tpu7x:2x2x1
jax: 0.10.0
libtpu: 0.0.40
codegen_flags: <defaults>
</compile_context>

<pallas_src>
import math

import jax
import jax.numpy as jnp
from jax import lax
from jax.experimental import pallas as pl
from jax.experimental.pallas import tpu as pltpu

# ---------------------------------------------------------------------------
# Problem sizes (small, consistent with ISAB(dim_in, dim_out, num_heads, num_inds))
# ---------------------------------------------------------------------------
B = 2
N = 8            # set size (sequence length of X)
DIM_IN = 16
DIM_OUT = 32     # == dim_V of both internal MABs
NUM_HEADS = 4
NUM_INDS = 8     # number of inducing points
DS = DIM_OUT // NUM_HEADS   # per-head width


# ---------------------------------------------------------------------------
# In-kernel multi-head attention (+ Q residual) for both batch elements.
# ---------------------------------------------------------------------------
def _multihead(get_q, kv, nq, nk, out_ref):
    """kv: (B*nk, 2*DIM_OUT) value; [:, :DIM_OUT] keys pre-scaled by 1/sqrt(dim_V),
    [:, DIM_OUT:] values.  get_q(b): (nq, DIM_OUT) projected queries for batch b.
    Head h / batch b is written to rows [b*nq,(b+1)*nq) and lanes [h*DS,(h+1)*DS)
    of out_ref (a VMEM ref) — avoids lane-concatenation of narrow head outputs."""
    for b in range(B):
        kb = kv[b * nk:(b + 1) * nk, 0:DIM_OUT]
        vb = kv[b * nk:(b + 1) * nk, DIM_OUT:2 * DIM_OUT]
        qb = get_q(b)
        for h in range(NUM_HEADS):
            lo = h * DS
            qh = qb[:, lo:lo + DS]
            kh = kb[:, lo:lo + DS]
            vh = vb[:, lo:lo + DS]
            # Scores: contract on the last dim -> no transpose of kh materialized.
            s = lax.dot_general(qh, kh, (((1,), (1,)), ((), ())),
                                preferred_element_type=jnp.float32)      # (nq, nk)
            s = s - jnp.max(s, axis=-1, keepdims=True)
            e = jnp.exp(s)
            a = e * pl.reciprocal(jnp.sum(e, axis=-1, keepdims=True), approx=True)
            out_ref[b * nq:(b + 1) * nq, lo:lo + DS] = qh + jnp.dot(
                a, vh, preferred_element_type=jnp.float32)


# ---------------------------------------------------------------------------
# Single-invocation ISAB kernel: MAB0(I, X) -> H, then MAB1(X, H).
# ---------------------------------------------------------------------------
def isab_kernel(x_ref, q0p_ref, wx_ref, wo0_ref, wkv1_ref, wo1_ref, b_ref,
                o_ref, h_sc):
    x = x_ref[...]                                       # (B*N, DIM_IN)
    q0p = q0p_ref[...]                                   # (NUM_INDS, DIM_OUT) = fc_q0(I)

    # Fused X-side projection: [fc_k0 (pre-scaled) | fc_v0 | fc_q1](X), one matmul.
    bx = b_ref[0:1, :]                                   # (1, 3*DIM_OUT)
    xp = jnp.dot(x, wx_ref[...], preferred_element_type=jnp.float32) + bx
    kv0 = xp[:, 0:2 * DIM_OUT]                           # (B*N, 2*DIM_OUT)
    q1p = xp[:, 2 * DIM_OUT:3 * DIM_OUT]                 # (B*N, DIM_OUT)

    # ---- MAB0: Q = inducing points (shared across batch), K/V = X ----------
    _multihead(lambda b: q0p, kv0, NUM_INDS, N, h_sc)
    o0 = h_sc[...]                                       # (B*NUM_INDS, DIM_OUT)
    bo0 = b_ref[1:2, 0:DIM_OUT]
    hmid = o0 + jnp.maximum(
        jnp.dot(o0, wo0_ref[...], preferred_element_type=jnp.float32) + bo0, 0.0)

    # ---- MAB1: Q = X (q1p from the fused projection), K/V = H --------------
    bkv1 = b_ref[2:3, 0:2 * DIM_OUT]
    kv1 = jnp.dot(hmid, wkv1_ref[...], preferred_element_type=jnp.float32) + bkv1
    _multihead(lambda b: q1p[b * N:(b + 1) * N, :], kv1, N, NUM_INDS, o_ref)
    o1 = o_ref[...]                                      # (B*N, DIM_OUT)
    bo1 = b_ref[3:4, 0:DIM_OUT]
    o_ref[...] = (o1 + jnp.maximum(
        jnp.dot(o1, wo1_ref[...], preferred_element_type=jnp.float32) + bo1,
        0.0)).astype(o_ref.dtype)


def isab_forward(X, packed):
    """X: (B, N, DIM_IN) -> (B, N, DIM_OUT)."""
    q0p, wx, wo0, wkv1, wo1, biases = packed
    x_flat = X.reshape(B * N, DIM_IN)                    # row-major, no transpose
    vmem = pl.BlockSpec(memory_space=pltpu.MemorySpace.VMEM)
    out = pl.pallas_call(
        isab_kernel,
        out_shape=jax.ShapeDtypeStruct((B * N, DIM_OUT), jnp.float32),
        in_specs=[vmem] * 7,
        out_specs=vmem,
        scratch_shapes=[pltpu.VMEM((B * NUM_INDS, DIM_OUT), jnp.float32)],
    )(x_flat, q0p, wx, wo0, wkv1, wo1, biases)
    return out.reshape(B, N, DIM_OUT)


# ---------------------------------------------------------------------------
# Parameter init (PyTorch-style) and init-time packing / constant folding.
# ---------------------------------------------------------------------------
def _linear_init(key, fan_in, fan_out):
    k1, k2 = jax.random.split(key)
    bound = 1.0 / math.sqrt(fan_in)
    w = jax.random.uniform(k1, (fan_in, fan_out), jnp.float32, -bound, bound)
    b = jax.random.uniform(k2, (1, fan_out), jnp.float32, -bound, bound)
    return w, b


def init_params(key):
    ks = jax.random.split(key, 9)
    bound = math.sqrt(6.0 / (NUM_INDS * DIM_OUT + DIM_OUT))   # xavier-style for I
    I = jax.random.uniform(ks[0], (NUM_INDS, DIM_OUT), jnp.float32, -bound, bound)
    mab0 = (_linear_init(ks[1], DIM_OUT, DIM_OUT)    # fc_q (dim_Q = dim_out)
            + _linear_init(ks[2], DIM_IN, DIM_OUT)   # fc_k
            + _linear_init(ks[3], DIM_IN, DIM_OUT)   # fc_v
            + _linear_init(ks[4], DIM_OUT, DIM_OUT)) # fc_o
    mab1 = (_linear_init(ks[5], DIM_IN, DIM_OUT)     # fc_q (dim_Q = dim_in)
            + _linear_init(ks[6], DIM_OUT, DIM_OUT)  # fc_k
            + _linear_init(ks[7], DIM_OUT, DIM_OUT)  # fc_v
            + _linear_init(ks[8], DIM_OUT, DIM_OUT)) # fc_o
    return I, mab0, mab1


def pack_params(I, mab0, mab1):
    """Init-time fusion / constant folding (parameters only, no runtime inputs)."""
    wq0, bq0, wk0, bk0, wv0, bv0, wo0, bo0 = mab0
    wq1, bq1, wk1, bk1, wv1, bv1, wo1, bo1 = mab1
    s = 1.0 / math.sqrt(DIM_OUT)            # PyTorch scales scores by sqrt(dim_V)
    # fc_q0(I) depends only on learned parameters -> fold at init.
    q0p = I @ wq0 + bq0                                           # (NUM_INDS, DIM_OUT)
    # Fuse every projection that consumes X; pre-scale the K halves.
    wx = jnp.concatenate([wk0 * s, wv0, wq1], axis=1)             # (DIM_IN, 3*DIM_OUT)
    bx = jnp.concatenate([bk0 * s, bv0, bq1], axis=1)             # (1, 3*DIM_OUT)
    wkv1 = jnp.concatenate([wk1 * s, wv1], axis=1)                # (DIM_OUT, 2*DIM_OUT)
    bkv1 = jnp.concatenate([bk1 * s, bv1], axis=1)                # (1, 2*DIM_OUT)
    width = 3 * DIM_OUT
    pad = lambda b: jnp.pad(b, ((0, 0), (0, width - b.shape[1])))
    biases = jnp.concatenate([bx, pad(bo0), pad(bkv1), pad(bo1)], axis=0)  # (4, 96)
    return q0p, wx, wo0, wkv1, wo1, biases


# ---------------------------------------------------------------------------
# Pure-JAX reference mirroring the PyTorch ISAB forward exactly.
# ---------------------------------------------------------------------------
def _mab_reference(Q, K, p):
    wq, bq, wk, bk, wv, bv, wo, bo = p
    Qp = Q @ wq + bq
    Kp = K @ wk + bk
    Vp = K @ wv + bv
    split_cat = lambda x: jnp.concatenate(jnp.split(x, NUM_HEADS, axis=2), axis=0)
    Q_, K_, V_ = split_cat(Qp), split_cat(Kp), split_cat(Vp)
    A = jax.nn.softmax(
        jnp.einsum('bqd,bkd->bqk', Q_, K_) / math.sqrt(DIM_OUT), axis=2)
    O = Q_ + jnp.einsum('bqk,bkd->bqd', A, V_)
    O = jnp.concatenate(jnp.split(O, NUM_HEADS, axis=0), axis=2)
    return O + jax.nn.relu(O @ wo + bo)


def isab_reference(X, I, mab0, mab1):
    Ib = jnp.broadcast_to(I[None], (X.shape[0], NUM_INDS, DIM_OUT))  # I.repeat(B,1,1)
    H = _mab_reference(Ib, X, mab0)
    return _mab_reference(X, H, mab1)


if __name__ == "__main__":
    key = jax.random.PRNGKey(0)
    kx, kp = jax.random.split(key)
    X = jax.random.normal(kx, (B, N, DIM_IN), jnp.float32)
    I, mab0_p, mab1_p = init_params(kp)
    packed = pack_params(I, mab0_p, mab1_p)

    out = isab_forward(X, packed)
    out = jax.block_until_ready(out)

    ref = isab_reference(X, I, mab0_p, mab1_p)
    assert out.shape == (B, N, DIM_OUT)
    # 2e-3 tolerance: the softmax denominator uses the EUP approximate reciprocal.
    assert jnp.allclose(out, ref, atol=2e-3, rtol=2e-3), (
        f"mismatch vs reference, max abs err={jnp.max(jnp.abs(out - ref))}")
    print("KERNEL_OK")
</pallas_src>

<mosaic_0001>
module attributes {stable_mosaic.version = 11 : i64} {
  func.func @isab_kernel(%arg0: memref<16x16xf32, #tpu.memory_space<vmem>>, %arg1: memref<8x32xf32, #tpu.memory_space<vmem>>, %arg2: memref<16x96xf32, #tpu.memory_space<vmem>>, %arg3: memref<32x32xf32, #tpu.memory_space<vmem>>, %arg4: memref<32x64xf32, #tpu.memory_space<vmem>>, %arg5: memref<32x32xf32, #tpu.memory_space<vmem>>, %arg6: memref<4x96xf32, #tpu.memory_space<vmem>>, %arg7: memref<16x32xf32, #tpu.memory_space<vmem>>, %arg8: memref<16x32xf32, #tpu.memory_space<vmem>>) attributes {dimension_semantics = [], scalar_prefetch = 0 : i64, scratch_operands = 1 : i64, tpu.core_type = #tpu.core_type<tc>} {
    %c0 = arith.constant 0 : index
    %c0_0 = arith.constant 0 : index
    %0 = vector.load %arg0[%c0, %c0_0] : memref<16x16xf32, #tpu.memory_space<vmem>>, vector<16x16xf32>
    %c0_1 = arith.constant 0 : index
    %c0_2 = arith.constant 0 : index
    %1 = vector.load %arg1[%c0_1, %c0_2] : memref<8x32xf32, #tpu.memory_space<vmem>>, vector<8x32xf32>
    %c0_3 = arith.constant 0 : index
    %c0_4 = arith.constant 0 : index
    %2 = vector.load %arg6[%c0_3, %c0_4] : memref<4x96xf32, #tpu.memory_space<vmem>>, vector<1x96xf32>
    %c0_5 = arith.constant 0 : index
    %c0_6 = arith.constant 0 : index
    %3 = vector.load %arg2[%c0_5, %c0_6] : memref<16x96xf32, #tpu.memory_space<vmem>>, vector<16x96xf32>
    %cst = arith.constant dense<0.000000e+00> : vector<16x96xf32>
    %4 = tpu.matmul %0, %3, %cst {dimension_numbers = #tpu.dot_dimension_numbers<[1], [0], [0], [1], [0, 0, 1, 1], [], []>} : vector<16x16xf32>, vector<16x96xf32>, vector<16x96xf32> -> vector<16x96xf32>
    %5 = vector.broadcast %2 : vector<1x96xf32> to vector<16x96xf32>
    %6 = arith.addf %4, %5 : vector<16x96xf32>
    %7 = vector.extract_strided_slice %6 {offsets = [0, 0], sizes = [16, 64], strides = [1, 1]} : vector<16x96xf32> to vector<16x64xf32>
    %8 = vector.extract_strided_slice %6 {offsets = [0, 64], sizes = [16, 32], strides = [1, 1]} : vector<16x96xf32> to vector<16x32xf32>
    %9 = vector.extract_strided_slice %7 {offsets = [0, 0], sizes = [8, 32], strides = [1, 1]} : vector<16x64xf32> to vector<8x32xf32>
    %10 = vector.extract_strided_slice %7 {offsets = [0, 32], sizes = [8, 32], strides = [1, 1]} : vector<16x64xf32> to vector<8x32xf32>
    %11 = vector.extract_strided_slice %1 {offsets = [0, 0], sizes = [8, 8], strides = [1, 1]} : vector<8x32xf32> to vector<8x8xf32>
    %12 = vector.extract_strided_slice %9 {offsets = [0, 0], sizes = [8, 8], strides = [1, 1]} : vector<8x32xf32> to vector<8x8xf32>
    %13 = vector.extract_strided_slice %10 {offsets = [0, 0], sizes = [8, 8], strides = [1, 1]} : vector<8x32xf32> to vector<8x8xf32>
    %cst_7 = arith.constant dense<0.000000e+00> : vector<8x8xf32>
    %14 = tpu.matmul %11, %12, %cst_7 {dimension_numbers = #tpu.dot_dimension_numbers<[1], [1], [0], [0], [0, 0, 1, 0], [], []>} : vector<8x8xf32>, vector<8x8xf32>, vector<8x8xf32> -> vector<8x8xf32>
    %cst_8 = arith.constant dense<0xFF800000> : vector<8xf32>
    %15 = vector.multi_reduction <maximumf>, %14, %cst_8 [1] : vector<8x8xf32> to vector<8xf32>
    %16 = vector.shape_cast %15 : vector<8xf32> to vector<8x1xf32>
    %17 = vector.broadcast %16 : vector<8x1xf32> to vector<8x8xf32>
    %18 = arith.subf %14, %17 : vector<8x8xf32>
    %19 = math.exp %18 : vector<8x8xf32>
    %cst_9 = arith.constant dense<0.000000e+00> : vector<8xf32>
    %20 = vector.multi_reduction <add>, %19, %cst_9 [1] : vector<8x8xf32> to vector<8xf32>
    %21 = vector.shape_cast %20 : vector<8xf32> to vector<8x1xf32>
    %22 = tpu.reciprocal %21 {approx = true} : vector<8x1xf32> -> vector<8x1xf32>
    %23 = vector.broadcast %22 : vector<8x1xf32> to vector<8x8xf32>
    %24 = arith.mulf %19, %23 : vector<8x8xf32>
    %cst_10 = arith.constant dense<0.000000e+00> : vector<8x8xf32>
    %25 = tpu.matmul %24, %13, %cst_10 {dimension_numbers = #tpu.dot_dimension_numbers<[1], [0], [0], [1], [0, 0, 1, 1], [], []>} : vector<8x8xf32>, vector<8x8xf32>, vector<8x8xf32> -> vector<8x8xf32>
    %26 = arith.addf %11, %25 : vector<8x8xf32>
    %c0_11 = arith.constant 0 : index
    %c0_12 = arith.constant 0 : index
    %27 = vector.load %arg8[%c0_11, %c0_12] : memref<16x32xf32, #tpu.memory_space<vmem>>, vector<8x8xf32>
    tpu.vector_store %arg8[%c0_11, %c0_12], %26 {strides = array<i32>} : memref<16x32xf32, #tpu.memory_space<vmem>>, vector<8x8xf32>,
    %28 = vector.extract_strided_slice %1 {offsets = [0, 8], sizes = [8, 8], strides = [1, 1]} : vector<8x32xf32> to vector<8x8xf32>
    %29 = vector.extract_strided_slice %9 {offsets = [0, 8], sizes = [8, 8], strides = [1, 1]} : vector<8x32xf32> to vector<8x8xf32>
    %30 = vector.extract_strided_slice %10 {offsets = [0, 8], sizes = [8, 8], strides = [1, 1]} : vector<8x32xf32> to vector<8x8xf32>
    %cst_13 = arith.constant dense<0.000000e+00> : vector<8x8xf32>
    %31 = tpu.matmul %28, %29, %cst_13 {dimension_numbers = #tpu.dot_dimension_numbers<[1], [1], [0], [0], [0, 0, 1, 0], [], []>} : vector<8x8xf32>, vector<8x8xf32>, vector<8x8xf32> -> vector<8x8xf32>
    %cst_14 = arith.constant dense<0xFF800000> : vector<8xf32>
    %32 = vector.multi_reduction <maximumf>, %31, %cst_14 [1] : vector<8x8xf32> to vector<8xf32>
    %33 = vector.shape_cast %32 : vector<8xf32> to vector<8x1xf32>
    %34 = vector.broadcast %33 : vector<8x1xf32> to vector<8x8xf32>
    %35 = arith.subf %31, %34 : vector<8x8xf32>
    %36 = math.exp %35 : vector<8x8xf32>
    %cst_15 = arith.constant dense<0.000000e+00> : vector<8xf32>
    %37 = vector.multi_reduction <add>, %36, %cst_15 [1] : vector<8x8xf32> to vector<8xf32>
    %38 = vector.shape_cast %37 : vector<8xf32> to vector<8x1xf32>
    %39 = tpu.reciprocal %38 {approx = true} : vector<8x1xf32> -> vector<8x1xf32>
    %40 = vector.broadcast %39 : vector<8x1xf32> to vector<8x8xf32>
    %41 = arith.mulf %36, %40 : vector<8x8xf32>
    %cst_16 = arith.constant dense<0.000000e+00> : vector<8x8xf32>
    %42 = tpu.matmul %41, %30, %cst_16 {dimension_numbers = #tpu.dot_dimension_numbers<[1], [0], [0], [1], [0, 0, 1, 1], [], []>} : vector<8x8xf32>, vector<8x8xf32>, vector<8x8xf32> -> vector<8x8xf32>
    %43 = arith.addf %28, %42 : vector<8x8xf32>
    %c0_17 = arith.constant 0 : index
    %c8 = arith.constant 8 : index
    %44 = vector.load %arg8[%c0_17, %c8] : memref<16x32xf32, #tpu.memory_space<vmem>>, vector<8x8xf32>
    tpu.vector_store %arg8[%c0_17, %c8], %43 {strides = array<i32>} : memref<16x32xf32, #tpu.memory_space<vmem>>, vector<8x8xf32>,
    %45 = vector.extract_strided_slice %1 {offsets = [0, 16], sizes = [8, 8], strides = [1, 1]} : vector<8x32xf32> to vector<8x8xf32>
    %46 = vector.extract_strided_slice %9 {offsets = [0, 16], sizes = [8, 8], strides = [1, 1]} : vector<8x32xf32> to vector<8x8xf32>
    %47 = vector.extract_strided_slice %10 {offsets = [0, 16], sizes = [8, 8], strides = [1, 1]} : vector<8x32xf32> to vector<8x8xf32>
    %cst_18 = arith.constant dense<0.000000e+00> : vector<8x8xf32>
    %48 = tpu.matmul %45, %46, %cst_18 {dimension_numbers = #tpu.dot_dimension_numbers<[1], [1], [0], [0], [0, 0, 1, 0], [], []>} : vector<8x8xf32>, vector<8x8xf32>, vector<8x8xf32> -> vector<8x8xf32>
    %cst_19 = arith.constant dense<0xFF800000> : vector<8xf32>
    %49 = vector.multi_reduction <maximumf>, %48, %cst_19 [1] : vector<8x8xf32> to vector<8xf32>
    %50 = vector.shape_cast %49 : vector<8xf32> to vector<8x1xf32>
    %51 = vector.broadcast %50 : vector<8x1xf32> to vector<8x8xf32>
    %52 = arith.subf %48, %51 : vector<8x8xf32>
    %53 = math.exp %52 : vector<8x8xf32>
    %cst_20 = arith.constant dense<0.000000e+00> : vector<8xf32>
    %54 = vector.multi_reduction <add>, %53, %cst_20 [1] : vector<8x8xf32> to vector<8xf32>
    %55 = vector.shape_cast %54 : vector<8xf32> to vector<8x1xf32>
    %56 = tpu.reciprocal %55 {approx = true} : vector<8x1xf32> -> vector<8x1xf32>
    %57 = vector.broadcast %56 : vector<8x1xf32> to vector<8x8xf32>
    %58 = arith.mulf %53, %57 : vector<8x8xf32>
    %cst_21 = arith.constant dense<0.000000e+00> : vector<8x8xf32>
    %59 = tpu.matmul %58, %47, %cst_21 {dimension_numbers = #tpu.dot_dimension_numbers<[1], [0], [0], [1], [0, 0, 1, 1], [], []>} : vector<8x8xf32>, vector<8x8xf32>, vector<8x8xf32> -> vector<8x8xf32>
    %60 = arith.addf %45, %59 : vector<8x8xf32>
    %c0_22 = arith.constant 0 : index
    %c16 = arith.constant 16 : index
    %61 = vector.load %arg8[%c0_22, %c16] : memref<16x32xf32, #tpu.memory_space<vmem>>, vector<8x8xf32>
    tpu.vector_store %arg8[%c0_22, %c16], %60 {strides = array<i32>} : memref<16x32xf32, #tpu.memory_space<vmem>>, vector<8x8xf32>,
    %62 = vector.extract_strided_slice %1 {offsets = [0, 24], sizes = [8, 8], strides = [1, 1]} : vector<8x32xf32> to vector<8x8xf32>
    %63 = vector.extract_strided_slice %9 {offsets = [0, 24], sizes = [8, 8], strides = [1, 1]} : vector<8x32xf32> to vector<8x8xf32>
    %64 = vector.extract_strided_slice %10 {offsets = [0, 24], sizes = [8, 8], strides = [1, 1]} : vector<8x32xf32> to vector<8x8xf32>
    %cst_23 = arith.constant dense<0.000000e+00> : vector<8x8xf32>
    %65 = tpu.matmul %62, %63, %cst_23 {dimension_numbers = #tpu.dot_dimension_numbers<[1], [1], [0], [0], [0, 0, 1, 0], [], []>} : vector<8x8xf32>, vector<8x8xf32>, vector<8x8xf32> -> vector<8x8xf32>
    %cst_24 = arith.constant dense<0xFF800000> : vector<8xf32>
    %66 = vector.multi_reduction <maximumf>, %65, %cst_24 [1] : vector<8x8xf32> to vector<8xf32>
    %67 = vector.shape_cast %66 : vector<8xf32> to vector<8x1xf32>
    %68 = vector.broadcast %67 : vector<8x1xf32> to vector<8x8xf32>
    %69 = arith.subf %65, %68 : vector<8x8xf32>
    %70 = math.exp %69 : vector<8x8xf32>
    %cst_25 = arith.constant dense<0.000000e+00> : vector<8xf32>
    %71 = vector.multi_reduction <add>, %70, %cst_25 [1] : vector<8x8xf32> to vector<8xf32>
    %72 = vector.shape_cast %71 : vector<8xf32> to vector<8x1xf32>
    %73 = tpu.reciprocal %72 {approx = true} : vector<8x1xf32> -> vector<8x1xf32>
    %74 = vector.broadcast %73 : vector<8x1xf32> to vector<8x8xf32>
    %75 = arith.mulf %70, %74 : vector<8x8xf32>
    %cst_26 = arith.constant dense<0.000000e+00> : vector<8x8xf32>
    %76 = tpu.matmul %75, %64, %cst_26 {dimension_numbers = #tpu.dot_dimension_numbers<[1], [0], [0], [1], [0, 0, 1, 1], [], []>} : vector<8x8xf32>, vector<8x8xf32>, vector<8x8xf32> -> vector<8x8xf32>
    %77 = arith.addf %62, %76 : vector<8x8xf32>
    %c0_27 = arith.constant 0 : index
    %c24 = arith.constant 24 : index
    %78 = vector.load %arg8[%c0_27, %c24] : memref<16x32xf32, #tpu.memory_space<vmem>>, vector<8x8xf32>
    tpu.vector_store %arg8[%c0_27, %c24], %77 {strides = array<i32>} : memref<16x32xf32, #tpu.memory_space<vmem>>, vector<8x8xf32>,
    %79 = vector.extract_strided_slice %7 {offsets = [8, 0], sizes = [8, 32], strides = [1, 1]} : vector<16x64xf32> to vector<8x32xf32>
    %80 = vector.extract_strided_slice %7 {offsets = [8, 32], sizes = [8, 32], strides = [1, 1]} : vector<16x64xf32> to vector<8x32xf32>
    %81 = vector.extract_strided_slice %1 {offsets = [0, 0], sizes = [8, 8], strides = [1, 1]} : vector<8x32xf32> to vector<8x8xf32>
    %82 = vector.extract_strided_slice %79 {offsets = [0, 0], sizes = [8, 8], strides = [1, 1]} : vector<8x32xf32> to vector<8x8xf32>
    %83 = vector.extract_strided_slice %80 {offsets = [0, 0], sizes = [8, 8], strides = [1, 1]} : vector<8x32xf32> to vector<8x8xf32>
    %cst_28 = arith.constant dense<0.000000e+00> : vector<8x8xf32>
    %84 = tpu.matmul %81, %82, %cst_28 {dimension_numbers = #tpu.dot_dimension_numbers<[1], [1], [0], [0], [0, 0, 1, 0], [], []>} : vector<8x8xf32>, vector<8x8xf32>, vector<8x8xf32> -> vector<8x8xf32>
    %cst_29 = arith.constant dense<0xFF800000> : vector<8xf32>
    %85 = vector.multi_reduction <maximumf>, %84, %cst_29 [1] : vector<8x8xf32> to vector<8xf32>
    %86 = vector.shape_cast %85 : vector<8xf32> to vector<8x1xf32>
    %87 = vector.broadcast %86 : vector<8x1xf32> to vector<8x8xf32>
    %88 = arith.subf %84, %87 : vector<8x8xf32>
    %89 = math.exp %88 : vector<8x8xf32>
    %cst_30 = arith.constant dense<0.000000e+00> : vector<8xf32>
    %90 = vector.multi_reduction <add>, %89, %cst_30 [1] : vector<8x8xf32> to vector<8xf32>
    %91 = vector.shape_cast %90 : vector<8xf32> to vector<8x1xf32>
    %92 = tpu.reciprocal %91 {approx = true} : vector<8x1xf32> -> vector<8x1xf32>
    %93 = vector.broadcast %92 : vector<8x1xf32> to vector<8x8xf32>
    %94 = arith.mulf %89, %93 : vector<8x8xf32>
    %cst_31 = arith.constant dense<0.000000e+00> : vector<8x8xf32>
    %95 = tpu.matmul %94, %83, %cst_31 {dimension_numbers = #tpu.dot_dimension_numbers<[1], [0], [0], [1], [0, 0, 1, 1], [], []>} : vector<8x8xf32>, vector<8x8xf32>, vector<8x8xf32> -> vector<8x8xf32>
    %96 = arith.addf %81, %95 : vector<8x8xf32>
    %c8_32 = arith.constant 8 : index
    %c0_33 = arith.constant 0 : index
    %97 = vector.load %arg8[%c8_32, %c0_33] : memref<16x32xf32, #tpu.memory_space<vmem>>, vector<8x8xf32>
    tpu.vector_store %arg8[%c8_32, %c0_33], %96 {strides = array<i32>} : memref<16x32xf32, #tpu.memory_space<vmem>>, vector<8x8xf32>,
    %98 = vector.extract_strided_slice %1 {offsets = [0, 8], sizes = [8, 8], strides = [1, 1]} : vector<8x32xf32> to vector<8x8xf32>
    %99 = vector.extract_strided_slice %79 {offsets = [0, 8], sizes = [8, 8], strides = [1, 1]} : vector<8x32xf32> to vector<8x8xf32>
    %100 = vector.extract_strided_slice %80 {offsets = [0, 8], sizes = [8, 8], strides = [1, 1]} : vector<8x32xf32> to vector<8x8xf32>
    %cst_34 = arith.constant dense<0.000000e+00> : vector<8x8xf32>
    %101 = tpu.matmul %98, %99, %cst_34 {dimension_numbers = #tpu.dot_dimension_numbers<[1], [1], [0], [0], [0, 0, 1, 0], [], []>} : vector<8x8xf32>, vector<8x8xf32>, vector<8x8xf32> -> vector<8x8xf32>
    %cst_35 = arith.constant dense<0xFF800000> : vector<8xf32>
    %102 = vector.multi_reduction <maximumf>, %101, %cst_35 [1] : vector<8x8xf32> to vector<8xf32>
    %103 = vector.shape_cast %102 : vector<8xf32> to vector<8x1xf32>
    %104 = vector.broadcast %103 : vector<8x1xf32> to vector<8x8xf32>
    %105 = arith.subf %101, %104 : vector<8x8xf32>
    %106 = math.exp %105 : vector<8x8xf32>
    %cst_36 = arith.constant dense<0.000000e+00> : vector<8xf32>
    %107 = vector.multi_reduction <add>, %106, %cst_36 [1] : vector<8x8xf32> to vector<8xf32>
    %108 = vector.shape_cast %107 : vector<8xf32> to vector<8x1xf32>
    %109 = tpu.reciprocal %108 {approx = true} : vector<8x1xf32> -> vector<8x1xf32>
    %110 = vector.broadcast %109 : vector<8x1xf32> to vector<8x8xf32>
    %111 = arith.mulf %106, %110 : vector<8x8xf32>
    %cst_37 = arith.constant dense<0.000000e+00> : vector<8x8xf32>
    %112 = tpu.matmul %111, %100, %cst_37 {dimension_numbers = #tpu.dot_dimension_numbers<[1], [0], [0], [1], [0, 0, 1, 1], [], []>} : vector<8x8xf32>, vector<8x8xf32>, vector<8x8xf32> -> vector<8x8xf32>
    %113 = arith.addf %98, %112 : vector<8x8xf32>
    %c8_38 = arith.constant 8 : index
    %c8_39 = arith.constant 8 : index
    %114 = vector.load %arg8[%c8_38, %c8_39] : memref<16x32xf32, #tpu.memory_space<vmem>>, vector<8x8xf32>
    tpu.vector_store %arg8[%c8_38, %c8_39], %113 {strides = array<i32>} : memref<16x32xf32, #tpu.memory_space<vmem>>, vector<8x8xf32>,
    %115 = vector.extract_strided_slice %1 {offsets = [0, 16], sizes = [8, 8], strides = [1, 1]} : vector<8x32xf32> to vector<8x8xf32>
    %116 = vector.extract_strided_slice %79 {offsets = [0, 16], sizes = [8, 8], strides = [1, 1]} : vector<8x32xf32> to vector<8x8xf32>
    %117 = vector.extract_strided_slice %80 {offsets = [0, 16], sizes = [8, 8], strides = [1, 1]} : vector<8x32xf32> to vector<8x8xf32>
    %cst_40 = arith.constant dense<0.000000e+00> : vector<8x8xf32>
    %118 = tpu.matmul %115, %116, %cst_40 {dimension_numbers = #tpu.dot_dimension_numbers<[1], [1], [0], [0], [0, 0, 1, 0], [], []>} : vector<8x8xf32>, vector<8x8xf32>, vector<8x8xf32> -> vector<8x8xf32>
    %cst_41 = arith.constant dense<0xFF800000> : vector<8xf32>
    %119 = vector.multi_reduction <maximumf>, %118, %cst_41 [1] : vector<8x8xf32> to vector<8xf32>
    %120 = vector.shape_cast %119 : vector<8xf32> to vector<8x1xf32>
    %121 = vector.broadcast %120 : vector<8x1xf32> to vector<8x8xf32>
    %122 = arith.subf %118, %121 : vector<8x8xf32>
    %123 = math.exp %122 : vector<8x8xf32>
    %cst_42 = arith.constant dense<0.000000e+00> : vector<8xf32>
    %124 = vector.multi_reduction <add>, %123, %cst_42 [1] : vector<8x8xf32> to vector<8xf32>
    %125 = vector.shape_cast %124 : vector<8xf32> to vector<8x1xf32>
    %126 = tpu.reciprocal %125 {approx = true} : vector<8x1xf32> -> vector<8x1xf32>
    %127 = vector.broadcast %126 : vector<8x1xf32> to vector<8x8xf32>
    %128 = arith.mulf %123, %127 : vector<8x8xf32>
    %cst_43 = arith.constant dense<0.000000e+00> : vector<8x8xf32>
    %129 = tpu.matmul %128, %117, %cst_43 {dimension_numbers = #tpu.dot_dimension_numbers<[1], [0], [0], [1], [0, 0, 1, 1], [], []>} : vector<8x8xf32>, vector<8x8xf32>, vector<8x8xf32> -> vector<8x8xf32>
    %130 = arith.addf %115, %129 : vector<8x8xf32>
    %c8_44 = arith.constant 8 : index
    %c16_45 = arith.constant 16 : index
    %131 = vector.load %arg8[%c8_44, %c16_45] : memref<16x32xf32, #tpu.memory_space<vmem>>, vector<8x8xf32>
    tpu.vector_store %arg8[%c8_44, %c16_45], %130 {strides = array<i32>} : memref<16x32xf32, #tpu.memory_space<vmem>>, vector<8x8xf32>,
    %132 = vector.extract_strided_slice %1 {offsets = [0, 24], sizes = [8, 8], strides = [1, 1]} : vector<8x32xf32> to vector<8x8xf32>
    %133 = vector.extract_strided_slice %79 {offsets = [0, 24], sizes = [8, 8], strides = [1, 1]} : vector<8x32xf32> to vector<8x8xf32>
    %134 = vector.extract_strided_slice %80 {offsets = [0, 24], sizes = [8, 8], strides = [1, 1]} : vector<8x32xf32> to vector<8x8xf32>
    %cst_46 = arith.constant dense<0.000000e+00> : vector<8x8xf32>
    %135 = tpu.matmul %132, %133, %cst_46 {dimension_numbers = #tpu.dot_dimension_numbers<[1], [1], [0], [0], [0, 0, 1, 0], [], []>} : vector<8x8xf32>, vector<8x8xf32>, vector<8x8xf32> -> vector<8x8xf32>
    %cst_47 = arith.constant dense<0xFF800000> : vector<8xf32>
    %136 = vector.multi_reduction <maximumf>, %135, %cst_47 [1] : vector<8x8xf32> to vector<8xf32>
    %137 = vector.shape_cast %136 : vector<8xf32> to vector<8x1xf32>
    %138 = vector.broadcast %137 : vector<8x1xf32> to vector<8x8xf32>
    %139 = arith.subf %135, %138 : vector<8x8xf32>
    %140 = math.exp %139 : vector<8x8xf32>
    %cst_48 = arith.constant dense<0.000000e+00> : vector<8xf32>
    %141 = vector.multi_reduction <add>, %140, %cst_48 [1] : vector<8x8xf32> to vector<8xf32>
    %142 = vector.shape_cast %141 : vector<8xf32> to vector<8x1xf32>
    %143 = tpu.reciprocal %142 {approx = true} : vector<8x1xf32> -> vector<8x1xf32>
    %144 = vector.broadcast %143 : vector<8x1xf32> to vector<8x8xf32>
    %145 = arith.mulf %140, %144 : vector<8x8xf32>
    %cst_49 = arith.constant dense<0.000000e+00> : vector<8x8xf32>
    %146 = tpu.matmul %145, %134, %cst_49 {dimension_numbers = #tpu.dot_dimension_numbers<[1], [0], [0], [1], [0, 0, 1, 1], [], []>} : vector<8x8xf32>, vector<8x8xf32>, vector<8x8xf32> -> vector<8x8xf32>
    %147 = arith.addf %132, %146 : vector<8x8xf32>
    %c8_50 = arith.constant 8 : index
    %c24_51 = arith.constant 24 : index
    %148 = vector.load %arg8[%c8_50, %c24_51] : memref<16x32xf32, #tpu.memory_space<vmem>>, vector<8x8xf32>
    tpu.vector_store %arg8[%c8_50, %c24_51], %147 {strides = array<i32>} : memref<16x32xf32, #tpu.memory_space<vmem>>, vector<8x8xf32>,
    %c0_52 = arith.constant 0 : index
    %c0_53 = arith.constant 0 : index
    %149 = vector.load %arg8[%c0_52, %c0_53] : memref<16x32xf32, #tpu.memory_space<vmem>>, vector<16x32xf32>
    %c1 = arith.constant 1 : index
    %c0_54 = arith.constant 0 : index
    %150 = vector.load %arg6[%c1, %c0_54] : memref<4x96xf32, #tpu.memory_space<vmem>>, vector<1x32xf32>
    %c0_55 = arith.constant 0 : index
    %c0_56 = arith.constant 0 : index
    %151 = vector.load %arg3[%c0_55, %c0_56] : memref<32x32xf32, #tpu.memory_space<vmem>>, vector<32x32xf32>
    %cst_57 = arith.constant dense<0.000000e+00> : vector<16x32xf32>
    %152 = tpu.matmul %149, %151, %cst_57 {dimension_numbers = #tpu.dot_dimension_numbers<[1], [0], [0], [1], [0, 0, 1, 1], [], []>} : vector<16x32xf32>, vector<32x32xf32>, vector<16x32xf32> -> vector<16x32xf32>
    %153 = vector.broadcast %150 : vector<1x32xf32> to vector<16x32xf32>
    %154 = arith.addf %152, %153 : vector<16x32xf32>
    %cst_58 = arith.constant 0.000000e+00 : f32
    %155 = vector.broadcast %cst_58 : f32 to vector<16x32xf32>
    %156 = arith.maximumf %154, %155 : vector<16x32xf32>
    %157 = arith.addf %149, %156 : vector<16x32xf32>
    %c2 = arith.constant 2 : index
    %c0_59 = arith.constant 0 : index
    %158 = vector.load %arg6[%c2, %c0_59] : memref<4x96xf32, #tpu.memory_space<vmem>>, vector<1x64xf32>
    %c0_60 = arith.constant 0 : index
    %c0_61 = arith.constant 0 : index
    %159 = vector.load %arg4[%c0_60, %c0_61] : memref<32x64xf32, #tpu.memory_space<vmem>>, vector<32x64xf32>
    %cst_62 = arith.constant dense<0.000000e+00> : vector<16x64xf32>
    %160 = tpu.matmul %157, %159, %cst_62 {dimension_numbers = #tpu.dot_dimension_numbers<[1], [0], [0], [1], [0, 0, 1, 1], [], []>} : vector<16x32xf32>, vector<32x64xf32>, vector<16x64xf32> -> vector<16x64xf32>
    %161 = vector.broadcast %158 : vector<1x64xf32> to vector<16x64xf32>
    %162 = arith.addf %160, %161 : vector<16x64xf32>
    %163 = vector.extract_strided_slice %162 {offsets = [0, 0], sizes = [8, 32], strides = [1, 1]} : vector<16x64xf32> to vector<8x32xf32>
    %164 = vector.extract_strided_slice %162 {offsets = [0, 32], sizes = [8, 32], strides = [1, 1]} : vector<16x64xf32> to vector<8x32xf32>
    %165 = vector.extract_strided_slice %8 {offsets = [0, 0], sizes = [8, 32], strides = [1, 1]} : vector<16x32xf32> to vector<8x32xf32>
    %166 = vector.extract_strided_slice %165 {offsets = [0, 0], sizes = [8, 8], strides = [1, 1]} : vector<8x32xf32> to vector<8x8xf32>
    %167 = vector.extract_strided_slice %163 {offsets = [0, 0], sizes = [8, 8], strides = [1, 1]} : vector<8x32xf32> to vector<8x8xf32>
    %168 = vector.extract_strided_slice %164 {offsets = [0, 0], sizes = [8, 8], strides = [1, 1]} : vector<8x32xf32> to vector<8x8xf32>
    %cst_63 = arith.constant dense<0.000000e+00> : vector<8x8xf32>
    %169 = tpu.matmul %166, %167, %cst_63 {dimension_numbers = #tpu.dot_dimension_numbers<[1], [1], [0], [0], [0, 0, 1, 0], [], []>} : vector<8x8xf32>, vector<8x8xf32>, vector<8x8xf32> -> vector<8x8xf32>
    %cst_64 = arith.constant dense<0xFF800000> : vector<8xf32>
    %170 = vector.multi_reduction <maximumf>, %169, %cst_64 [1] : vector<8x8xf32> to vector<8xf32>
    %171 = vector.shape_cast %170 : vector<8xf32> to vector<8x1xf32>
    %172 = vector.broadcast %171 : vector<8x1xf32> to vector<8x8xf32>
    %173 = arith.subf %169, %172 : vector<8x8xf32>
    %174 = math.exp %173 : vector<8x8xf32>
    %cst_65 = arith.constant dense<0.000000e+00> : vector<8xf32>
    %175 = vector.multi_reduction <add>, %174, %cst_65 [1] : vector<8x8xf32> to vector<8xf32>
    %176 = vector.shape_cast %175 : vector<8xf32> to vector<8x1xf32>
    %177 = tpu.reciprocal %176 {approx = true} : vector<8x1xf32> -> vector<8x1xf32>
    %178 = vector.broadcast %177 : vector<8x1xf32> to vector<8x8xf32>
    %179 = arith.mulf %174, %178 : vector<8x8xf32>
    %cst_66 = arith.constant dense<0.000000e+00> : vector<8x8xf32>
    %180 = tpu.matmul %179, %168, %cst_66 {dimension_numbers = #tpu.dot_dimension_numbers<[1], [0], [0], [1], [0, 0, 1, 1], [], []>} : vector<8x8xf32>, vector<8x8xf32>, vector<8x8xf32> -> vector<8x8xf32>
    %181 = arith.addf %166, %180 : vector<8x8xf32>
    %c0_67 = arith.constant 0 : index
    %c0_68 = arith.constant 0 : index
    %182 = vector.load %arg7[%c0_67, %c0_68] : memref<16x32xf32, #tpu.memory_space<vmem>>, vector<8x8xf32>
    tpu.vector_store %arg7[%c0_67, %c0_68], %181 {strides = array<i32>} : memref<16x32xf32, #tpu.memory_space<vmem>>, vector<8x8xf32>,
    %183 = vector.extract_strided_slice %165 {offsets = [0, 8], sizes = [8, 8], strides = [1, 1]} : vector<8x32xf32> to vector<8x8xf32>
    %184 = vector.extract_strided_slice %163 {offsets = [0, 8], sizes = [8, 8], strides = [1, 1]} : vector<8x32xf32> to vector<8x8xf32>
    %185 = vector.extract_strided_slice %164 {offsets = [0, 8], sizes = [8, 8], strides = [1, 1]} : vector<8x32xf32> to vector<8x8xf32>
    %cst_69 = arith.constant dense<0.000000e+00> : vector<8x8xf32>
    %186 = tpu.matmul %183, %184, %cst_69 {dimension_numbers = #tpu.dot_dimension_numbers<[1], [1], [0], [0], [0, 0, 1, 0], [], []>} : vector<8x8xf32>, vector<8x8xf32>, vector<8x8xf32> -> vector<8x8xf32>
    %cst_70 = arith.constant dense<0xFF800000> : vector<8xf32>
    %187 = vector.multi_reduction <maximumf>, %186, %cst_70 [1] : vector<8x8xf32> to vector<8xf32>
    %188 = vector.shape_cast %187 : vector<8xf32> to vector<8x1xf32>
    %189 = vector.broadcast %188 : vector<8x1xf32> to vector<8x8xf32>
    %190 = arith.subf %186, %189 : vector<8x8xf32>
    %191 = math.exp %190 : vector<8x8xf32>
    %cst_71 = arith.constant dense<0.000000e+00> : vector<8xf32>
    %192 = vector.multi_reduction <add>, %191, %cst_71 [1] : vector<8x8xf32> to vector<8xf32>
    %193 = vector.shape_cast %192 : vector<8xf32> to vector<8x1xf32>
    %194 = tpu.reciprocal %193 {approx = true} : vector<8x1xf32> -> vector<8x1xf32>
    %195 = vector.broadcast %194 : vector<8x1xf32> to vector<8x8xf32>
    %196 = arith.mulf %191, %195 : vector<8x8xf32>
    %cst_72 = arith.constant dense<0.000000e+00> : vector<8x8xf32>
    %197 = tpu.matmul %196, %185, %cst_72 {dimension_numbers = #tpu.dot_dimension_numbers<[1], [0], [0], [1], [0, 0, 1, 1], [], []>} : vector<8x8xf32>, vector<8x8xf32>, vector<8x8xf32> -> vector<8x8xf32>
    %198 = arith.addf %183, %197 : vector<8x8xf32>
    %c0_73 = arith.constant 0 : index
    %c8_74 = arith.constant 8 : index
    %199 = vector.load %arg7[%c0_73, %c8_74] : memref<16x32xf32, #tpu.memory_space<vmem>>, vector<8x8xf32>
    tpu.vector_store %arg7[%c0_73, %c8_74], %198 {strides = array<i32>} : memref<16x32xf32, #tpu.memory_space<vmem>>, vector<8x8xf32>,
    %200 = vector.extract_strided_slice %165 {offsets = [0, 16], sizes = [8, 8], strides = [1, 1]} : vector<8x32xf32> to vector<8x8xf32>
    %201 = vector.extract_strided_slice %163 {offsets = [0, 16], sizes = [8, 8], strides = [1, 1]} : vector<8x32xf32> to vector<8x8xf32>
    %202 = vector.extract_strided_slice %164 {offsets = [0, 16], sizes = [8, 8], strides = [1, 1]} : vector<8x32xf32> to vector<8x8xf32>
    %cst_75 = arith.constant dense<0.000000e+00> : vector<8x8xf32>
    %203 = tpu.matmul %200, %201, %cst_75 {dimension_numbers = #tpu.dot_dimension_numbers<[1], [1], [0], [0], [0, 0, 1, 0], [], []>} : vector<8x8xf32>, vector<8x8xf32>, vector<8x8xf32> -> vector<8x8xf32>
    %cst_76 = arith.constant dense<0xFF800000> : vector<8xf32>
    %204 = vector.multi_reduction <maximumf>, %203, %cst_76 [1] : vector<8x8xf32> to vector<8xf32>
    %205 = vector.shape_cast %204 : vector<8xf32> to vector<8x1xf32>
    %206 = vector.broadcast %205 : vector<8x1xf32> to vector<8x8xf32>
    %207 = arith.subf %203, %206 : vector<8x8xf32>
    %208 = math.exp %207 : vector<8x8xf32>
    %cst_77 = arith.constant dense<0.000000e+00> : vector<8xf32>
    %209 = vector.multi_reduction <add>, %208, %cst_77 [1] : vector<8x8xf32> to vector<8xf32>
    %210 = vector.shape_cast %209 : vector<8xf32> to vector<8x1xf32>
    %211 = tpu.reciprocal %210 {approx = true} : vector<8x1xf32> -> vector<8x1xf32>
    %212 = vector.broadcast %211 : vector<8x1xf32> to vector<8x8xf32>
    %213 = arith.mulf %208, %212 : vector<8x8xf32>
    %cst_78 = arith.constant dense<0.000000e+00> : vector<8x8xf32>
    %214 = tpu.matmul %213, %202, %cst_78 {dimension_numbers = #tpu.dot_dimension_numbers<[1], [0], [0], [1], [0, 0, 1, 1], [], []>} : vector<8x8xf32>, vector<8x8xf32>, vector<8x8xf32> -> vector<8x8xf32>
    %215 = arith.addf %200, %214 : vector<8x8xf32>
    %c0_79 = arith.constant 0 : index
    %c16_80 = arith.constant 16 : index
    %216 = vector.load %arg7[%c0_79, %c16_80] : memref<16x32xf32, #tpu.memory_space<vmem>>, vector<8x8xf32>
    tpu.vector_store %arg7[%c0_79, %c16_80], %215 {strides = array<i32>} : memref<16x32xf32, #tpu.memory_space<vmem>>, vector<8x8xf32>,
    %217 = vector.extract_strided_slice %165 {offsets = [0, 24], sizes = [8, 8], strides = [1, 1]} : vector<8x32xf32> to vector<8x8xf32>
    %218 = vector.extract_strided_slice %163 {offsets = [0, 24], sizes = [8, 8], strides = [1, 1]} : vector<8x32xf32> to vector<8x8xf32>
    %219 = vector.extract_strided_slice %164 {offsets = [0, 24], sizes = [8, 8], strides = [1, 1]} : vector<8x32xf32> to vector<8x8xf32>
    %cst_81 = arith.constant dense<0.000000e+00> : vector<8x8xf32>
    %220 = tpu.matmul %217, %218, %cst_81 {dimension_numbers = #tpu.dot_dimension_numbers<[1], [1], [0], [0], [0, 0, 1, 0], [], []>} : vector<8x8xf32>, vector<8x8xf32>, vector<8x8xf32> -> vector<8x8xf32>
    %cst_82 = arith.constant dense<0xFF800000> : vector<8xf32>
    %221 = vector.multi_reduction <maximumf>, %220, %cst_82 [1] : vector<8x8xf32> to vector<8xf32>
    %222 = vector.shape_cast %221 : vector<8xf32> to vector<8x1xf32>
    %223 = vector.broadcast %222 : vector<8x1xf32> to vector<8x8xf32>
    %224 = arith.subf %220, %223 : vector<8x8xf32>
    %225 = math.exp %224 : vector<8x8xf32>
    %cst_83 = arith.constant dense<0.000000e+00> : vector<8xf32>
    %226 = vector.multi_reduction <add>, %225, %cst_83 [1] : vector<8x8xf32> to vector<8xf32>
    %227 = vector.shape_cast %226 : vector<8xf32> to vector<8x1xf32>
    %228 = tpu.reciprocal %227 {approx = true} : vector<8x1xf32> -> vector<8x1xf32>
    %229 = vector.broadcast %228 : vector<8x1xf32> to vector<8x8xf32>
    %230 = arith.mulf %225, %229 : vector<8x8xf32>
    %cst_84 = arith.constant dense<0.000000e+00> : vector<8x8xf32>
    %231 = tpu.matmul %230, %219, %cst_84 {dimension_numbers = #tpu.dot_dimension_numbers<[1], [0], [0], [1], [0, 0, 1, 1], [], []>} : vector<8x8xf32>, vector<8x8xf32>, vector<8x8xf32> -> vector<8x8xf32>
    %232 = arith.addf %217, %231 : vector<8x8xf32>
    %c0_85 = arith.constant 0 : index
    %c24_86 = arith.constant 24 : index
    %233 = vector.load %arg7[%c0_85, %c24_86] : memref<16x32xf32, #tpu.memory_space<vmem>>, vector<8x8xf32>
    tpu.vector_store %arg7[%c0_85, %c24_86], %232 {strides = array<i32>} : memref<16x32xf32, #tpu.memory_space<vmem>>, vector<8x8xf32>,
    %234 = vector.extract_strided_slice %162 {offsets = [8, 0], sizes = [8, 32], strides = [1, 1]} : vector<16x64xf32> to vector<8x32xf32>
    %235 = vector.extract_strided_slice %162 {offsets = [8, 32], sizes = [8, 32], strides = [1, 1]} : vector<16x64xf32> to vector<8x32xf32>
    %236 = vector.extract_strided_slice %8 {offsets = [8, 0], sizes = [8, 32], strides = [1, 1]} : vector<16x32xf32> to vector<8x32xf32>
    %237 = vector.extract_strided_slice %236 {offsets = [0, 0], sizes = [8, 8], strides = [1, 1]} : vector<8x32xf32> to vector<8x8xf32>
    %238 = vector.extract_strided_slice %234 {offsets = [0, 0], sizes = [8, 8], strides = [1, 1]} : vector<8x32xf32> to vector<8x8xf32>
    %239 = vector.extract_strided_slice %235 {offsets = [0, 0], sizes = [8, 8], strides = [1, 1]} : vector<8x32xf32> to vector<8x8xf32>
    %cst_87 = arith.constant dense<0.000000e+00> : vector<8x8xf32>
    %240 = tpu.matmul %237, %238, %cst_87 {dimension_numbers = #tpu.dot_dimension_numbers<[1], [1], [0], [0], [0, 0, 1, 0], [], []>} : vector<8x8xf32>, vector<8x8xf32>, vector<8x8xf32> -> vector<8x8xf32>
    %cst_88 = arith.constant dense<0xFF800000> : vector<8xf32>
    %241 = vector.multi_reduction <maximumf>, %240, %cst_88 [1] : vector<8x8xf32> to vector<8xf32>
    %242 = vector.shape_cast %241 : vector<8xf32> to vector<8x1xf32>
    %243 = vector.broadcast %242 : vector<8x1xf32> to vector<8x8xf32>
    %244 = arith.subf %240, %243 : vector<8x8xf32>
    %245 = math.exp %244 : vector<8x8xf32>
    %cst_89 = arith.constant dense<0.000000e+00> : vector<8xf32>
    %246 = vector.multi_reduction <add>, %245, %cst_89 [1] : vector<8x8xf32> to vector<8xf32>
    %247 = vector.shape_cast %246 : vector<8xf32> to vector<8x1xf32>
    %248 = tpu.reciprocal %247 {approx = true} : vector<8x1xf32> -> vector<8x1xf32>
    %249 = vector.broadcast %248 : vector<8x1xf32> to vector<8x8xf32>
    %250 = arith.mulf %245, %249 : vector<8x8xf32>
    %cst_90 = arith.constant dense<0.000000e+00> : vector<8x8xf32>
    %251 = tpu.matmul %250, %239, %cst_90 {dimension_numbers = #tpu.dot_dimension_numbers<[1], [0], [0], [1], [0, 0, 1, 1], [], []>} : vector<8x8xf32>, vector<8x8xf32>, vector<8x8xf32> -> vector<8x8xf32>
    %252 = arith.addf %237, %251 : vector<8x8xf32>
    %c8_91 = arith.constant 8 : index
    %c0_92 = arith.constant 0 : index
    %253 = vector.load %arg7[%c8_91, %c0_92] : memref<16x32xf32, #tpu.memory_space<vmem>>, vector<8x8xf32>
    tpu.vector_store %arg7[%c8_91, %c0_92], %252 {strides = array<i32>} : memref<16x32xf32, #tpu.memory_space<vmem>>, vector<8x8xf32>,
    %254 = vector.extract_strided_slice %236 {offsets = [0, 8], sizes = [8, 8], strides = [1, 1]} : vector<8x32xf32> to vector<8x8xf32>
    %255 = vector.extract_strided_slice %234 {offsets = [0, 8], sizes = [8, 8], strides = [1, 1]} : vector<8x32xf32> to vector<8x8xf32>
    %256 = vector.extract_strided_slice %235 {offsets = [0, 8], sizes = [8, 8], strides = [1, 1]} : vector<8x32xf32> to vector<8x8xf32>
    %cst_93 = arith.constant dense<0.000000e+00> : vector<8x8xf32>
    %257 = tpu.matmul %254, %255, %cst_93 {dimension_numbers = #tpu.dot_dimension_numbers<[1], [1], [0], [0], [0, 0, 1, 0], [], []>} : vector<8x8xf32>, vector<8x8xf32>, vector<8x8xf32> -> vector<8x8xf32>
    %cst_94 = arith.constant dense<0xFF800000> : vector<8xf32>
    %258 = vector.multi_reduction <maximumf>, %257, %cst_94 [1] : vector<8x8xf32> to vector<8xf32>
    %259 = vector.shape_cast %258 : vector<8xf32> to vector<8x1xf32>
    %260 = vector.broadcast %259 : vector<8x1xf32> to vector<8x8xf32>
    %261 = arith.subf %257, %260 : vector<8x8xf32>
    %262 = math.exp %261 : vector<8x8xf32>
    %cst_95 = arith.constant dense<0.000000e+00> : vector<8xf32>
    %263 = vector.multi_reduction <add>, %262, %cst_95 [1] : vector<8x8xf32> to vector<8xf32>
    %264 = vector.shape_cast %263 : vector<8xf32> to vector<8x1xf32>
    %265 = tpu.reciprocal %264 {approx = true} : vector<8x1xf32> -> vector<8x1xf32>
    %266 = vector.broadcast %265 : vector<8x1xf32> to vector<8x8xf32>
    %267 = arith.mulf %262, %266 : vector<8x8xf32>
    %cst_96 = arith.constant dense<0.000000e+00> : vector<8x8xf32>
    %268 = tpu.matmul %267, %256, %cst_96 {dimension_numbers = #tpu.dot_dimension_numbers<[1], [0], [0], [1], [0, 0, 1, 1], [], []>} : vector<8x8xf32>, vector<8x8xf32>, vector<8x8xf32> -> vector<8x8xf32>
    %269 = arith.addf %254, %268 : vector<8x8xf32>
    %c8_97 = arith.constant 8 : index
    %c8_98 = arith.constant 8 : index
    %270 = vector.load %arg7[%c8_97, %c8_98] : memref<16x32xf32, #tpu.memory_space<vmem>>, vector<8x8xf32>
    tpu.vector_store %arg7[%c8_97, %c8_98], %269 {strides = array<i32>} : memref<16x32xf32, #tpu.memory_space<vmem>>, vector<8x8xf32>,
    %271 = vector.extract_strided_slice %236 {offsets = [0, 16], sizes = [8, 8], strides = [1, 1]} : vector<8x32xf32> to vector<8x8xf32>
    %272 = vector.extract_strided_slice %234 {offsets = [0, 16], sizes = [8, 8], strides = [1, 1]} : vector<8x32xf32> to vector<8x8xf32>
    %273 = vector.extract_strided_slice %235 {offsets = [0, 16], sizes = [8, 8], strides = [1, 1]} : vector<8x32xf32> to vector<8x8xf32>
    %cst_99 = arith.constant dense<0.000000e+00> : vector<8x8xf32>
    %274 = tpu.matmul %271, %272, %cst_99 {dimension_numbers = #tpu.dot_dimension_numbers<[1], [1], [0], [0], [0, 0, 1, 0], [], []>} : vector<8x8xf32>, vector<8x8xf32>, vector<8x8xf32> -> vector<8x8xf32>
    %cst_100 = arith.constant dense<0xFF800000> : vector<8xf32>
    %275 = vector.multi_reduction <maximumf>, %274, %cst_100 [1] : vector<8x8xf32> to vector<8xf32>
    %276 = vector.shape_cast %275 : vector<8xf32> to vector<8x1xf32>
    %277 = vector.broadcast %276 : vector<8x1xf32> to vector<8x8xf32>
    %278 = arith.subf %274, %277 : vector<8x8xf32>
    %279 = math.exp %278 : vector<8x8xf32>
    %cst_101 = arith.constant dense<0.000000e+00> : vector<8xf32>
    %280 = vector.multi_reduction <add>, %279, %cst_101 [1] : vector<8x8xf32> to vector<8xf32>
    %281 = vector.shape_cast %280 : vector<8xf32> to vector<8x1xf32>
    %282 = tpu.reciprocal %281 {approx = true} : vector<8x1xf32> -> vector<8x1xf32>
    %283 = vector.broadcast %282 : vector<8x1xf32> to vector<8x8xf32>
    %284 = arith.mulf %279, %283 : vector<8x8xf32>
    %cst_102 = arith.constant dense<0.000000e+00> : vector<8x8xf32>
    %285 = tpu.matmul %284, %273, %cst_102 {dimension_numbers = #tpu.dot_dimension_numbers<[1], [0], [0], [1], [0, 0, 1, 1], [], []>} : vector<8x8xf32>, vector<8x8xf32>, vector<8x8xf32> -> vector<8x8xf32>
    %286 = arith.addf %271, %285 : vector<8x8xf32>
    %c8_103 = arith.constant 8 : index
    %c16_104 = arith.constant 16 : index
    %287 = vector.load %arg7[%c8_103, %c16_104] : memref<16x32xf32, #tpu.memory_space<vmem>>, vector<8x8xf32>
    tpu.vector_store %arg7[%c8_103, %c16_104], %286 {strides = array<i32>} : memref<16x32xf32, #tpu.memory_space<vmem>>, vector<8x8xf32>,
    %288 = vector.extract_strided_slice %236 {offsets = [0, 24], sizes = [8, 8], strides = [1, 1]} : vector<8x32xf32> to vector<8x8xf32>
    %289 = vector.extract_strided_slice %234 {offsets = [0, 24], sizes = [8, 8], strides = [1, 1]} : vector<8x32xf32> to vector<8x8xf32>
    %290 = vector.extract_strided_slice %235 {offsets = [0, 24], sizes = [8, 8], strides = [1, 1]} : vector<8x32xf32> to vector<8x8xf32>
    %cst_105 = arith.constant dense<0.000000e+00> : vector<8x8xf32>
    %291 = tpu.matmul %288, %289, %cst_105 {dimension_numbers = #tpu.dot_dimension_numbers<[1], [1], [0], [0], [0, 0, 1, 0], [], []>} : vector<8x8xf32>, vector<8x8xf32>, vector<8x8xf32> -> vector<8x8xf32>
    %cst_106 = arith.constant dense<0xFF800000> : vector<8xf32>
    %292 = vector.multi_reduction <maximumf>, %291, %cst_106 [1] : vector<8x8xf32> to vector<8xf32>
    %293 = vector.shape_cast %292 : vector<8xf32> to vector<8x1xf32>
    %294 = vector.broadcast %293 : vector<8x1xf32> to vector<8x8xf32>
    %295 = arith.subf %291, %294 : vector<8x8xf32>
    %296 = math.exp %295 : vector<8x8xf32>
    %cst_107 = arith.constant dense<0.000000e+00> : vector<8xf32>
    %297 = vector.multi_reduction <add>, %296, %cst_107 [1] : vector<8x8xf32> to vector<8xf32>
    %298 = vector.shape_cast %297 : vector<8xf32> to vector<8x1xf32>
    %299 = tpu.reciprocal %298 {approx = true} : vector<8x1xf32> -> vector<8x1xf32>
    %300 = vector.broadcast %299 : vector<8x1xf32> to vector<8x8xf32>
    %301 = arith.mulf %296, %300 : vector<8x8xf32>
    %cst_108 = arith.constant dense<0.000000e+00> : vector<8x8xf32>
    %302 = tpu.matmul %301, %290, %cst_108 {dimension_numbers = #tpu.dot_dimension_numbers<[1], [0], [0], [1], [0, 0, 1, 1], [], []>} : vector<8x8xf32>, vector<8x8xf32>, vector<8x8xf32> -> vector<8x8xf32>
    %303 = arith.addf %288, %302 : vector<8x8xf32>
    %c8_109 = arith.constant 8 : index
    %c24_110 = arith.constant 24 : index
    %304 = vector.load %arg7[%c8_109, %c24_110] : memref<16x32xf32, #tpu.memory_space<vmem>>, vector<8x8xf32>
    tpu.vector_store %arg7[%c8_109, %c24_110], %303 {strides = array<i32>} : memref<16x32xf32, #tpu.memory_space<vmem>>, vector<8x8xf32>,
    %c0_111 = arith.constant 0 : index
    %c0_112 = arith.constant 0 : index
    %305 = vector.load %arg7[%c0_111, %c0_112] : memref<16x32xf32, #tpu.memory_space<vmem>>, vector<16x32xf32>
    %c3 = arith.constant 3 : index
    %c0_113 = arith.constant 0 : index
    %306 = vector.load %arg6[%c3, %c0_113] : memref<4x96xf32, #tpu.memory_space<vmem>>, vector<1x32xf32>
    %c0_114 = arith.constant 0 : index
    %c0_115 = arith.constant 0 : index
    %307 = vector.load %arg5[%c0_114, %c0_115] : memref<32x32xf32, #tpu.memory_space<vmem>>, vector<32x32xf32>
    %cst_116 = arith.constant dense<0.000000e+00> : vector<16x32xf32>
    %308 = tpu.matmul %305, %307, %cst_116 {dimension_numbers = #tpu.dot_dimension_numbers<[1], [0], [0], [1], [0, 0, 1, 1], [], []>} : vector<16x32xf32>, vector<32x32xf32>, vector<16x32xf32> -> vector<16x32xf32>
    %309 = vector.broadcast %306 : vector<1x32xf32> to vector<16x32xf32>
    %310 = arith.addf %308, %309 : vector<16x32xf32>
    %cst_117 = arith.constant 0.000000e+00 : f32
    %311 = vector.broadcast %cst_117 : f32 to vector<16x32xf32>
    %312 = arith.maximumf %310, %311 : vector<16x32xf32>
    %313 = arith.addf %305, %312 : vector<16x32xf32>
    %c0_118 = arith.constant 0 : index
    %c0_119 = arith.constant 0 : index
    %314 = vector.load %arg7[%c0_118, %c0_119] : memref<16x32xf32, #tpu.memory_space<vmem>>, vector<16x32xf32>
    tpu.vector_store %arg7[%c0_118, %c0_119], %313 {strides = array<i32>} : memref<16x32xf32, #tpu.memory_space<vmem>>, vector<16x32xf32>,
    return
  }
}

</mosaic_0001>

<llo_original>
// kernel: tpu_custom_call.1
$region0: #{tpu_custom_call.1}
  #allocation0 [shape = 'u32[]', space=smem, size = 0x4, offset = 0x4, fixed_abs, tag = 'smem constant byte address 0x4 - core index']
  #allocation1 [shape = 'u32[144,128]{1,0:T(1,128)}', space=vmem, size = 0x12000, scoped, tag = 'internal scratch']
  #allocation2 [shape = 'f32[16,32]{1,0:T(8,128)}', space=vmem, size = 0x2000, scoped, tag = 'scratch operand']
  %s0 = inlined_call_operand.hbm [shape: f32[16,16], index: 0, kind: input, shape index: {}]
  %s1 = inlined_call_operand.hbm [shape: f32[8,32], index: 1, kind: input, shape index: {}]
  %s2 = inlined_call_operand.hbm [shape: f32[16,96], index: 2, kind: input, shape index: {}]
  %s3 = inlined_call_operand.hbm [shape: f32[32,32], index: 3, kind: input, shape index: {}]
  %s4 = inlined_call_operand.hbm [shape: f32[32,64], index: 4, kind: input, shape index: {}]
  %s5 = inlined_call_operand.hbm [shape: f32[32,32], index: 5, kind: input, shape index: {}]
  %s6 = inlined_call_operand.vmem [shape: f32[4,96], index: 6, kind: input, shape index: {}]
  %s7 = inlined_call_operand.hbm [shape: f32[16,32], index: 7, kind: output, shape index: {}]
  %s8 = sld [smem:[#allocation0]]
  $region62: #{tpu_custom_call.1} parent=0
    _
  %s10 = ssub.s32 1, %s8
  %s11 = scalar_select 0, %s10, %s8
  $region1: #{tpu_custom_call.1} parent=0
    #allocation3 [shape = 'u8[8192]{0}', space=vmem, size = 0x2000, scoped, tag = 'input window, operand 0, single buffered']
    #allocation4 [shape = 's32[1]{0}', space=sflag, size = 0x4, scoped, tag = 'scoped memory for tpu_custom_call.1']
    #allocation5 [shape = 's32[1]{0}', space=sflag, size = 0x4, scoped, tag = 'scoped memory for tpu_custom_call.1']
    #allocation6 [shape = 'u8[4096]{0}', space=vmem, size = 0x1000, scoped, tag = 'input window, operand 1, single buffered']
    #allocation7 [shape = 's32[1]{0}', space=sflag, size = 0x4, scoped, tag = 'scoped memory for tpu_custom_call.1']
    #allocation8 [shape = 'u8[8192]{0}', space=vmem, size = 0x2000, scoped, tag = 'input window, operand 2, single buffered']
    #allocation9 [shape = 'u8[16384]{0}', space=vmem, size = 0x4000, scoped, tag = 'input window, operand 3, single buffered']
    #allocation10 [shape = 's32[1]{0}', space=sflag, size = 0x4, scoped, tag = 'scoped memory for tpu_custom_call.1']
    #allocation11 [shape = 'u8[16384]{0}', space=vmem, size = 0x4000, scoped, tag = 'input window, operand 4, single buffered']
    #allocation12 [shape = 'u8[16384]{0}', space=vmem, size = 0x4000, scoped, tag = 'input window, operand 5, single buffered']
    #allocation13 [shape = 's32[1]{0}', space=sflag, size = 0x4, scoped, tag = 'scoped memory for tpu_custom_call.1']
    #allocation14 [shape = 'u8[8192]{0}', space=vmem, size = 0x2000, scoped, tag = 'output window, operand 0, single buffered']
    %12 = vsyncpa [#allocation4], 0
    %13 = vsyncpa [#allocation7], 0
    %14 = vsyncpa [#allocation10], 0
    %15 = vsyncpa [#allocation13], 0
    %16 = vsyncpa [#allocation5], 0
    // Predicated region
    $region2: #{tpu_custom_call.1} parent=1 // pred_check
      _
    $region3: #{tpu_custom_call.1} parent=1 // pred_check_branch
      %18 = sbr.rel (0) target = $region5
    $region4: #{tpu_custom_call.1} parent=1 // pred_region
      %s20 = ssub.s32 256, 256
      %21 = vsyncadd [#allocation4], %s20
      %s22 = sshll.u32 [#allocation3], 4
      %s23 = int_to_ptr.vmem [resolvable:$true] %s22
      %28 = dma.hbm_to_vmem [thread:$0]  %s0, 256, %s23, [#allocation4], 128, 128, 8
    $region5: #{tpu_custom_call.1} parent=1 // pred_fallthru
      _
    // Predicated region
    $region6: #{tpu_custom_call.1} parent=1 // pred_check
      _
    $region7: #{tpu_custom_call.1} parent=1 // pred_check_branch
      %30 = sbr.rel (0) target = $region9
    $region8: #{tpu_custom_call.1} parent=1 // pred_region
      %s32 = ssub.s32 128, 128
      %33 = vsyncadd [#allocation7], %s32
      %s35 = sshll.u32 [#allocation6], 4
      %s36 = int_to_ptr.vmem [resolvable:$true] %s35
      %38 = dma.hbm_to_vmem [thread:$0]  %s1, 128, %s36, [#allocation7]
    $region9: #{tpu_custom_call.1} parent=1 // pred_fallthru
      _
    // Predicated region
    $region10: #{tpu_custom_call.1} parent=1 // pred_check
      _
    $region11: #{tpu_custom_call.1} parent=1 // pred_check_branch
      %40 = sbr.rel (0) target = $region13
    $region12: #{tpu_custom_call.1} parent=1 // pred_region
      %s42 = ssub.s32 256, 256
      %43 = vsyncadd [#allocation7], %s42
      %s44 = sshll.u32 [#allocation8], 4
      %s45 = int_to_ptr.vmem [resolvable:$true] %s44
      %50 = dma.hbm_to_vmem [thread:$0]  %s2, 256, %s45, [#allocation7], 128, 128, 8
    $region13: #{tpu_custom_call.1} parent=1 // pred_fallthru
      _
    // Predicated region
    $region14: #{tpu_custom_call.1} parent=1 // pred_check
      _
    $region15: #{tpu_custom_call.1} parent=1 // pred_check_branch
      %52 = sbr.rel (0) target = $region17
    $region16: #{tpu_custom_call.1} parent=1 // pred_region
      %s54 = ssub.s32 512, 512
      %55 = vsyncadd [#allocation10], %s54
      %s56 = sshll.u32 [#allocation9], 4
      %s57 = int_to_ptr.vmem [resolvable:$true] %s56
      %62 = dma.hbm_to_vmem [thread:$0]  %s3, 512, %s57, [#allocation10], 128, 128, 8
    $region17: #{tpu_custom_call.1} parent=1 // pred_fallthru
      _
    // Predicated region
    $region18: #{tpu_custom_call.1} parent=1 // pred_check
      _
    $region19: #{tpu_custom_call.1} parent=1 // pred_check_branch
      %64 = sbr.rel (0) target = $region21
    $region20: #{tpu_custom_call.1} parent=1 // pred_region
      %s66 = ssub.s32 512, 512
      %67 = vsyncadd [#allocation10], %s66
      %s68 = sshll.u32 [#allocation11], 4
      %s69 = int_to_ptr.vmem [resolvable:$true] %s68
      %74 = dma.hbm_to_vmem [thread:$0]  %s4, 512, %s69, [#allocation10], 128, 128, 8
    $region21: #{tpu_custom_call.1} parent=1 // pred_fallthru
      _
    // Predicated region
    $region22: #{tpu_custom_call.1} parent=1 // pred_check
      _
    $region23: #{tpu_custom_call.1} parent=1 // pred_check_branch
      %76 = sbr.rel (0) target = $region25
    $region24: #{tpu_custom_call.1} parent=1 // pred_region
      %s78 = ssub.s32 512, 512
      %79 = vsyncadd [#allocation13], %s78
      %s80 = sshll.u32 [#allocation12], 4
      %s81 = int_to_ptr.vmem [resolvable:$true] %s80
      %86 = dma.hbm_to_vmem [thread:$0]  %s5, 512, %s81, [#allocation13], 128, 128, 8
    $region25: #{tpu_custom_call.1} parent=1 // pred_fallthru
      _
    // Predicated region
    $region26: #{tpu_custom_call.1} parent=1 // pred_check
      _
    $region27: #{tpu_custom_call.1} parent=1 // pred_check_branch
      %88 = sbr.rel (0) target = $region29
    $region28: #{tpu_custom_call.1} parent=1 // pred_region
      _
    $region29: #{tpu_custom_call.1} parent=1 // pred_fallthru
      _
    // Predicated region
    $region30: #{tpu_custom_call.1} parent=1 // pred_check
      _
    $region31: #{tpu_custom_call.1} parent=1 // pred_check_branch
      %90 = sbr.rel (0) target = $region33
    $region32: #{tpu_custom_call.1} parent=1 // pred_region
      %91 = dma.done [#allocation4], 256
    $region33: #{tpu_custom_call.1} parent=1 // pred_fallthru
      _
    // Predicated region
    $region34: #{tpu_custom_call.1} parent=1 // pred_check
      _
    $region35: #{tpu_custom_call.1} parent=1 // pred_check_branch
      %93 = sbr.rel (0) target = $region37
    $region36: #{tpu_custom_call.1} parent=1 // pred_region
      %94 = dma.done [#allocation7], 128
    $region37: #{tpu_custom_call.1} parent=1 // pred_fallthru
      _
    // Predicated region
    $region38: #{tpu_custom_call.1} parent=1 // pred_check
      _
    $region39: #{tpu_custom_call.1} parent=1 // pred_check_branch
      %96 = sbr.rel (0) target = $region41
    $region40: #{tpu_custom_call.1} parent=1 // pred_region
      %97 = dma.done [#allocation7], 256
    $region41: #{tpu_custom_call.1} parent=1 // pred_fallthru
      _
    // Predicated region
    $region42: #{tpu_custom_call.1} parent=1 // pred_check
      _
    $region43: #{tpu_custom_call.1} parent=1 // pred_check_branch
      %99 = sbr.rel (0) target = $region45
    $region44: #{tpu_custom_call.1} parent=1 // pred_region
      %100 = dma.done [#allocation10], 512
    $region45: #{tpu_custom_call.1} parent=1 // pred_fallthru
      _
    // Predicated region
    $region46: #{tpu_custom_call.1} parent=1 // pred_check
      _
    $region47: #{tpu_custom_call.1} parent=1 // pred_check_branch
      %102 = sbr.rel (0) target = $region49
    $region48: #{tpu_custom_call.1} parent=1 // pred_region
      %103 = dma.done [#allocation10], 512
    $region49: #{tpu_custom_call.1} parent=1 // pred_fallthru
      _
    // Predicated region
    $region50: #{tpu_custom_call.1} parent=1 // pred_check
      _
    $region51: #{tpu_custom_call.1} parent=1 // pred_check_branch
      %105 = sbr.rel (0) target = $region53
    $region52: #{tpu_custom_call.1} parent=1 // pred_region
      %106 = dma.done [#allocation13], 512
    $region53: #{tpu_custom_call.1} parent=1 // pred_fallthru
      _
    %v107 = vld [vmem:[#allocation3] sm:$0xff]
    %v108 = vld [vmem:[#allocation3 + $0x8] sm:$0xff]
    %v109 = vld [vmem:[#allocation6] sm:$0xff]
    %v110 = vld [vmem:[%s6] sm:$0x1]
    %v111 = vld [vmem:[#allocation8] sm:$0xff]
    %v112 = vld [vmem:[#allocation8 + $0x8] sm:$0xff]
    %v113 = vlaneseq
    %v114 = vshrl.u32 %v113, 7
    %v115 = vsub.s32 0, %v114
    %v116 = vrot.slane %v110, %v115
    %vm117 = vcmask 130048
    %v119 = vsel %vm117, %v107, 0
    %v122 = vsel %vm117, %v108, 0
    %124 = vmatprep.subr.mxu0 0.0
    %125 = vmatpush1.msra.mxu0 %v111
    %126 = vmatprep.subr.mxu0 0.0
    %127 = vmatpush1.msra.mxu0 %v112
    %128 = vmatprep.subr.mxu0 0.0
    %129 = vmatpush1.msra.mxu0 0.0
    %130 = vmatprep.subr.mxu0 0.0
    %131 = vmatpush1.msra.mxu0 0.0
    %132 = vmatprep.subr.mxu0 0.0
    %133 = vmatpush1.msra.mxu0 0.0
    %134 = vmatprep.subr.mxu0 0.0
    %135 = vmatpush1.msra.mxu0 0.0
    %136 = vmatprep.subr.mxu0 0.0
    %137 = vmatpush1.msra.mxu0 0.0
    %138 = vmatprep.subr.mxu0 0.0
    %139 = vmatpush1.msra.mxu0 0.0
    %140 = vmatprep.subr.mxu0 0.0
    %141 = vmatpush1.msra.mxu0 0.0
    %142 = vmatprep.subr.mxu0 0.0
    %143 = vmatpush1.msra.mxu0 0.0
    %144 = vmatprep.subr.mxu0 0.0
    %145 = vmatpush1.msra.mxu0 0.0
    %146 = vmatprep.subr.mxu0 0.0
    %147 = vmatpush1.msra.mxu0 0.0
    %148 = vmatprep.subr.mxu0 0.0
    %149 = vmatpush1.msra.mxu0 0.0
    %150 = vmatprep.subr.mxu0 0.0
    %151 = vmatpush1.msra.mxu0 0.0
    %152 = vmatprep.subr.mxu0 0.0
    %153 = vmatpush1.msra.mxu0 0.0
    %154 = vmatprep.subr.mxu0 0.0
    %155 = vmatpush1.msra.mxu0 0.0
    %156 = vmatprep.subr.mxu0 0.0
    %157 = vmatpush1.msra.mxu0 0.0
    %158 = vmatprep.subr.mxu0 0.0
    %159 = vmatpush1.msra.mxu0 0.0
    %160 = vmatprep.subr.mxu0 0.0
    %161 = vmatpush1.msra.mxu0 0.0
    %162 = vmatprep.subr.mxu0 0.0
    %163 = vmatpush1.msra.mxu0 0.0
    %164 = vmatprep.subr.mxu0 0.0
    %165 = vmatpush1.msra.mxu0 0.0
    %166 = vmatprep.subr.mxu0 0.0
    %167 = vmatpush1.msra.mxu0 0.0
    %168 = vmatprep.subr.mxu0 0.0
    %169 = vmatpush1.msra.mxu0 0.0
    %170 = vmatprep.subr.mxu0 0.0
    %171 = vmatpush1.msra.mxu0 0.0
    %172 = vmatprep.subr.mxu0 0.0
    %173 = vmatpush1.msra.mxu0 0.0
    %174 = vmatprep.subr.mxu0 0.0
    %175 = vmatpush1.msra.mxu0 0.0
    %176 = vmatprep.subr.mxu0 0.0
    %177 = vmatpush1.msra.mxu0 0.0
    %178 = vmatprep.subr.mxu0 0.0
    %179 = vmatpush1.msra.mxu0 0.0
    %180 = vmatprep.subr.mxu0 0.0
    %181 = vmatpush1.msra.mxu0 0.0
    %182 = vmatprep.subr.mxu0 0.0
    %183 = vmatpush1.msra.mxu0 0.0
    %184 = vmatprep.subr.mxu0 0.0
    %185 = vmatpush1.msra.mxu0 0.0
    %186 = vmatprep.subr.mxu0 0.0
    %187 = vmatpush1.msra.mxu0 0.0
    %188 = vmatprep.mubr.f32.mxu0 0.0
    %189 = vmatmul.mubr.f32.gmra.mrb[0].mxu0 %v119
    %v190 = vpop.f32.mrb[0].mxu0
    %v191 = vadd.f32 %v116, %v190
    %v192 = vpop.f32.mrb[0].mxu0
    %193 = vmatprep.mubr.f32.mxu0 0.0
    %194 = vmatmul.mubr.f32.gmra.mrb[0].mxu0 %v122
    %v195 = vpop.f32.mrb[0].mxu0
    %v196 = vadd.f32 %v116, %v195
    %v197 = vpop.f32.mrb[0].mxu0
    %198 = vdwg.mxu0
    %vm199 = vcmask 64512
    %v201 = vsel %vm199, %v109, 0
    %v204 = vsel %vm199, %v191, 0
    %206 = vmatprep.subr.mxu0 0.0
    %207 = vmatpush1.xpose.msra.mxu0 %v204
    %208 = vmatprep.subr.mxu0 0.0
    %209 = vmatpush1.xpose.msra.mxu0 0.0
    %210 = vmatprep.subr.mxu0 0.0
    %211 = vmatpush1.xpose.msra.mxu0 0.0
    %212 = vmatprep.subr.mxu0 0.0
    %213 = vmatpush1.xpose.msra.mxu0 0.0
    %214 = vmatprep.subr.mxu0 0.0
    %215 = vmatpush1.xpose.msra.mxu0 0.0
    %216 = vmatprep.subr.mxu0 0.0
    %217 = vmatpush1.xpose.msra.mxu0 0.0
    %218 = vmatprep.subr.mxu0 0.0
    %219 = vmatpush1.xpose.msra.mxu0 0.0
    %220 = vmatprep.subr.mxu0 0.0
    %221 = vmatpush1.xpose.msra.mxu0 0.0
    %222 = vmatprep.subr.mxu0 0.0
    %223 = vmatpush1.xpose.msra.mxu0 0.0
    %224 = vmatprep.subr.mxu0 0.0
    %225 = vmatpush1.xpose.msra.mxu0 0.0
    %226 = vmatprep.subr.mxu0 0.0
    %227 = vmatpush1.xpose.msra.mxu0 0.0
    %228 = vmatprep.subr.mxu0 0.0
    %229 = vmatpush1.xpose.msra.mxu0 0.0
    %230 = vmatprep.subr.mxu0 0.0
    %231 = vmatpush1.xpose.msra.mxu0 0.0
    %232 = vmatprep.subr.mxu0 0.0
    %233 = vmatpush1.xpose.msra.mxu0 0.0
    %234 = vmatprep.subr.mxu0 0.0
    %235 = vmatpush1.xpose.msra.mxu0 0.0
    %236 = vmatprep.subr.mxu0 0.0
    %237 = vmatpush1.xpose.msra.mxu0 0.0
    %238 = vmatprep.subr.mxu0 0.0
    %239 = vmatpush1.xpose.msra.mxu0 0.0
    %240 = vmatprep.subr.mxu0 0.0
    %241 = vmatpush1.xpose.msra.mxu0 0.0
    %242 = vmatprep.subr.mxu0 0.0
    %243 = vmatpush1.xpose.msra.mxu0 0.0
    %244 = vmatprep.subr.mxu0 0.0
    %245 = vmatpush1.xpose.msra.mxu0 0.0
    %246 = vmatprep.subr.mxu0 0.0
    %247 = vmatpush1.xpose.msra.mxu0 0.0
    %248 = vmatprep.subr.mxu0 0.0
    %249 = vmatpush1.xpose.msra.mxu0 0.0
    %250 = vmatprep.subr.mxu0 0.0
    %251 = vmatpush1.xpose.msra.mxu0 0.0
    %252 = vmatprep.subr.mxu0 0.0
    %253 = vmatpush1.xpose.msra.mxu0 0.0
    %254 = vmatprep.subr.mxu0 0.0
    %255 = vmatpush1.xpose.msra.mxu0 0.0
    %256 = vmatprep.subr.mxu0 0.0
    %257 = vmatpush1.xpose.msra.mxu0 0.0
    %258 = vmatprep.subr.mxu0 0.0
    %259 = vmatpush1.xpose.msra.mxu0 0.0
    %260 = vmatprep.subr.mxu0 0.0
    %261 = vmatpush1.xpose.msra.mxu0 0.0
    %262 = vmatprep.subr.mxu0 0.0
    %263 = vmatpush1.xpose.msra.mxu0 0.0
    %264 = vmatprep.subr.mxu0 0.0
    %265 = vmatpush1.xpose.msra.mxu0 0.0
    %266 = vmatprep.subr.mxu0 0.0
    %267 = vmatpush1.xpose.msra.mxu0 0.0
    %268 = vmatprep.subr.mxu0 0.0
    %269 = vmatpush1.xpose.msra.mxu0 0.0
    %270 = vmatprep.mubr.f32.mxu0 0.0
    %271 = vmatmul.mubr.f32.gmra.mrb[0].mxu0 %v201
    %v272 = vpop.f32.mrb[0].mxu0
    %v273 = vadd.f32 0.0, %v272
    %v274 = vpop.f32.mrb[0].mxu0
    %275 = vdwg.mxu0
    %v276 = vsel %vm199, %v273, -inf
    %277 = vmax.xlane.f32.xlu0 %v276
    %v278 = vpop.xlane.xlu0 %277
    %v279 = vsub.f32 %v273, %v278
    %v280 = vmul.f32 %v279, 1.442695
    %v281 = vpow.pop %v280
    %v282 = vsel %vm199, %v281, 0.0
    %283 = vadd.xlane.f32.xlu0 %v282
    %v284 = vpop.xlane.xlu0 %283
    %v285 = vrcp.pop %v284
    %v286 = vmul.f32 %v281, %v285
    %287 = vrot.lane.b32.xlu0 %v191, 96
    %v288 = vpop.permute.xlu0 %287
    %v291 = vsel %vm199, %v286, 0
    %293 = vmatprep.subr.mxu0 0.0
    %294 = vmatpush1.msra.mxu0 %v288
    %295 = vmatprep.subr.mxu0 0.0
    %296 = vmatpush1.msra.mxu0 0.0
    %297 = vmatprep.subr.mxu0 0.0
    %298 = vmatpush1.msra.mxu0 0.0
    %299 = vmatprep.subr.mxu0 0.0
    %300 = vmatpush1.msra.mxu0 0.0
    %301 = vmatprep.subr.mxu0 0.0
    %302 = vmatpush1.msra.mxu0 0.0
    %303 = vmatprep.subr.mxu0 0.0
    %304 = vmatpush1.msra.mxu0 0.0
    %305 = vmatprep.subr.mxu0 0.0
    %306 = vmatpush1.msra.mxu0 0.0
    %307 = vmatprep.subr.mxu0 0.0
    %308 = vmatpush1.msra.mxu0 0.0
    %309 = vmatprep.subr.mxu0 0.0
    %310 = vmatpush1.msra.mxu0 0.0
    %311 = vmatprep.subr.mxu0 0.0
    %312 = vmatpush1.msra.mxu0 0.0
    %313 = vmatprep.subr.mxu0 0.0
    %314 = vmatpush1.msra.mxu0 0.0
    %315 = vmatprep.subr.mxu0 0.0
    %316 = vmatpush1.msra.mxu0 0.0
    %317 = vmatprep.subr.mxu0 0.0
    %318 = vmatpush1.msra.mxu0 0.0
    %319 = vmatprep.subr.mxu0 0.0
    %320 = vmatpush1.msra.mxu0 0.0
    %321 = vmatprep.subr.mxu0 0.0
    %322 = vmatpush1.msra.mxu0 0.0
    %323 = vmatprep.subr.mxu0 0.0
    %324 = vmatpush1.msra.mxu0 0.0
    %325 = vmatprep.subr.mxu0 0.0
    %326 = vmatpush1.msra.mxu0 0.0
    %327 = vmatprep.subr.mxu0 0.0
    %328 = vmatpush1.msra.mxu0 0.0
    %329 = vmatprep.subr.mxu0 0.0
    %330 = vmatpush1.msra.mxu0 0.0
    %331 = vmatprep.subr.mxu0 0.0
    %332 = vmatpush1.msra.mxu0 0.0
    %333 = vmatprep.subr.mxu0 0.0
    %334 = vmatpush1.msra.mxu0 0.0
    %335 = vmatprep.subr.mxu0 0.0
    %336 = vmatpush1.msra.mxu0 0.0
    %337 = vmatprep.subr.mxu0 0.0
    %338 = vmatpush1.msra.mxu0 0.0
    %339 = vmatprep.subr.mxu0 0.0
    %340 = vmatpush1.msra.mxu0 0.0
    %341 = vmatprep.subr.mxu0 0.0
    %342 = vmatpush1.msra.mxu0 0.0
    %343 = vmatprep.subr.mxu0 0.0
    %344 = vmatpush1.msra.mxu0 0.0
    %345 = vmatprep.subr.mxu0 0.0
    %346 = vmatpush1.msra.mxu0 0.0
    %347 = vmatprep.subr.mxu0 0.0
    %348 = vmatpush1.msra.mxu0 0.0
    %349 = vmatprep.subr.mxu0 0.0
    %350 = vmatpush1.msra.mxu0 0.0
    %351 = vmatprep.subr.mxu0 0.0
    %352 = vmatpush1.msra.mxu0 0.0
    %353 = vmatprep.subr.mxu0 0.0
    %354 = vmatpush1.msra.mxu0 0.0
    %355 = vmatprep.subr.mxu0 0.0
    %356 = vmatpush1.msra.mxu0 0.0
    %357 = vmatprep.mubr.f32.mxu0 0.0
    %358 = vmatmul.mubr.f32.gmra.mrb[0].mxu0 %v291
    %v359 = vpop.f32.mrb[0].mxu0
    %v360 = vadd.f32 0.0, %v359
    %v361 = vpop.f32.mrb[0].mxu0
    %362 = vdwg.mxu0
    %v363 = vadd.f32 %v109, %v360
    %364 = vst.msk [vmem:[#allocation2] sm:$0xff] %vm199, %v363
    %365 = vrot.lane.b32.xlu0 %v109, 120
    %v366 = vpop.permute.xlu0 %365
    %367 = vrot.lane.b32.xlu0 %v191, 120
    %v368 = vpop.permute.xlu0 %367
    %v369 = vsel %vm199, %v366, 0
    %v371 = vsel %vm199, %v368, 0
    %373 = vmatprep.subr.mxu0 0.0
    %374 = vmatpush1.xpose.msra.mxu0 %v371
    %375 = vmatprep.subr.mxu0 0.0
    %376 = vmatpush1.xpose.msra.mxu0 0.0
    %377 = vmatprep.subr.mxu0 0.0
    %378 = vmatpush1.xpose.msra.mxu0 0.0
    %379 = vmatprep.subr.mxu0 0.0
    %380 = vmatpush1.xpose.msra.mxu0 0.0
    %381 = vmatprep.subr.mxu0 0.0
    %382 = vmatpush1.xpose.msra.mxu0 0.0
    %383 = vmatprep.subr.mxu0 0.0
    %384 = vmatpush1.xpose.msra.mxu0 0.0
    %385 = vmatprep.subr.mxu0 0.0
    %386 = vmatpush1.xpose.msra.mxu0 0.0
    %387 = vmatprep.subr.mxu0 0.0
    %388 = vmatpush1.xpose.msra.mxu0 0.0
    %389 = vmatprep.subr.mxu0 0.0
    %390 = vmatpush1.xpose.msra.mxu0 0.0
    %391 = vmatprep.subr.mxu0 0.0
    %392 = vmatpush1.xpose.msra.mxu0 0.0
    %393 = vmatprep.subr.mxu0 0.0
    %394 = vmatpush1.xpose.msra.mxu0 0.0
    %395 = vmatprep.subr.mxu0 0.0
    %396 = vmatpush1.xpose.msra.mxu0 0.0
    %397 = vmatprep.subr.mxu0 0.0
    %398 = vmatpush1.xpose.msra.mxu0 0.0
    %399 = vmatprep.subr.mxu0 0.0
    %400 = vmatpush1.xpose.msra.mxu0 0.0
    %401 = vmatprep.subr.mxu0 0.0
    %402 = vmatpush1.xpose.msra.mxu0 0.0
    %403 = vmatprep.subr.mxu0 0.0
    %404 = vmatpush1.xpose.msra.mxu0 0.0
    %405 = vmatprep.subr.mxu0 0.0
    %406 = vmatpush1.xpose.msra.mxu0 0.0
    %407 = vmatprep.subr.mxu0 0.0
    %408 = vmatpush1.xpose.msra.mxu0 0.0
    %409 = vmatprep.subr.mxu0 0.0
    %410 = vmatpush1.xpose.msra.mxu0 0.0
    %411 = vmatprep.subr.mxu0 0.0
    %412 = vmatpush1.xpose.msra.mxu0 0.0
    %413 = vmatprep.subr.mxu0 0.0
    %414 = vmatpush1.xpose.msra.mxu0 0.0
    %415 = vmatprep.subr.mxu0 0.0
    %416 = vmatpush1.xpose.msra.mxu0 0.0
    %417 = vmatprep.subr.mxu0 0.0
    %418 = vmatpush1.xpose.msra.mxu0 0.0
    %419 = vmatprep.subr.mxu0 0.0
    %420 = vmatpush1.xpose.msra.mxu0 0.0
    %421 = vmatprep.subr.mxu0 0.0
    %422 = vmatpush1.xpose.msra.mxu0 0.0
    %423 = vmatprep.subr.mxu0 0.0
    %424 = vmatpush1.xpose.msra.mxu0 0.0
    %425 = vmatprep.subr.mxu0 0.0
    %426 = vmatpush1.xpose.msra.mxu0 0.0
    %427 = vmatprep.subr.mxu0 0.0
    %428 = vmatpush1.xpose.msra.mxu0 0.0
    %429 = vmatprep.subr.mxu0 0.0
    %430 = vmatpush1.xpose.msra.mxu0 0.0
    %431 = vmatprep.subr.mxu0 0.0
    %432 = vmatpush1.xpose.msra.mxu0 0.0
    %433 = vmatprep.subr.mxu0 0.0
    %434 = vmatpush1.xpose.msra.mxu0 0.0
    %435 = vmatprep.subr.mxu0 0.0
    %436 = vmatpush1.xpose.msra.mxu0 0.0
    %437 = vmatprep.mubr.f32.mxu0 0.0
    %438 = vmatmul.mubr.f32.gmra.mrb[0].mxu0 %v369
    %v439 = vpop.f32.mrb[0].mxu0
    %v440 = vadd.f32 0.0, %v439
    %v441 = vpop.f32.mrb[0].mxu0
    %442 = vdwg.mxu0
    %v443 = vsel %vm199, %v440, -inf
    %444 = vmax.xlane.f32.xlu0 %v443
    %v445 = vpop.xlane.xlu0 %444
    %v446 = vsub.f32 %v440, %v445
    %v447 = vmul.f32 %v446, 1.442695
    %v448 = vpow.pop %v447
    %v449 = vsel %vm199, %v448, 0.0
    %450 = vadd.xlane.f32.xlu0 %v449
    %v451 = vpop.xlane.xlu0 %450
    %v452 = vrcp.pop %v451
    %v453 = vmul.f32 %v448, %v452
    %454 = vrot.lane.b32.xlu0 %v191, 88
    %v455 = vpop.permute.xlu0 %454
    %v458 = vsel %vm199, %v453, 0
    %460 = vmatprep.subr.mxu0 0.0
    %461 = vmatpush1.msra.mxu0 %v455
    %462 = vmatprep.subr.mxu0 0.0
    %463 = vmatpush1.msra.mxu0 0.0
    %464 = vmatprep.subr.mxu0 0.0
    %465 = vmatpush1.msra.mxu0 0.0
    %466 = vmatprep.subr.mxu0 0.0
    %467 = vmatpush1.msra.mxu0 0.0
    %468 = vmatprep.subr.mxu0 0.0
    %469 = vmatpush1.msra.mxu0 0.0
    %470 = vmatprep.subr.mxu0 0.0
    %471 = vmatpush1.msra.mxu0 0.0
    %472 = vmatprep.subr.mxu0 0.0
    %473 = vmatpush1.msra.mxu0 0.0
    %474 = vmatprep.subr.mxu0 0.0
    %475 = vmatpush1.msra.mxu0 0.0
    %476 = vmatprep.subr.mxu0 0.0
    %477 = vmatpush1.msra.mxu0 0.0
    %478 = vmatprep.subr.mxu0 0.0
    %479 = vmatpush1.msra.mxu0 0.0
    %480 = vmatprep.subr.mxu0 0.0
    %481 = vmatpush1.msra.mxu0 0.0
    %482 = vmatprep.subr.mxu0 0.0
    %483 = vmatpush1.msra.mxu0 0.0
    %484 = vmatprep.subr.mxu0 0.0
    %485 = vmatpush1.msra.mxu0 0.0
    %486 = vmatprep.subr.mxu0 0.0
    %487 = vmatpush1.msra.mxu0 0.0
    %488 = vmatprep.subr.mxu0 0.0
    %489 = vmatpush1.msra.mxu0 0.0
    %490 = vmatprep.subr.mxu0 0.0
    %491 = vmatpush1.msra.mxu0 0.0
    %492 = vmatprep.subr.mxu0 0.0
    %493 = vmatpush1.msra.mxu0 0.0
    %494 = vmatprep.subr.mxu0 0.0
    %495 = vmatpush1.msra.mxu0 0.0
    %496 = vmatprep.subr.mxu0 0.0
    %497 = vmatpush1.msra.mxu0 0.0
    %498 = vmatprep.subr.mxu0 0.0
    %499 = vmatpush1.msra.mxu0 0.0
    %500 = vmatprep.subr.mxu0 0.0
    %501 = vmatpush1.msra.mxu0 0.0
    %502 = vmatprep.subr.mxu0 0.0
    %503 = vmatpush1.msra.mxu0 0.0
    %504 = vmatprep.subr.mxu0 0.0
    %505 = vmatpush1.msra.mxu0 0.0
    %506 = vmatprep.subr.mxu0 0.0
    %507 = vmatpush1.msra.mxu0 0.0
    %508 = vmatprep.subr.mxu0 0.0
    %509 = vmatpush1.msra.mxu0 0.0
    %510 = vmatprep.subr.mxu0 0.0
    %511 = vmatpush1.msra.mxu0 0.0
    %512 = vmatprep.subr.mxu0 0.0
    %513 = vmatpush1.msra.mxu0 0.0
    %514 = vmatprep.subr.mxu0 0.0
    %515 = vmatpush1.msra.mxu0 0.0
    %516 = vmatprep.subr.mxu0 0.0
    %517 = vmatpush1.msra.mxu0 0.0
    %518 = vmatprep.subr.mxu0 0.0
    %519 = vmatpush1.msra.mxu0 0.0
    %520 = vmatprep.subr.mxu0 0.0
    %521 = vmatpush1.msra.mxu0 0.0
    %522 = vmatprep.subr.mxu0 0.0
    %523 = vmatpush1.msra.mxu0 0.0
    %524 = vmatprep.mubr.f32.mxu0 0.0
    %525 = vmatmul.mubr.f32.gmra.mrb[0].mxu0 %v458
    %v526 = vpop.f32.mrb[0].mxu0
    %v527 = vadd.f32 0.0, %v526
    %v528 = vpop.f32.mrb[0].mxu0
    %529 = vdwg.mxu0
    %531 = vrot.lane.b32.xlu0 %v527, 8
    %v532 = vpop.permute.xlu0 %531
    %v534 = vadd.f32 %v109, %v532
    %vm535 = vcmask 130112
    %536 = vst.msk [vmem:[#allocation2] sm:$0xff] %vm535, %v534
    %537 = vrot.lane.b32.xlu0 %v109, 112
    %v538 = vpop.permute.xlu0 %537
    %539 = vrot.lane.b32.xlu0 %v191, 112
    %v540 = vpop.permute.xlu0 %539
    %v541 = vsel %vm199, %v538, 0
    %v543 = vsel %vm199, %v540, 0
    %545 = vmatprep.subr.mxu0 0.0
    %546 = vmatpush1.xpose.msra.mxu0 %v543
    %547 = vmatprep.subr.mxu0 0.0
    %548 = vmatpush1.xpose.msra.mxu0 0.0
    %549 = vmatprep.subr.mxu0 0.0
    %550 = vmatpush1.xpose.msra.mxu0 0.0
    %551 = vmatprep.subr.mxu0 0.0
    %552 = vmatpush1.xpose.msra.mxu0 0.0
    %553 = vmatprep.subr.mxu0 0.0
    %554 = vmatpush1.xpose.msra.mxu0 0.0
    %555 = vmatprep.subr.mxu0 0.0
    %556 = vmatpush1.xpose.msra.mxu0 0.0
    %557 = vmatprep.subr.mxu0 0.0
    %558 = vmatpush1.xpose.msra.mxu0 0.0
    %559 = vmatprep.subr.mxu0 0.0
    %560 = vmatpush1.xpose.msra.mxu0 0.0
    %561 = vmatprep.subr.mxu0 0.0
    %562 = vmatpush1.xpose.msra.mxu0 0.0
    %563 = vmatprep.subr.mxu0 0.0
    %564 = vmatpush1.xpose.msra.mxu0 0.0
    %565 = vmatprep.subr.mxu0 0.0
    %566 = vmatpush1.xpose.msra.mxu0 0.0
    %567 = vmatprep.subr.mxu0 0.0
    %568 = vmatpush1.xpose.msra.mxu0 0.0
    %569 = vmatprep.subr.mxu0 0.0
    %570 = vmatpush1.xpose.msra.mxu0 0.0
    %571 = vmatprep.subr.mxu0 0.0
    %572 = vmatpush1.xpose.msra.mxu0 0.0
    %573 = vmatprep.subr.mxu0 0.0
    %574 = vmatpush1.xpose.msra.mxu0 0.0
    %575 = vmatprep.subr.mxu0 0.0
    %576 = vmatpush1.xpose.msra.mxu0 0.0
    %577 = vmatprep.subr.mxu0 0.0
    %578 = vmatpush1.xpose.msra.mxu0 0.0
    %579 = vmatprep.subr.mxu0 0.0
    %580 = vmatpush1.xpose.msra.mxu0 0.0
    %581 = vmatprep.subr.mxu0 0.0
    %582 = vmatpush1.xpose.msra.mxu0 0.0
    %583 = vmatprep.subr.mxu0 0.0
    %584 = vmatpush1.xpose.msra.mxu0 0.0
    %585 = vmatprep.subr.mxu0 0.0
    %586 = vmatpush1.xpose.msra.mxu0 0.0
    %587 = vmatprep.subr.mxu0 0.0
    %588 = vmatpush1.xpose.msra.mxu0 0.0
    %589 = vmatprep.subr.mxu0 0.0
    %590 = vmatpush1.xpose.msra.mxu0 0.0
    %591 = vmatprep.subr.mxu0 0.0
    %592 = vmatpush1.xpose.msra.mxu0 0.0
    %593 = vmatprep.subr.mxu0 0.0
    %594 = vmatpush1.xpose.msra.mxu0 0.0
    %595 = vmatprep.subr.mxu0 0.0
    %596 = vmatpush1.xpose.msra.mxu0 0.0
    %597 = vmatprep.subr.mxu0 0.0
    %598 = vmatpush1.xpose.msra.mxu0 0.0
    %599 = vmatprep.subr.mxu0 0.0
    %600 = vmatpush1.xpose.msra.mxu0 0.0
    %601 = vmatprep.subr.mxu0 0.0
    %602 = vmatpush1.xpose.msra.mxu0 0.0
    %603 = vmatprep.subr.mxu0 0.0
    %604 = vmatpush1.xpose.msra.mxu0 0.0
    %605 = vmatprep.subr.mxu0 0.0
    %606 = vmatpush1.xpose.msra.mxu0 0.0
    %607 = vmatprep.subr.mxu0 0.0
    %608 = vmatpush1.xpose.msra.mxu0 0.0
    %609 = vmatprep.mubr.f32.mxu0 0.0
    %610 = vmatmul.mubr.f32.gmra.mrb[0].mxu0 %v541
    %v611 = vpop.f32.mrb[0].mxu0
    %v612 = vadd.f32 0.0, %v611
    %v613 = vpop.f32.mrb[0].mxu0
    %614 = vdwg.mxu0
    %v615 = vsel %vm199, %v612, -inf
    %616 = vmax.xlane.f32.xlu0 %v615
    %v617 = vpop.xlane.xlu0 %616
    %v618 = vsub.f32 %v612, %v617
    %v619 = vmul.f32 %v618, 1.442695
    %v620 = vpow.pop %v619
    %v621 = vsel %vm199, %v620, 0.0
    %622 = vadd.xlane.f32.xlu0 %v621
    %v623 = vpop.xlane.xlu0 %622
    %v624 = vrcp.pop %v623
    %v625 = vmul.f32 %v620, %v624
    %626 = vrot.lane.b32.xlu0 %v191, 80
    %v627 = vpop.permute.xlu0 %626
    %v630 = vsel %vm199, %v625, 0
    %632 = vmatprep.subr.mxu0 0.0
    %633 = vmatpush1.msra.mxu0 %v627
    %634 = vmatprep.subr.mxu0 0.0
    %635 = vmatpush1.msra.mxu0 0.0
    %636 = vmatprep.subr.mxu0 0.0
    %637 = vmatpush1.msra.mxu0 0.0
    %638 = vmatprep.subr.mxu0 0.0
    %639 = vmatpush1.msra.mxu0 0.0
    %640 = vmatprep.subr.mxu0 0.0
    %641 = vmatpush1.msra.mxu0 0.0
    %642 = vmatprep.subr.mxu0 0.0
    %643 = vmatpush1.msra.mxu0 0.0
    %644 = vmatprep.subr.mxu0 0.0
    %645 = vmatpush1.msra.mxu0 0.0
    %646 = vmatprep.subr.mxu0 0.0
    %647 = vmatpush1.msra.mxu0 0.0
    %648 = vmatprep.subr.mxu0 0.0
    %649 = vmatpush1.msra.mxu0 0.0
    %650 = vmatprep.subr.mxu0 0.0
    %651 = vmatpush1.msra.mxu0 0.0
    %652 = vmatprep.subr.mxu0 0.0
    %653 = vmatpush1.msra.mxu0 0.0
    %654 = vmatprep.subr.mxu0 0.0
    %655 = vmatpush1.msra.mxu0 0.0
    %656 = vmatprep.subr.mxu0 0.0
    %657 = vmatpush1.msra.mxu0 0.0
    %658 = vmatprep.subr.mxu0 0.0
    %659 = vmatpush1.msra.mxu0 0.0
    %660 = vmatprep.subr.mxu0 0.0
    %661 = vmatpush1.msra.mxu0 0.0
    %662 = vmatprep.subr.mxu0 0.0
    %663 = vmatpush1.msra.mxu0 0.0
    %664 = vmatprep.subr.mxu0 0.0
    %665 = vmatpush1.msra.mxu0 0.0
    %666 = vmatprep.subr.mxu0 0.0
    %667 = vmatpush1.msra.mxu0 0.0
    %668 = vmatprep.subr.mxu0 0.0
    %669 = vmatpush1.msra.mxu0 0.0
    %670 = vmatprep.subr.mxu0 0.0
    %671 = vmatpush1.msra.mxu0 0.0
    %672 = vmatprep.subr.mxu0 0.0
    %673 = vmatpush1.msra.mxu0 0.0
    %674 = vmatprep.subr.mxu0 0.0
    %675 = vmatpush1.msra.mxu0 0.0
    %676 = vmatprep.subr.mxu0 0.0
    %677 = vmatpush1.msra.mxu0 0.0
    %678 = vmatprep.subr.mxu0 0.0
    %679 = vmatpush1.msra.mxu0 0.0
    %680 = vmatprep.subr.mxu0 0.0
    %681 = vmatpush1.msra.mxu0 0.0
    %682 = vmatprep.subr.mxu0 0.0
    %683 = vmatpush1.msra.mxu0 0.0
    %684 = vmatprep.subr.mxu0 0.0
    %685 = vmatpush1.msra.mxu0 0.0
    %686 = vmatprep.subr.mxu0 0.0
    %687 = vmatpush1.msra.mxu0 0.0
    %688 = vmatprep.subr.mxu0 0.0
    %689 = vmatpush1.msra.mxu0 0.0
    %690 = vmatprep.subr.mxu0 0.0
    %691 = vmatpush1.msra.mxu0 0.0
    %692 = vmatprep.subr.mxu0 0.0
    %693 = vmatpush1.msra.mxu0 0.0
    %694 = vmatprep.subr.mxu0 0.0
    %695 = vmatpush1.msra.mxu0 0.0
    %696 = vmatprep.mubr.f32.mxu0 0.0
    %697 = vmatmul.mubr.f32.gmra.mrb[0].mxu0 %v630
    %v698 = vpop.f32.mrb[0].mxu0
    %v699 = vadd.f32 0.0, %v698
    %v700 = vpop.f32.mrb[0].mxu0
    %701 = vdwg.mxu0
    %703 = vrot.lane.b32.xlu0 %v699, 16
    %v704 = vpop.permute.xlu0 %703
    %v706 = vadd.f32 %v109, %v704
    %vm707 = vcmask 195712
    %708 = vst.msk [vmem:[#allocation2] sm:$0xff] %vm707, %v706
    %709 = vrot.lane.b32.xlu0 %v109, 104
    %v710 = vpop.permute.xlu0 %709
    %711 = vrot.lane.b32.xlu0 %v191, 104
    %v712 = vpop.permute.xlu0 %711
    %v713 = vsel %vm199, %v710, 0
    %v715 = vsel %vm199, %v712, 0
    %717 = vmatprep.subr.mxu0 0.0
    %718 = vmatpush1.xpose.msra.mxu0 %v715
    %719 = vmatprep.subr.mxu0 0.0
    %720 = vmatpush1.xpose.msra.mxu0 0.0
    %721 = vmatprep.subr.mxu0 0.0
    %722 = vmatpush1.xpose.msra.mxu0 0.0
    %723 = vmatprep.subr.mxu0 0.0
    %724 = vmatpush1.xpose.msra.mxu0 0.0
    %725 = vmatprep.subr.mxu0 0.0
    %726 = vmatpush1.xpose.msra.mxu0 0.0
    %727 = vmatprep.subr.mxu0 0.0
    %728 = vmatpush1.xpose.msra.mxu0 0.0
    %729 = vmatprep.subr.mxu0 0.0
    %730 = vmatpush1.xpose.msra.mxu0 0.0
    %731 = vmatprep.subr.mxu0 0.0
    %732 = vmatpush1.xpose.msra.mxu0 0.0
    %733 = vmatprep.subr.mxu0 0.0
    %734 = vmatpush1.xpose.msra.mxu0 0.0
    %735 = vmatprep.subr.mxu0 0.0
    %736 = vmatpush1.xpose.msra.mxu0 0.0
    %737 = vmatprep.subr.mxu0 0.0
    %738 = vmatpush1.xpose.msra.mxu0 0.0
    %739 = vmatprep.subr.mxu0 0.0
    %740 = vmatpush1.xpose.msra.mxu0 0.0
    %741 = vmatprep.subr.mxu0 0.0
    %742 = vmatpush1.xpose.msra.mxu0 0.0
    %743 = vmatprep.subr.mxu0 0.0
    %744 = vmatpush1.xpose.msra.mxu0 0.0
    %745 = vmatprep.subr.mxu0 0.0
    %746 = vmatpush1.xpose.msra.mxu0 0.0
    %747 = vmatprep.subr.mxu0 0.0
    %748 = vmatpush1.xpose.msra.mxu0 0.0
    %749 = vmatprep.subr.mxu0 0.0
    %750 = vmatpush1.xpose.msra.mxu0 0.0
    %751 = vmatprep.subr.mxu0 0.0
    %752 = vmatpush1.xpose.msra.mxu0 0.0
    %753 = vmatprep.subr.mxu0 0.0
    %754 = vmatpush1.xpose.msra.mxu0 0.0
    %755 = vmatprep.subr.mxu0 0.0
    %756 = vmatpush1.xpose.msra.mxu0 0.0
    %757 = vmatprep.subr.mxu0 0.0
    %758 = vmatpush1.xpose.msra.mxu0 0.0
    %759 = vmatprep.subr.mxu0 0.0
    %760 = vmatpush1.xpose.msra.mxu0 0.0
    %761 = vmatprep.subr.mxu0 0.0
    %762 = vmatpush1.xpose.msra.mxu0 0.0
    %763 = vmatprep.subr.mxu0 0.0
    %764 = vmatpush1.xpose.msra.mxu0 0.0
    %765 = vmatprep.subr.mxu0 0.0
    %766 = vmatpush1.xpose.msra.mxu0 0.0
    %767 = vmatprep.subr.mxu0 0.0
    %768 = vmatpush1.xpose.msra.mxu0 0.0
    %769 = vmatprep.subr.mxu0 0.0
    %770 = vmatpush1.xpose.msra.mxu0 0.0
    %771 = vmatprep.subr.mxu0 0.0
    %772 = vmatpush1.xpose.msra.mxu0 0.0
    %773 = vmatprep.subr.mxu0 0.0
    %774 = vmatpush1.xpose.msra.mxu0 0.0
    %775 = vmatprep.subr.mxu0 0.0
    %776 = vmatpush1.xpose.msra.mxu0 0.0
    %777 = vmatprep.subr.mxu0 0.0
    %778 = vmatpush1.xpose.msra.mxu0 0.0
    %779 = vmatprep.subr.mxu0 0.0
    %780 = vmatpush1.xpose.msra.mxu0 0.0
    %781 = vmatprep.mubr.f32.mxu0 0.0
    %782 = vmatmul.mubr.f32.gmra.mrb[0].mxu0 %v713
    %v783 = vpop.f32.mrb[0].mxu0
    %v784 = vadd.f32 0.0, %v783
    %v785 = vpop.f32.mrb[0].mxu0
    %786 = vdwg.mxu0
    %v787 = vsel %vm199, %v784, -inf
    %788 = vmax.xlane.f32.xlu0 %v787
    %v789 = vpop.xlane.xlu0 %788
    %v790 = vsub.f32 %v784, %v789
    %v791 = vmul.f32 %v790, 1.442695
    %v792 = vpow.pop %v791
    %v793 = vsel %vm199, %v792, 0.0
    %794 = vadd.xlane.f32.xlu0 %v793
    %v795 = vpop.xlane.xlu0 %794
    %v796 = vrcp.pop %v795
    %v797 = vmul.f32 %v792, %v796
    %798 = vrot.lane.b32.xlu0 %v191, 72
    %v799 = vpop.permute.xlu0 %798
    %v802 = vsel %vm199, %v797, 0
    %804 = vmatprep.subr.mxu0 0.0
    %805 = vmatpush1.msra.mxu0 %v799
    %806 = vmatprep.subr.mxu0 0.0
    %807 = vmatpush1.msra.mxu0 0.0
    %808 = vmatprep.subr.mxu0 0.0
    %809 = vmatpush1.msra.mxu0 0.0
    %810 = vmatprep.subr.mxu0 0.0
    %811 = vmatpush1.msra.mxu0 0.0
    %812 = vmatprep.subr.mxu0 0.0
    %813 = vmatpush1.msra.mxu0 0.0
    %814 = vmatprep.subr.mxu0 0.0
    %815 = vmatpush1.msra.mxu0 0.0
    %816 = vmatprep.subr.mxu0 0.0
    %817 = vmatpush1.msra.mxu0 0.0
    %818 = vmatprep.subr.mxu0 0.0
    %819 = vmatpush1.msra.mxu0 0.0
    %820 = vmatprep.subr.mxu0 0.0
    %821 = vmatpush1.msra.mxu0 0.0
    %822 = vmatprep.subr.mxu0 0.0
    %823 = vmatpush1.msra.mxu0 0.0
    %824 = vmatprep.subr.mxu0 0.0
    %825 = vmatpush1.msra.mxu0 0.0
    %826 = vmatprep.subr.mxu0 0.0
    %827 = vmatpush1.msra.mxu0 0.0
    %828 = vmatprep.subr.mxu0 0.0
    %829 = vmatpush1.msra.mxu0 0.0
    %830 = vmatprep.subr.mxu0 0.0
    %831 = vmatpush1.msra.mxu0 0.0
    %832 = vmatprep.subr.mxu0 0.0
    %833 = vmatpush1.msra.mxu0 0.0
    %834 = vmatprep.subr.mxu0 0.0
    %835 = vmatpush1.msra.mxu0 0.0
    %836 = vmatprep.subr.mxu0 0.0
    %837 = vmatpush1.msra.mxu0 0.0
    %838 = vmatprep.subr.mxu0 0.0
    %839 = vmatpush1.msra.mxu0 0.0
    %840 = vmatprep.subr.mxu0 0.0
    %841 = vmatpush1.msra.mxu0 0.0
    %842 = vmatprep.subr.mxu0 0.0
    %843 = vmatpush1.msra.mxu0 0.0
    %844 = vmatprep.subr.mxu0 0.0
    %845 = vmatpush1.msra.mxu0 0.0
    %846 = vmatprep.subr.mxu0 0.0
    %847 = vmatpush1.msra.mxu0 0.0
    %848 = vmatprep.subr.mxu0 0.0
    %849 = vmatpush1.msra.mxu0 0.0
    %850 = vmatprep.subr.mxu0 0.0
    %851 = vmatpush1.msra.mxu0 0.0
    %852 = vmatprep.subr.mxu0 0.0
    %853 = vmatpush1.msra.mxu0 0.0
    %854 = vmatprep.subr.mxu0 0.0
    %855 = vmatpush1.msra.mxu0 0.0
    %856 = vmatprep.subr.mxu0 0.0
    %857 = vmatpush1.msra.mxu0 0.0
    %858 = vmatprep.subr.mxu0 0.0
    %859 = vmatpush1.msra.mxu0 0.0
    %860 = vmatprep.subr.mxu0 0.0
    %861 = vmatpush1.msra.mxu0 0.0
    %862 = vmatprep.subr.mxu0 0.0
    %863 = vmatpush1.msra.mxu0 0.0
    %864 = vmatprep.subr.mxu0 0.0
    %865 = vmatpush1.msra.mxu0 0.0
    %866 = vmatprep.subr.mxu0 0.0
    %867 = vmatpush1.msra.mxu0 0.0
    %868 = vmatprep.mubr.f32.mxu0 0.0
    %869 = vmatmul.mubr.f32.gmra.mrb[0].mxu0 %v802
    %v870 = vpop.f32.mrb[0].mxu0
    %v871 = vadd.f32 0.0, %v870
    %v872 = vpop.f32.mrb[0].mxu0
    %873 = vdwg.mxu0
    %875 = vrot.lane.b32.xlu0 %v871, 24
    %v876 = vpop.permute.xlu0 %875
    %v878 = vadd.f32 %v109, %v876
    %vm879 = vcmask 261312
    %880 = vst.msk [vmem:[#allocation2] sm:$0xff] %vm879, %v878
    %v882 = vsel %vm199, %v196, 0
    %884 = vmatprep.subr.mxu0 0.0
    %885 = vmatpush1.xpose.msra.mxu0 %v882
    %886 = vmatprep.subr.mxu0 0.0
    %887 = vmatpush1.xpose.msra.mxu0 0.0
    %888 = vmatprep.subr.mxu0 0.0
    %889 = vmatpush1.xpose.msra.mxu0 0.0
    %890 = vmatprep.subr.mxu0 0.0
    %891 = vmatpush1.xpose.msra.mxu0 0.0
    %892 = vmatprep.subr.mxu0 0.0
    %893 = vmatpush1.xpose.msra.mxu0 0.0
    %894 = vmatprep.subr.mxu0 0.0
    %895 = vmatpush1.xpose.msra.mxu0 0.0
    %896 = vmatprep.subr.mxu0 0.0
    %897 = vmatpush1.xpose.msra.mxu0 0.0
    %898 = vmatprep.subr.mxu0 0.0
    %899 = vmatpush1.xpose.msra.mxu0 0.0
    %900 = vmatprep.subr.mxu0 0.0
    %901 = vmatpush1.xpose.msra.mxu0 0.0
    %902 = vmatprep.subr.mxu0 0.0
    %903 = vmatpush1.xpose.msra.mxu0 0.0
    %904 = vmatprep.subr.mxu0 0.0
    %905 = vmatpush1.xpose.msra.mxu0 0.0
    %906 = vmatprep.subr.mxu0 0.0
    %907 = vmatpush1.xpose.msra.mxu0 0.0
    %908 = vmatprep.subr.mxu0 0.0
    %909 = vmatpush1.xpose.msra.mxu0 0.0
    %910 = vmatprep.subr.mxu0 0.0
    %911 = vmatpush1.xpose.msra.mxu0 0.0
    %912 = vmatprep.subr.mxu0 0.0
    %913 = vmatpush1.xpose.msra.mxu0 0.0
    %914 = vmatprep.subr.mxu0 0.0
    %915 = vmatpush1.xpose.msra.mxu0 0.0
    %916 = vmatprep.subr.mxu0 0.0
    %917 = vmatpush1.xpose.msra.mxu0 0.0
    %918 = vmatprep.subr.mxu0 0.0
    %919 = vmatpush1.xpose.msra.mxu0 0.0
    %920 = vmatprep.subr.mxu0 0.0
    %921 = vmatpush1.xpose.msra.mxu0 0.0
    %922 = vmatprep.subr.mxu0 0.0
    %923 = vmatpush1.xpose.msra.mxu0 0.0
    %924 = vmatprep.subr.mxu0 0.0
    %925 = vmatpush1.xpose.msra.mxu0 0.0
    %926 = vmatprep.subr.mxu0 0.0
    %927 = vmatpush1.xpose.msra.mxu0 0.0
    %928 = vmatprep.subr.mxu0 0.0
    %929 = vmatpush1.xpose.msra.mxu0 0.0
    %930 = vmatprep.subr.mxu0 0.0
    %931 = vmatpush1.xpose.msra.mxu0 0.0
    %932 = vmatprep.subr.mxu0 0.0
    %933 = vmatpush1.xpose.msra.mxu0 0.0
    %934 = vmatprep.subr.mxu0 0.0
    %935 = vmatpush1.xpose.msra.mxu0 0.0
    %936 = vmatprep.subr.mxu0 0.0
    %937 = vmatpush1.xpose.msra.mxu0 0.0
    %938 = vmatprep.subr.mxu0 0.0
    %939 = vmatpush1.xpose.msra.mxu0 0.0
    %940 = vmatprep.subr.mxu0 0.0
    %941 = vmatpush1.xpose.msra.mxu0 0.0
    %942 = vmatprep.subr.mxu0 0.0
    %943 = vmatpush1.xpose.msra.mxu0 0.0
    %944 = vmatprep.subr.mxu0 0.0
    %945 = vmatpush1.xpose.msra.mxu0 0.0
    %946 = vmatprep.subr.mxu0 0.0
    %947 = vmatpush1.xpose.msra.mxu0 0.0
    %948 = vmatprep.mubr.f32.mxu0 0.0
    %949 = vmatmul.mubr.f32.gmra.mrb[0].mxu0 %v201
    %v950 = vpop.f32.mrb[0].mxu0
    %v951 = vadd.f32 0.0, %v950
    %v952 = vpop.f32.mrb[0].mxu0
    %953 = vdwg.mxu0
    %v954 = vsel %vm199, %v951, -inf
    %955 = vmax.xlane.f32.xlu0 %v954
    %v956 = vpop.xlane.xlu0 %955
    %v957 = vsub.f32 %v951, %v956
    %v958 = vmul.f32 %v957, 1.442695
    %v959 = vpow.pop %v958
    %v960 = vsel %vm199, %v959, 0.0
    %961 = vadd.xlane.f32.xlu0 %v960
    %v962 = vpop.xlane.xlu0 %961
    %v963 = vrcp.pop %v962
    %v964 = vmul.f32 %v959, %v963
    %965 = vrot.lane.b32.xlu0 %v196, 96
    %v966 = vpop.permute.xlu0 %965
    %v969 = vsel %vm199, %v964, 0
    %971 = vmatprep.subr.mxu0 0.0
    %972 = vmatpush1.msra.mxu0 %v966
    %973 = vmatprep.subr.mxu0 0.0
    %974 = vmatpush1.msra.mxu0 0.0
    %975 = vmatprep.subr.mxu0 0.0
    %976 = vmatpush1.msra.mxu0 0.0
    %977 = vmatprep.subr.mxu0 0.0
    %978 = vmatpush1.msra.mxu0 0.0
    %979 = vmatprep.subr.mxu0 0.0
    %980 = vmatpush1.msra.mxu0 0.0
    %981 = vmatprep.subr.mxu0 0.0
    %982 = vmatpush1.msra.mxu0 0.0
    %983 = vmatprep.subr.mxu0 0.0
    %984 = vmatpush1.msra.mxu0 0.0
    %985 = vmatprep.subr.mxu0 0.0
    %986 = vmatpush1.msra.mxu0 0.0
    %987 = vmatprep.subr.mxu0 0.0
    %988 = vmatpush1.msra.mxu0 0.0
    %989 = vmatprep.subr.mxu0 0.0
    %990 = vmatpush1.msra.mxu0 0.0
    %991 = vmatprep.subr.mxu0 0.0
    %992 = vmatpush1.msra.mxu0 0.0
    %993 = vmatprep.subr.mxu0 0.0
    %994 = vmatpush1.msra.mxu0 0.0
    %995 = vmatprep.subr.mxu0 0.0
    %996 = vmatpush1.msra.mxu0 0.0
    %997 = vmatprep.subr.mxu0 0.0
    %998 = vmatpush1.msra.mxu0 0.0
    %999 = vmatprep.subr.mxu0 0.0
    %1000 = vmatpush1.msra.mxu0 0.0
    %1001 = vmatprep.subr.mxu0 0.0
    %1002 = vmatpush1.msra.mxu0 0.0
    %1003 = vmatprep.subr.mxu0 0.0
    %1004 = vmatpush1.msra.mxu0 0.0
    %1005 = vmatprep.subr.mxu0 0.0
    %1006 = vmatpush1.msra.mxu0 0.0
    %1007 = vmatprep.subr.mxu0 0.0
    %1008 = vmatpush1.msra.mxu0 0.0
    %1009 = vmatprep.subr.mxu0 0.0
    %1010 = vmatpush1.msra.mxu0 0.0
    %1011 = vmatprep.subr.mxu0 0.0
    %1012 = vmatpush1.msra.mxu0 0.0
    %1013 = vmatprep.subr.mxu0 0.0
    %1014 = vmatpush1.msra.mxu0 0.0
    %1015 = vmatprep.subr.mxu0 0.0
    %1016 = vmatpush1.msra.mxu0 0.0
    %1017 = vmatprep.subr.mxu0 0.0
    %1018 = vmatpush1.msra.mxu0 0.0
    %1019 = vmatprep.subr.mxu0 0.0
    %1020 = vmatpush1.msra.mxu0 0.0
    %1021 = vmatprep.subr.mxu0 0.0
    %1022 = vmatpush1.msra.mxu0 0.0
    %1023 = vmatprep.subr.mxu0 0.0
    %1024 = vmatpush1.msra.mxu0 0.0
    %1025 = vmatprep.subr.mxu0 0.0
    %1026 = vmatpush1.msra.mxu0 0.0
    %1027 = vmatprep.subr.mxu0 0.0
    %1028 = vmatpush1.msra.mxu0 0.0
    %1029 = vmatprep.subr.mxu0 0.0
    %1030 = vmatpush1.msra.mxu0 0.0
    %1031 = vmatprep.subr.mxu0 0.0
    %1032 = vmatpush1.msra.mxu0 0.0
    %1033 = vmatprep.subr.mxu0 0.0
    %1034 = vmatpush1.msra.mxu0 0.0
    %1035 = vmatprep.mubr.f32.mxu0 0.0
    %1036 = vmatmul.mubr.f32.gmra.mrb[0].mxu0 %v969
    %v1037 = vpop.f32.mrb[0].mxu0
    %v1038 = vadd.f32 0.0, %v1037
    %v1039 = vpop.f32.mrb[0].mxu0
    %1040 = vdwg.mxu0
    %v1041 = vadd.f32 %v109, %v1038
    %1042 = vst.msk [vmem:[#allocation2 + $0x8] sm:$0xff] %vm199, %v1041
    %1043 = vrot.lane.b32.xlu0 %v196, 120
    %v1044 = vpop.permute.xlu0 %1043
    %v1045 = vsel %vm199, %v1044, 0
    %1047 = vmatprep.subr.mxu0 0.0
    %1048 = vmatpush1.xpose.msra.mxu0 %v1045
    %1049 = vmatprep.subr.mxu0 0.0
    %1050 = vmatpush1.xpose.msra.mxu0 0.0
    %1051 = vmatprep.subr.mxu0 0.0
    %1052 = vmatpush1.xpose.msra.mxu0 0.0
    %1053 = vmatprep.subr.mxu0 0.0
    %1054 = vmatpush1.xpose.msra.mxu0 0.0
    %1055 = vmatprep.subr.mxu0 0.0
    %1056 = vmatpush1.xpose.msra.mxu0 0.0
    %1057 = vmatprep.subr.mxu0 0.0
    %1058 = vmatpush1.xpose.msra.mxu0 0.0
    %1059 = vmatprep.subr.mxu0 0.0
    %1060 = vmatpush1.xpose.msra.mxu0 0.0
    %1061 = vmatprep.subr.mxu0 0.0
    %1062 = vmatpush1.xpose.msra.mxu0 0.0
    %1063 = vmatprep.subr.mxu0 0.0
    %1064 = vmatpush1.xpose.msra.mxu0 0.0
    %1065 = vmatprep.subr.mxu0 0.0
    %1066 = vmatpush1.xpose.msra.mxu0 0.0
    %1067 = vmatprep.subr.mxu0 0.0
    %1068 = vmatpush1.xpose.msra.mxu0 0.0
    %1069 = vmatprep.subr.mxu0 0.0
    %1070 = vmatpush1.xpose.msra.mxu0 0.0
    %1071 = vmatprep.subr.mxu0 0.0
    %1072 = vmatpush1.xpose.msra.mxu0 0.0
    %1073 = vmatprep.subr.mxu0 0.0
    %1074 = vmatpush1.xpose.msra.mxu0 0.0
    %1075 = vmatprep.subr.mxu0 0.0
    %1076 = vmatpush1.xpose.msra.mxu0 0.0
    %1077 = vmatprep.subr.mxu0 0.0
    %1078 = vmatpush1.xpose.msra.mxu0 0.0
    %1079 = vmatprep.subr.mxu0 0.0
    %1080 = vmatpush1.xpose.msra.mxu0 0.0
    %1081 = vmatprep.subr.mxu0 0.0
    %1082 = vmatpush1.xpose.msra.mxu0 0.0
    %1083 = vmatprep.subr.mxu0 0.0
    %1084 = vmatpush1.xpose.msra.mxu0 0.0
    %1085 = vmatprep.subr.mxu0 0.0
    %1086 = vmatpush1.xpose.msra.mxu0 0.0
    %1087 = vmatprep.subr.mxu0 0.0
    %1088 = vmatpush1.xpose.msra.mxu0 0.0
    %1089 = vmatprep.subr.mxu0 0.0
    %1090 = vmatpush1.xpose.msra.mxu0 0.0
    %1091 = vmatprep.subr.mxu0 0.0
    %1092 = vmatpush1.xpose.msra.mxu0 0.0
    %1093 = vmatprep.subr.mxu0 0.0
    %1094 = vmatpush1.xpose.msra.mxu0 0.0
    %1095 = vmatprep.subr.mxu0 0.0
    %1096 = vmatpush1.xpose.msra.mxu0 0.0
    %1097 = vmatprep.subr.mxu0 0.0
    %1098 = vmatpush1.xpose.msra.mxu0 0.0
    %1099 = vmatprep.subr.mxu0 0.0
    %1100 = vmatpush1.xpose.msra.mxu0 0.0
    %1101 = vmatprep.subr.mxu0 0.0
    %1102 = vmatpush1.xpose.msra.mxu0 0.0
    %1103 = vmatprep.subr.mxu0 0.0
    %1104 = vmatpush1.xpose.msra.mxu0 0.0
    %1105 = vmatprep.subr.mxu0 0.0
    %1106 = vmatpush1.xpose.msra.mxu0 0.0
    %1107 = vmatprep.subr.mxu0 0.0
    %1108 = vmatpush1.xpose.msra.mxu0 0.0
    %1109 = vmatprep.subr.mxu0 0.0
    %1110 = vmatpush1.xpose.msra.mxu0 0.0
    %1111 = vmatprep.mubr.f32.mxu0 0.0
    %1112 = vmatmul.mubr.f32.gmra.mrb[0].mxu0 %v369
    %v1113 = vpop.f32.mrb[0].mxu0
    %v1114 = vadd.f32 0.0, %v1113
    %v1115 = vpop.f32.mrb[0].mxu0
    %1116 = vdwg.mxu0
    %v1117 = vsel %vm199, %v1114, -inf
    %1118 = vmax.xlane.f32.xlu0 %v1117
    %v1119 = vpop.xlane.xlu0 %1118
    %v1120 = vsub.f32 %v1114, %v1119
    %v1121 = vmul.f32 %v1120, 1.442695
    %v1122 = vpow.pop %v1121
    %v1123 = vsel %vm199, %v1122, 0.0
    %1124 = vadd.xlane.f32.xlu0 %v1123
    %v1125 = vpop.xlane.xlu0 %1124
    %v1126 = vrcp.pop %v1125
    %v1127 = vmul.f32 %v1122, %v1126
    %1128 = vrot.lane.b32.xlu0 %v196, 88
    %v1129 = vpop.permute.xlu0 %1128
    %v1132 = vsel %vm199, %v1127, 0
    %1134 = vmatprep.subr.mxu0 0.0
    %1135 = vmatpush1.msra.mxu0 %v1129
    %1136 = vmatprep.subr.mxu0 0.0
    %1137 = vmatpush1.msra.mxu0 0.0
    %1138 = vmatprep.subr.mxu0 0.0
    %1139 = vmatpush1.msra.mxu0 0.0
    %1140 = vmatprep.subr.mxu0 0.0
    %1141 = vmatpush1.msra.mxu0 0.0
    %1142 = vmatprep.subr.mxu0 0.0
    %1143 = vmatpush1.msra.mxu0 0.0
    %1144 = vmatprep.subr.mxu0 0.0
    %1145 = vmatpush1.msra.mxu0 0.0
    %1146 = vmatprep.subr.mxu0 0.0
    %1147 = vmatpush1.msra.mxu0 0.0
    %1148 = vmatprep.subr.mxu0 0.0
    %1149 = vmatpush1.msra.mxu0 0.0
    %1150 = vmatprep.subr.mxu0 0.0
    %1151 = vmatpush1.msra.mxu0 0.0
    %1152 = vmatprep.subr.mxu0 0.0
    %1153 = vmatpush1.msra.mxu0 0.0
    %1154 = vmatprep.subr.mxu0 0.0
    %1155 = vmatpush1.msra.mxu0 0.0
    %1156 = vmatprep.subr.mxu0 0.0
    %1157 = vmatpush1.msra.mxu0 0.0
    %1158 = vmatprep.subr.mxu0 0.0
    %1159 = vmatpush1.msra.mxu0 0.0
    %1160 = vmatprep.subr.mxu0 0.0
    %1161 = vmatpush1.msra.mxu0 0.0
    %1162 = vmatprep.subr.mxu0 0.0
    %1163 = vmatpush1.msra.mxu0 0.0
    %1164 = vmatprep.subr.mxu0 0.0
    %1165 = vmatpush1.msra.mxu0 0.0
    %1166 = vmatprep.subr.mxu0 0.0
    %1167 = vmatpush1.msra.mxu0 0.0
    %1168 = vmatprep.subr.mxu0 0.0
    %1169 = vmatpush1.msra.mxu0 0.0
    %1170 = vmatprep.subr.mxu0 0.0
    %1171 = vmatpush1.msra.mxu0 0.0
    %1172 = vmatprep.subr.mxu0 0.0
    %1173 = vmatpush1.msra.mxu0 0.0
    %1174 = vmatprep.subr.mxu0 0.0
    %1175 = vmatpush1.msra.mxu0 0.0
    %1176 = vmatprep.subr.mxu0 0.0
    %1177 = vmatpush1.msra.mxu0 0.0
    %1178 = vmatprep.subr.mxu0 0.0
    %1179 = vmatpush1.msra.mxu0 0.0
    %1180 = vmatprep.subr.mxu0 0.0
    %1181 = vmatpush1.msra.mxu0 0.0
    %1182 = vmatprep.subr.mxu0 0.0
    %1183 = vmatpush1.msra.mxu0 0.0
    %1184 = vmatprep.subr.mxu0 0.0
    %1185 = vmatpush1.msra.mxu0 0.0
    %1186 = vmatprep.subr.mxu0 0.0
    %1187 = vmatpush1.msra.mxu0 0.0
    %1188 = vmatprep.subr.mxu0 0.0
    %1189 = vmatpush1.msra.mxu0 0.0
    %1190 = vmatprep.subr.mxu0 0.0
    %1191 = vmatpush1.msra.mxu0 0.0
    %1192 = vmatprep.subr.mxu0 0.0
    %1193 = vmatpush1.msra.mxu0 0.0
    %1194 = vmatprep.subr.mxu0 0.0
    %1195 = vmatpush1.msra.mxu0 0.0
    %1196 = vmatprep.subr.mxu0 0.0
    %1197 = vmatpush1.msra.mxu0 0.0
    %1198 = vmatprep.mubr.f32.mxu0 0.0
    %1199 = vmatmul.mubr.f32.gmra.mrb[0].mxu0 %v1132
    %v1200 = vpop.f32.mrb[0].mxu0
    %v1201 = vadd.f32 0.0, %v1200
    %v1202 = vpop.f32.mrb[0].mxu0
    %1203 = vdwg.mxu0
    %1205 = vrot.lane.b32.xlu0 %v1201, 8
    %v1206 = vpop.permute.xlu0 %1205
    %v1208 = vadd.f32 %v109, %v1206
    %1209 = vst.msk [vmem:[#allocation2 + $0x8] sm:$0xff] %vm535, %v1208
    %1210 = vrot.lane.b32.xlu0 %v196, 112
    %v1211 = vpop.permute.xlu0 %1210
    %v1212 = vsel %vm199, %v1211, 0
    %1214 = vmatprep.subr.mxu0 0.0
    %1215 = vmatpush1.xpose.msra.mxu0 %v1212
    %1216 = vmatprep.subr.mxu0 0.0
    %1217 = vmatpush1.xpose.msra.mxu0 0.0
    %1218 = vmatprep.subr.mxu0 0.0
    %1219 = vmatpush1.xpose.msra.mxu0 0.0
    %1220 = vmatprep.subr.mxu0 0.0
    %1221 = vmatpush1.xpose.msra.mxu0 0.0
    %1222 = vmatprep.subr.mxu0 0.0
    %1223 = vmatpush1.xpose.msra.mxu0 0.0
    %1224 = vmatprep.subr.mxu0 0.0
    %1225 = vmatpush1.xpose.msra.mxu0 0.0
    %1226 = vmatprep.subr.mxu0 0.0
    %1227 = vmatpush1.xpose.msra.mxu0 0.0
    %1228 = vmatprep.subr.mxu0 0.0
    %1229 = vmatpush1.xpose.msra.mxu0 0.0
    %1230 = vmatprep.subr.mxu0 0.0
    %1231 = vmatpush1.xpose.msra.mxu0 0.0
    %1232 = vmatprep.subr.mxu0 0.0
    %1233 = vmatpush1.xpose.msra.mxu0 0.0
    %1234 = vmatprep.subr.mxu0 0.0
    %1235 = vmatpush1.xpose.msra.mxu0 0.0
    %1236 = vmatprep.subr.mxu0 0.0
    %1237 = vmatpush1.xpose.msra.mxu0 0.0
    %1238 = vmatprep.subr.mxu0 0.0
    %1239 = vmatpush1.xpose.msra.mxu0 0.0
    %1240 = vmatprep.subr.mxu0 0.0
    %1241 = vmatpush1.xpose.msra.mxu0 0.0
    %1242 = vmatprep.subr.mxu0 0.0
    %1243 = vmatpush1.xpose.msra.mxu0 0.0
    %1244 = vmatprep.subr.mxu0 0.0
    %1245 = vmatpush1.xpose.msra.mxu0 0.0
    %1246 = vmatprep.subr.mxu0 0.0
    %1247 = vmatpush1.xpose.msra.mxu0 0.0
    %1248 = vmatprep.subr.mxu0 0.0
    %1249 = vmatpush1.xpose.msra.mxu0 0.0
    %1250 = vmatprep.subr.mxu0 0.0
    %1251 = vmatpush1.xpose.msra.mxu0 0.0
    %1252 = vmatprep.subr.mxu0 0.0
    %1253 = vmatpush1.xpose.msra.mxu0 0.0
    %1254 = vmatprep.subr.mxu0 0.0
    %1255 = vmatpush1.xpose.msra.mxu0 0.0
    %1256 = vmatprep.subr.mxu0 0.0
    %1257 = vmatpush1.xpose.msra.mxu0 0.0
    %1258 = vmatprep.subr.mxu0 0.0
    %1259 = vmatpush1.xpose.msra.mxu0 0.0
    %1260 = vmatprep.subr.mxu0 0.0
    %1261 = vmatpush1.xpose.msra.mxu0 0.0
    %1262 = vmatprep.subr.mxu0 0.0
    %1263 = vmatpush1.xpose.msra.mxu0 0.0
    %1264 = vmatprep.subr.mxu0 0.0
    %1265 = vmatpush1.xpose.msra.mxu0 0.0
    %1266 = vmatprep.subr.mxu0 0.0
    %1267 = vmatpush1.xpose.msra.mxu0 0.0
    %1268 = vmatprep.subr.mxu0 0.0
    %1269 = vmatpush1.xpose.msra.mxu0 0.0
    %1270 = vmatprep.subr.mxu0 0.0
    %1271 = vmatpush1.xpose.msra.mxu0 0.0
    %1272 = vmatprep.subr.mxu0 0.0
    %1273 = vmatpush1.xpose.msra.mxu0 0.0
    %1274 = vmatprep.subr.mxu0 0.0
    %1275 = vmatpush1.xpose.msra.mxu0 0.0
    %1276 = vmatprep.subr.mxu0 0.0
    %1277 = vmatpush1.xpose.msra.mxu0 0.0
    %1278 = vmatprep.mubr.f32.mxu0 0.0
    %1279 = vmatmul.mubr.f32.gmra.mrb[0].mxu0 %v541
    %v1280 = vpop.f32.mrb[0].mxu0
    %v1281 = vadd.f32 0.0, %v1280
    %v1282 = vpop.f32.mrb[0].mxu0
    %1283 = vdwg.mxu0
    %v1284 = vsel %vm199, %v1281, -inf
    %1285 = vmax.xlane.f32.xlu0 %v1284
    %v1286 = vpop.xlane.xlu0 %1285
    %v1287 = vsub.f32 %v1281, %v1286
    %v1288 = vmul.f32 %v1287, 1.442695
    %v1289 = vpow.pop %v1288
    %v1290 = vsel %vm199, %v1289, 0.0
    %1291 = vadd.xlane.f32.xlu0 %v1290
    %v1292 = vpop.xlane.xlu0 %1291
    %v1293 = vrcp.pop %v1292
    %v1294 = vmul.f32 %v1289, %v1293
    %1295 = vrot.lane.b32.xlu0 %v196, 80
    %v1296 = vpop.permute.xlu0 %1295
    %v1299 = vsel %vm199, %v1294, 0
    %1301 = vmatprep.subr.mxu0 0.0
    %1302 = vmatpush1.msra.mxu0 %v1296
    %1303 = vmatprep.subr.mxu0 0.0
    %1304 = vmatpush1.msra.mxu0 0.0
    %1305 = vmatprep.subr.mxu0 0.0
    %1306 = vmatpush1.msra.mxu0 0.0
    %1307 = vmatprep.subr.mxu0 0.0
    %1308 = vmatpush1.msra.mxu0 0.0
    %1309 = vmatprep.subr.mxu0 0.0
    %1310 = vmatpush1.msra.mxu0 0.0
    %1311 = vmatprep.subr.mxu0 0.0
    %1312 = vmatpush1.msra.mxu0 0.0
    %1313 = vmatprep.subr.mxu0 0.0
    %1314 = vmatpush1.msra.mxu0 0.0
    %1315 = vmatprep.subr.mxu0 0.0
    %1316 = vmatpush1.msra.mxu0 0.0
    %1317 = vmatprep.subr.mxu0 0.0
    %1318 = vmatpush1.msra.mxu0 0.0
    %1319 = vmatprep.subr.mxu0 0.0
    %1320 = vmatpush1.msra.mxu0 0.0
    %1321 = vmatprep.subr.mxu0 0.0
    %1322 = vmatpush1.msra.mxu0 0.0
    %1323 = vmatprep.subr.mxu0 0.0
    %1324 = vmatpush1.msra.mxu0 0.0
    %1325 = vmatprep.subr.mxu0 0.0
    %1326 = vmatpush1.msra.mxu0 0.0
    %1327 = vmatprep.subr.mxu0 0.0
    %1328 = vmatpush1.msra.mxu0 0.0
    %1329 = vmatprep.subr.mxu0 0.0
    %1330 = vmatpush1.msra.mxu0 0.0
    %1331 = vmatprep.subr.mxu0 0.0
    %1332 = vmatpush1.msra.mxu0 0.0
    %1333 = vmatprep.subr.mxu0 0.0
    %1334 = vmatpush1.msra.mxu0 0.0
    %1335 = vmatprep.subr.mxu0 0.0
    %1336 = vmatpush1.msra.mxu0 0.0
    %1337 = vmatprep.subr.mxu0 0.0
    %1338 = vmatpush1.msra.mxu0 0.0
    %1339 = vmatprep.subr.mxu0 0.0
    %1340 = vmatpush1.msra.mxu0 0.0
    %1341 = vmatprep.subr.mxu0 0.0
    %1342 = vmatpush1.msra.mxu0 0.0
    %1343 = vmatprep.subr.mxu0 0.0
    %1344 = vmatpush1.msra.mxu0 0.0
    %1345 = vmatprep.subr.mxu0 0.0
    %1346 = vmatpush1.msra.mxu0 0.0
    %1347 = vmatprep.subr.mxu0 0.0
    %1348 = vmatpush1.msra.mxu0 0.0
    %1349 = vmatprep.subr.mxu0 0.0
    %1350 = vmatpush1.msra.mxu0 0.0
    %1351 = vmatprep.subr.mxu0 0.0
    %1352 = vmatpush1.msra.mxu0 0.0
    %1353 = vmatprep.subr.mxu0 0.0
    %1354 = vmatpush1.msra.mxu0 0.0
    %1355 = vmatprep.subr.mxu0 0.0
    %1356 = vmatpush1.msra.mxu0 0.0
    %1357 = vmatprep.subr.mxu0 0.0
    %1358 = vmatpush1.msra.mxu0 0.0
    %1359 = vmatprep.subr.mxu0 0.0
    %1360 = vmatpush1.msra.mxu0 0.0
    %1361 = vmatprep.subr.mxu0 0.0
    %1362 = vmatpush1.msra.mxu0 0.0
    %1363 = vmatprep.subr.mxu0 0.0
    %1364 = vmatpush1.msra.mxu0 0.0
    %1365 = vmatprep.mubr.f32.mxu0 0.0
    %1366 = vmatmul.mubr.f32.gmra.mrb[0].mxu0 %v1299
    %v1367 = vpop.f32.mrb[0].mxu0
    %v1368 = vadd.f32 0.0, %v1367
    %v1369 = vpop.f32.mrb[0].mxu0
    %1370 = vdwg.mxu0
    %1372 = vrot.lane.b32.xlu0 %v1368, 16
    %v1373 = vpop.permute.xlu0 %1372
    %v1375 = vadd.f32 %v109, %v1373
    %1376 = vst.msk [vmem:[#allocation2 + $0x8] sm:$0xff] %vm707, %v1375
    %1377 = vrot.lane.b32.xlu0 %v196, 104
    %v1378 = vpop.permute.xlu0 %1377
    %v1379 = vsel %vm199, %v1378, 0
    %1381 = vmatprep.subr.mxu0 0.0
    %1382 = vmatpush1.xpose.msra.mxu0 %v1379
    %1383 = vmatprep.subr.mxu0 0.0
    %1384 = vmatpush1.xpose.msra.mxu0 0.0
    %1385 = vmatprep.subr.mxu0 0.0
    %1386 = vmatpush1.xpose.msra.mxu0 0.0
    %1387 = vmatprep.subr.mxu0 0.0
    %1388 = vmatpush1.xpose.msra.mxu0 0.0
    %1389 = vmatprep.subr.mxu0 0.0
    %1390 = vmatpush1.xpose.msra.mxu0 0.0
    %1391 = vmatprep.subr.mxu0 0.0
    %1392 = vmatpush1.xpose.msra.mxu0 0.0
    %1393 = vmatprep.subr.mxu0 0.0
    %1394 = vmatpush1.xpose.msra.mxu0 0.0
    %1395 = vmatprep.subr.mxu0 0.0
    %1396 = vmatpush1.xpose.msra.mxu0 0.0
    %1397 = vmatprep.subr.mxu0 0.0
    %1398 = vmatpush1.xpose.msra.mxu0 0.0
    %1399 = vmatprep.subr.mxu0 0.0
    %1400 = vmatpush1.xpose.msra.mxu0 0.0
    %1401 = vmatprep.subr.mxu0 0.0
    %1402 = vmatpush1.xpose.msra.mxu0 0.0
    %1403 = vmatprep.subr.mxu0 0.0
    %1404 = vmatpush1.xpose.msra.mxu0 0.0
    %1405 = vmatprep.subr.mxu0 0.0
    %1406 = vmatpush1.xpose.msra.mxu0 0.0
    %1407 = vmatprep.subr.mxu0 0.0
    %1408 = vmatpush1.xpose.msra.mxu0 0.0
    %1409 = vmatprep.subr.mxu0 0.0
    %1410 = vmatpush1.xpose.msra.mxu0 0.0
    %1411 = vmatprep.subr.mxu0 0.0
    %1412 = vmatpush1.xpose.msra.mxu0 0.0
    %1413 = vmatprep.subr.mxu0 0.0
    %1414 = vmatpush1.xpose.msra.mxu0 0.0
    %1415 = vmatprep.subr.mxu0 0.0
    %1416 = vmatpush1.xpose.msra.mxu0 0.0
    %1417 = vmatprep.subr.mxu0 0.0
    %1418 = vmatpush1.xpose.msra.mxu0 0.0
    %1419 = vmatprep.subr.mxu0 0.0
    %1420 = vmatpush1.xpose.msra.mxu0 0.0
    %1421 = vmatprep.subr.mxu0 0.0
    %1422 = vmatpush1.xpose.msra.mxu0 0.0
    %1423 = vmatprep.subr.mxu0 0.0
    %1424 = vmatpush1.xpose.msra.mxu0 0.0
    %1425 = vmatprep.subr.mxu0 0.0
    %1426 = vmatpush1.xpose.msra.mxu0 0.0
    %1427 = vmatprep.subr.mxu0 0.0
    %1428 = vmatpush1.xpose.msra.mxu0 0.0
    %1429 = vmatprep.subr.mxu0 0.0
    %1430 = vmatpush1.xpose.msra.mxu0 0.0
    %1431 = vmatprep.subr.mxu0 0.0
    %1432 = vmatpush1.xpose.msra.mxu0 0.0
    %1433 = vmatprep.subr.mxu0 0.0
    %1434 = vmatpush1.xpose.msra.mxu0 0.0
    %1435 = vmatprep.subr.mxu0 0.0
    %1436 = vmatpush1.xpose.msra.mxu0 0.0
    %1437 = vmatprep.subr.mxu0 0.0
    %1438 = vmatpush1.xpose.msra.mxu0 0.0
    %1439 = vmatprep.subr.mxu0 0.0
    %1440 = vmatpush1.xpose.msra.mxu0 0.0
    %1441 = vmatprep.subr.mxu0 0.0
    %1442 = vmatpush1.xpose.msra.mxu0 0.0
    %1443 = vmatprep.subr.mxu0 0.0
    %1444 = vmatpush1.xpose.msra.mxu0 0.0
    %1445 = vmatprep.mubr.f32.mxu0 0.0
    %1446 = vmatmul.mubr.f32.gmra.mrb[0].mxu0 %v713
    %v1447 = vpop.f32.mrb[0].mxu0
    %v1448 = vadd.f32 0.0, %v1447
    %v1449 = vpop.f32.mrb[0].mxu0
    %1450 = vdwg.mxu0
    %v1451 = vsel %vm199, %v1448, -inf
    %1452 = vmax.xlane.f32.xlu0 %v1451
    %v1453 = vpop.xlane.xlu0 %1452
    %v1454 = vsub.f32 %v1448, %v1453
    %v1455 = vmul.f32 %v1454, 1.442695
    %v1456 = vpow.pop %v1455
    %v1457 = vsel %vm199, %v1456, 0.0
    %1458 = vadd.xlane.f32.xlu0 %v1457
    %v1459 = vpop.xlane.xlu0 %1458
    %v1460 = vrcp.pop %v1459
    %v1461 = vmul.f32 %v1456, %v1460
    %1462 = vrot.lane.b32.xlu0 %v196, 72
    %v1463 = vpop.permute.xlu0 %1462
    %v1466 = vsel %vm199, %v1461, 0
    %1468 = vmatprep.subr.mxu0 0.0
    %1469 = vmatpush1.msra.mxu0 %v1463
    %1470 = vmatprep.subr.mxu0 0.0
    %1471 = vmatpush1.msra.mxu0 0.0
    %1472 = vmatprep.subr.mxu0 0.0
    %1473 = vmatpush1.msra.mxu0 0.0
    %1474 = vmatprep.subr.mxu0 0.0
    %1475 = vmatpush1.msra.mxu0 0.0
    %1476 = vmatprep.subr.mxu0 0.0
    %1477 = vmatpush1.msra.mxu0 0.0
    %1478 = vmatprep.subr.mxu0 0.0
    %1479 = vmatpush1.msra.mxu0 0.0
    %1480 = vmatprep.subr.mxu0 0.0
    %1481 = vmatpush1.msra.mxu0 0.0
    %1482 = vmatprep.subr.mxu0 0.0
    %1483 = vmatpush1.msra.mxu0 0.0
    %1484 = vmatprep.subr.mxu0 0.0
    %1485 = vmatpush1.msra.mxu0 0.0
    %1486 = vmatprep.subr.mxu0 0.0
    %1487 = vmatpush1.msra.mxu0 0.0
    %1488 = vmatprep.subr.mxu0 0.0
    %1489 = vmatpush1.msra.mxu0 0.0
    %1490 = vmatprep.subr.mxu0 0.0
    %1491 = vmatpush1.msra.mxu0 0.0
    %1492 = vmatprep.subr.mxu0 0.0
    %1493 = vmatpush1.msra.mxu0 0.0
    %1494 = vmatprep.subr.mxu0 0.0
    %1495 = vmatpush1.msra.mxu0 0.0
    %1496 = vmatprep.subr.mxu0 0.0
    %1497 = vmatpush1.msra.mxu0 0.0
    %1498 = vmatprep.subr.mxu0 0.0
    %1499 = vmatpush1.msra.mxu0 0.0
    %1500 = vmatprep.subr.mxu0 0.0
    %1501 = vmatpush1.msra.mxu0 0.0
    %1502 = vmatprep.subr.mxu0 0.0
    %1503 = vmatpush1.msra.mxu0 0.0
    %1504 = vmatprep.subr.mxu0 0.0
    %1505 = vmatpush1.msra.mxu0 0.0
    %1506 = vmatprep.subr.mxu0 0.0
    %1507 = vmatpush1.msra.mxu0 0.0
    %1508 = vmatprep.subr.mxu0 0.0
    %1509 = vmatpush1.msra.mxu0 0.0
    %1510 = vmatprep.subr.mxu0 0.0
    %1511 = vmatpush1.msra.mxu0 0.0
    %1512 = vmatprep.subr.mxu0 0.0
    %1513 = vmatpush1.msra.mxu0 0.0
    %1514 = vmatprep.subr.mxu0 0.0
    %1515 = vmatpush1.msra.mxu0 0.0
    %1516 = vmatprep.subr.mxu0 0.0
    %1517 = vmatpush1.msra.mxu0 0.0
    %1518 = vmatprep.subr.mxu0 0.0
    %1519 = vmatpush1.msra.mxu0 0.0
    %1520 = vmatprep.subr.mxu0 0.0
    %1521 = vmatpush1.msra.mxu0 0.0
    %1522 = vmatprep.subr.mxu0 0.0
    %1523 = vmatpush1.msra.mxu0 0.0
    %1524 = vmatprep.subr.mxu0 0.0
    %1525 = vmatpush1.msra.mxu0 0.0
    %1526 = vmatprep.subr.mxu0 0.0
    %1527 = vmatpush1.msra.mxu0 0.0
    %1528 = vmatprep.subr.mxu0 0.0
    %1529 = vmatpush1.msra.mxu0 0.0
    %1530 = vmatprep.subr.mxu0 0.0
    %1531 = vmatpush1.msra.mxu0 0.0
    %1532 = vmatprep.mubr.f32.mxu0 0.0
    %1533 = vmatmul.mubr.f32.gmra.mrb[0].mxu0 %v1466
    %v1534 = vpop.f32.mrb[0].mxu0
    %v1535 = vadd.f32 0.0, %v1534
    %v1536 = vpop.f32.mrb[0].mxu0
    %1537 = vdwg.mxu0
    %1539 = vrot.lane.b32.xlu0 %v1535, 24
    %v1540 = vpop.permute.xlu0 %1539
    %v1542 = vadd.f32 %v109, %v1540
    %1543 = vst.msk [vmem:[#allocation2 + $0x8] sm:$0xff] %vm879, %v1542
    %v1544 = vld [vmem:[#allocation2] sm:$0xff]
    %v1545 = vld [vmem:[#allocation2 + $0x8] sm:$0xff]
    %v1546 = vld [vmem:[%s6 + $0x1] sm:$0x1]
    %v1547 = vld [vmem:[#allocation9] sm:$0xff]
    %v1548 = vld [vmem:[#allocation9 + $0x8] sm:$0xff]
    %v1549 = vld [vmem:[#allocation9 + $0x10] sm:$0xff]
    %v1550 = vld [vmem:[#allocation9 + $0x18] sm:$0xff]
    %v1551 = vlaneseq
    %v1552 = vshrl.u32 %v1551, 7
    %v1553 = vsub.s32 0, %v1552
    %v1554 = vrot.slane %v1546, %v1553
    %vm1555 = vcmask 261120
    %v1557 = vsel %vm1555, %v1544, 0
    %v1560 = vsel %vm1555, %v1545, 0
    %1562 = vmatprep.subr.mxu0 0.0
    %1563 = vmatpush1.msra.mxu0 %v1547
    %1564 = vmatprep.subr.mxu0 0.0
    %1565 = vmatpush1.msra.mxu0 %v1548
    %1566 = vmatprep.subr.mxu0 0.0
    %1567 = vmatpush1.msra.mxu0 %v1549
    %1568 = vmatprep.subr.mxu0 0.0
    %1569 = vmatpush1.msra.mxu0 %v1550
    %1570 = vmatprep.subr.mxu0 0.0
    %1571 = vmatpush1.msra.mxu0 0.0
    %1572 = vmatprep.subr.mxu0 0.0
    %1573 = vmatpush1.msra.mxu0 0.0
    %1574 = vmatprep.subr.mxu0 0.0
    %1575 = vmatpush1.msra.mxu0 0.0
    %1576 = vmatprep.subr.mxu0 0.0
    %1577 = vmatpush1.msra.mxu0 0.0
    %1578 = vmatprep.subr.mxu0 0.0
    %1579 = vmatpush1.msra.mxu0 0.0
    %1580 = vmatprep.subr.mxu0 0.0
    %1581 = vmatpush1.msra.mxu0 0.0
    %1582 = vmatprep.subr.mxu0 0.0
    %1583 = vmatpush1.msra.mxu0 0.0
    %1584 = vmatprep.subr.mxu0 0.0
    %1585 = vmatpush1.msra.mxu0 0.0
    %1586 = vmatprep.subr.mxu0 0.0
    %1587 = vmatpush1.msra.mxu0 0.0
    %1588 = vmatprep.subr.mxu0 0.0
    %1589 = vmatpush1.msra.mxu0 0.0
    %1590 = vmatprep.subr.mxu0 0.0
    %1591 = vmatpush1.msra.mxu0 0.0
    %1592 = vmatprep.subr.mxu0 0.0
    %1593 = vmatpush1.msra.mxu0 0.0
    %1594 = vmatprep.subr.mxu0 0.0
    %1595 = vmatpush1.msra.mxu0 0.0
    %1596 = vmatprep.subr.mxu0 0.0
    %1597 = vmatpush1.msra.mxu0 0.0
    %1598 = vmatprep.subr.mxu0 0.0
    %1599 = vmatpush1.msra.mxu0 0.0
    %1600 = vmatprep.subr.mxu0 0.0
    %1601 = vmatpush1.msra.mxu0 0.0
    %1602 = vmatprep.subr.mxu0 0.0
    %1603 = vmatpush1.msra.mxu0 0.0
    %1604 = vmatprep.subr.mxu0 0.0
    %1605 = vmatpush1.msra.mxu0 0.0
    %1606 = vmatprep.subr.mxu0 0.0
    %1607 = vmatpush1.msra.mxu0 0.0
    %1608 = vmatprep.subr.mxu0 0.0
    %1609 = vmatpush1.msra.mxu0 0.0
    %1610 = vmatprep.subr.mxu0 0.0
    %1611 = vmatpush1.msra.mxu0 0.0
    %1612 = vmatprep.subr.mxu0 0.0
    %1613 = vmatpush1.msra.mxu0 0.0
    %1614 = vmatprep.subr.mxu0 0.0
    %1615 = vmatpush1.msra.mxu0 0.0
    %1616 = vmatprep.subr.mxu0 0.0
    %1617 = vmatpush1.msra.mxu0 0.0
    %1618 = vmatprep.subr.mxu0 0.0
    %1619 = vmatpush1.msra.mxu0 0.0
    %1620 = vmatprep.subr.mxu0 0.0
    %1621 = vmatpush1.msra.mxu0 0.0
    %1622 = vmatprep.subr.mxu0 0.0
    %1623 = vmatpush1.msra.mxu0 0.0
    %1624 = vmatprep.subr.mxu0 0.0
    %1625 = vmatpush1.msra.mxu0 0.0
    %1626 = vmatprep.mubr.f32.mxu0 0.0
    %1627 = vmatmul.mubr.f32.gmra.mrb[0].mxu0 %v1557
    %v1628 = vpop.f32.mrb[0].mxu0
    %v1629 = vadd.f32 %v1554, %v1628
    %v1630 = vpop.f32.mrb[0].mxu0
    %1631 = vmatprep.mubr.f32.mxu0 0.0
    %1632 = vmatmul.mubr.f32.gmra.mrb[0].mxu0 %v1560
    %v1633 = vpop.f32.mrb[0].mxu0
    %v1634 = vadd.f32 %v1554, %v1633
    %v1635 = vpop.f32.mrb[0].mxu0
    %1636 = vdwg.mxu0
    %v1637 = vmax.f32 %v1629, 0.0
    %v1638 = vmax.f32 %v1634, 0.0
    %v1639 = vadd.f32 %v1544, %v1637
    %v1640 = vadd.f32 %v1545, %v1638
    %v1641 = vld [vmem:[%s6 + $0x2] sm:$0x1]
    %v1642 = vld [vmem:[#allocation11] sm:$0xff]
    %v1643 = vld [vmem:[#allocation11 + $0x8] sm:$0xff]
    %v1644 = vld [vmem:[#allocation11 + $0x10] sm:$0xff]
    %v1645 = vld [vmem:[#allocation11 + $0x18] sm:$0xff]
    %v1646 = vlaneseq
    %v1647 = vshrl.u32 %v1646, 7
    %v1648 = vsub.s32 0, %v1647
    %v1649 = vrot.slane %v1641, %v1648
    %v1651 = vsel %vm1555, %v1639, 0
    %v1654 = vsel %vm1555, %v1640, 0
    %1656 = vmatprep.subr.mxu0 0.0
    %1657 = vmatpush1.msra.mxu0 %v1642
    %1658 = vmatprep.subr.mxu0 0.0
    %1659 = vmatpush1.msra.mxu0 %v1643
    %1660 = vmatprep.subr.mxu0 0.0
    %1661 = vmatpush1.msra.mxu0 %v1644
    %1662 = vmatprep.subr.mxu0 0.0
    %1663 = vmatpush1.msra.mxu0 %v1645
    %1664 = vmatprep.subr.mxu0 0.0
    %1665 = vmatpush1.msra.mxu0 0.0
    %1666 = vmatprep.subr.mxu0 0.0
    %1667 = vmatpush1.msra.mxu0 0.0
    %1668 = vmatprep.subr.mxu0 0.0
    %1669 = vmatpush1.msra.mxu0 0.0
    %1670 = vmatprep.subr.mxu0 0.0
    %1671 = vmatpush1.msra.mxu0 0.0
    %1672 = vmatprep.subr.mxu0 0.0
    %1673 = vmatpush1.msra.mxu0 0.0
    %1674 = vmatprep.subr.mxu0 0.0
    %1675 = vmatpush1.msra.mxu0 0.0
    %1676 = vmatprep.subr.mxu0 0.0
    %1677 = vmatpush1.msra.mxu0 0.0
    %1678 = vmatprep.subr.mxu0 0.0
    %1679 = vmatpush1.msra.mxu0 0.0
    %1680 = vmatprep.subr.mxu0 0.0
    %1681 = vmatpush1.msra.mxu0 0.0
    %1682 = vmatprep.subr.mxu0 0.0
    %1683 = vmatpush1.msra.mxu0 0.0
    %1684 = vmatprep.subr.mxu0 0.0
    %1685 = vmatpush1.msra.mxu0 0.0
    %1686 = vmatprep.subr.mxu0 0.0
    %1687 = vmatpush1.msra.mxu0 0.0
    %1688 = vmatprep.subr.mxu0 0.0
    %1689 = vmatpush1.msra.mxu0 0.0
    %1690 = vmatprep.subr.mxu0 0.0
    %1691 = vmatpush1.msra.mxu0 0.0
    %1692 = vmatprep.subr.mxu0 0.0
    %1693 = vmatpush1.msra.mxu0 0.0
    %1694 = vmatprep.subr.mxu0 0.0
    %1695 = vmatpush1.msra.mxu0 0.0
    %1696 = vmatprep.subr.mxu0 0.0
    %1697 = vmatpush1.msra.mxu0 0.0
    %1698 = vmatprep.subr.mxu0 0.0
    %1699 = vmatpush1.msra.mxu0 0.0
    %1700 = vmatprep.subr.mxu0 0.0
    %1701 = vmatpush1.msra.mxu0 0.0
    %1702 = vmatprep.subr.mxu0 0.0
    %1703 = vmatpush1.msra.mxu0 0.0
    %1704 = vmatprep.subr.mxu0 0.0
    %1705 = vmatpush1.msra.mxu0 0.0
    %1706 = vmatprep.subr.mxu0 0.0
    %1707 = vmatpush1.msra.mxu0 0.0
    %1708 = vmatprep.subr.mxu0 0.0
    %1709 = vmatpush1.msra.mxu0 0.0
    %1710 = vmatprep.subr.mxu0 0.0
    %1711 = vmatpush1.msra.mxu0 0.0
    %1712 = vmatprep.subr.mxu0 0.0
    %1713 = vmatpush1.msra.mxu0 0.0
    %1714 = vmatprep.subr.mxu0 0.0
    %1715 = vmatpush1.msra.mxu0 0.0
    %1716 = vmatprep.subr.mxu0 0.0
    %1717 = vmatpush1.msra.mxu0 0.0
    %1718 = vmatprep.subr.mxu0 0.0
    %1719 = vmatpush1.msra.mxu0 0.0
    %1720 = vmatprep.mubr.f32.mxu0 0.0
    %1721 = vmatmul.mubr.f32.gmra.mrb[0].mxu0 %v1651
    %v1722 = vpop.f32.mrb[0].mxu0
    %v1723 = vadd.f32 %v1649, %v1722
    %v1724 = vpop.f32.mrb[0].mxu0
    %1725 = vmatprep.mubr.f32.mxu0 0.0
    %1726 = vmatmul.mubr.f32.gmra.mrb[0].mxu0 %v1654
    %v1727 = vpop.f32.mrb[0].mxu0
    %v1728 = vadd.f32 %v1649, %v1727
    %v1729 = vpop.f32.mrb[0].mxu0
    %1730 = vdwg.mxu0
    %1731 = vrot.lane.b32.xlu0 %v191, 64
    %v1732 = vpop.permute.xlu0 %1731
    %v1733 = vsel %vm199, %v1732, 0
    %v1736 = vsel %vm199, %v1723, 0
    %1738 = vmatprep.subr.mxu0 0.0
    %1739 = vmatpush1.xpose.msra.mxu0 %v1736
    %1740 = vmatprep.subr.mxu0 0.0
    %1741 = vmatpush1.xpose.msra.mxu0 0.0
    %1742 = vmatprep.subr.mxu0 0.0
    %1743 = vmatpush1.xpose.msra.mxu0 0.0
    %1744 = vmatprep.subr.mxu0 0.0
    %1745 = vmatpush1.xpose.msra.mxu0 0.0
    %1746 = vmatprep.subr.mxu0 0.0
    %1747 = vmatpush1.xpose.msra.mxu0 0.0
    %1748 = vmatprep.subr.mxu0 0.0
    %1749 = vmatpush1.xpose.msra.mxu0 0.0
    %1750 = vmatprep.subr.mxu0 0.0
    %1751 = vmatpush1.xpose.msra.mxu0 0.0
    %1752 = vmatprep.subr.mxu0 0.0
    %1753 = vmatpush1.xpose.msra.mxu0 0.0
    %1754 = vmatprep.subr.mxu0 0.0
    %1755 = vmatpush1.xpose.msra.mxu0 0.0
    %1756 = vmatprep.subr.mxu0 0.0
    %1757 = vmatpush1.xpose.msra.mxu0 0.0
    %1758 = vmatprep.subr.mxu0 0.0
    %1759 = vmatpush1.xpose.msra.mxu0 0.0
    %1760 = vmatprep.subr.mxu0 0.0
    %1761 = vmatpush1.xpose.msra.mxu0 0.0
    %1762 = vmatprep.subr.mxu0 0.0
    %1763 = vmatpush1.xpose.msra.mxu0 0.0
    %1764 = vmatprep.subr.mxu0 0.0
    %1765 = vmatpush1.xpose.msra.mxu0 0.0
    %1766 = vmatprep.subr.mxu0 0.0
    %1767 = vmatpush1.xpose.msra.mxu0 0.0
    %1768 = vmatprep.subr.mxu0 0.0
    %1769 = vmatpush1.xpose.msra.mxu0 0.0
    %1770 = vmatprep.subr.mxu0 0.0
    %1771 = vmatpush1.xpose.msra.mxu0 0.0
    %1772 = vmatprep.subr.mxu0 0.0
    %1773 = vmatpush1.xpose.msra.mxu0 0.0
    %1774 = vmatprep.subr.mxu0 0.0
    %1775 = vmatpush1.xpose.msra.mxu0 0.0
    %1776 = vmatprep.subr.mxu0 0.0
    %1777 = vmatpush1.xpose.msra.mxu0 0.0
    %1778 = vmatprep.subr.mxu0 0.0
    %1779 = vmatpush1.xpose.msra.mxu0 0.0
    %1780 = vmatprep.subr.mxu0 0.0
    %1781 = vmatpush1.xpose.msra.mxu0 0.0
    %1782 = vmatprep.subr.mxu0 0.0
    %1783 = vmatpush1.xpose.msra.mxu0 0.0
    %1784 = vmatprep.subr.mxu0 0.0
    %1785 = vmatpush1.xpose.msra.mxu0 0.0
    %1786 = vmatprep.subr.mxu0 0.0
    %1787 = vmatpush1.xpose.msra.mxu0 0.0
    %1788 = vmatprep.subr.mxu0 0.0
    %1789 = vmatpush1.xpose.msra.mxu0 0.0
    %1790 = vmatprep.subr.mxu0 0.0
    %1791 = vmatpush1.xpose.msra.mxu0 0.0
    %1792 = vmatprep.subr.mxu0 0.0
    %1793 = vmatpush1.xpose.msra.mxu0 0.0
    %1794 = vmatprep.subr.mxu0 0.0
    %1795 = vmatpush1.xpose.msra.mxu0 0.0
    %1796 = vmatprep.subr.mxu0 0.0
    %1797 = vmatpush1.xpose.msra.mxu0 0.0
    %1798 = vmatprep.subr.mxu0 0.0
    %1799 = vmatpush1.xpose.msra.mxu0 0.0
    %1800 = vmatprep.subr.mxu0 0.0
    %1801 = vmatpush1.xpose.msra.mxu0 0.0
    %1802 = vmatprep.mubr.f32.mxu0 0.0
    %1803 = vmatmul.mubr.f32.gmra.mrb[0].mxu0 %v1733
    %v1804 = vpop.f32.mrb[0].mxu0
    %v1805 = vadd.f32 0.0, %v1804
    %v1806 = vpop.f32.mrb[0].mxu0
    %1807 = vdwg.mxu0
    %v1808 = vsel %vm199, %v1805, -inf
    %1809 = vmax.xlane.f32.xlu0 %v1808
    %v1810 = vpop.xlane.xlu0 %1809
    %v1811 = vsub.f32 %v1805, %v1810
    %v1812 = vmul.f32 %v1811, 1.442695
    %v1813 = vpow.pop %v1812
    %v1814 = vsel %vm199, %v1813, 0.0
    %1815 = vadd.xlane.f32.xlu0 %v1814
    %v1816 = vpop.xlane.xlu0 %1815
    %v1817 = vrcp.pop %v1816
    %v1818 = vmul.f32 %v1813, %v1817
    %1819 = vrot.lane.b32.xlu0 %v1723, 96
    %v1820 = vpop.permute.xlu0 %1819
    %v1823 = vsel %vm199, %v1818, 0
    %1825 = vmatprep.subr.mxu0 0.0
    %1826 = vmatpush1.msra.mxu0 %v1820
    %1827 = vmatprep.subr.mxu0 0.0
    %1828 = vmatpush1.msra.mxu0 0.0
    %1829 = vmatprep.subr.mxu0 0.0
    %1830 = vmatpush1.msra.mxu0 0.0
    %1831 = vmatprep.subr.mxu0 0.0
    %1832 = vmatpush1.msra.mxu0 0.0
    %1833 = vmatprep.subr.mxu0 0.0
    %1834 = vmatpush1.msra.mxu0 0.0
    %1835 = vmatprep.subr.mxu0 0.0
    %1836 = vmatpush1.msra.mxu0 0.0
    %1837 = vmatprep.subr.mxu0 0.0
    %1838 = vmatpush1.msra.mxu0 0.0
    %1839 = vmatprep.subr.mxu0 0.0
    %1840 = vmatpush1.msra.mxu0 0.0
    %1841 = vmatprep.subr.mxu0 0.0
    %1842 = vmatpush1.msra.mxu0 0.0
    %1843 = vmatprep.subr.mxu0 0.0
    %1844 = vmatpush1.msra.mxu0 0.0
    %1845 = vmatprep.subr.mxu0 0.0
    %1846 = vmatpush1.msra.mxu0 0.0
    %1847 = vmatprep.subr.mxu0 0.0
    %1848 = vmatpush1.msra.mxu0 0.0
    %1849 = vmatprep.subr.mxu0 0.0
    %1850 = vmatpush1.msra.mxu0 0.0
    %1851 = vmatprep.subr.mxu0 0.0
    %1852 = vmatpush1.msra.mxu0 0.0
    %1853 = vmatprep.subr.mxu0 0.0
    %1854 = vmatpush1.msra.mxu0 0.0
    %1855 = vmatprep.subr.mxu0 0.0
    %1856 = vmatpush1.msra.mxu0 0.0
    %1857 = vmatprep.subr.mxu0 0.0
    %1858 = vmatpush1.msra.mxu0 0.0
    %1859 = vmatprep.subr.mxu0 0.0
    %1860 = vmatpush1.msra.mxu0 0.0
    %1861 = vmatprep.subr.mxu0 0.0
    %1862 = vmatpush1.msra.mxu0 0.0
    %1863 = vmatprep.subr.mxu0 0.0
    %1864 = vmatpush1.msra.mxu0 0.0
    %1865 = vmatprep.subr.mxu0 0.0
    %1866 = vmatpush1.msra.mxu0 0.0
    %1867 = vmatprep.subr.mxu0 0.0
    %1868 = vmatpush1.msra.mxu0 0.0
    %1869 = vmatprep.subr.mxu0 0.0
    %1870 = vmatpush1.msra.mxu0 0.0
    %1871 = vmatprep.subr.mxu0 0.0
    %1872 = vmatpush1.msra.mxu0 0.0
    %1873 = vmatprep.subr.mxu0 0.0
    %1874 = vmatpush1.msra.mxu0 0.0
    %1875 = vmatprep.subr.mxu0 0.0
    %1876 = vmatpush1.msra.mxu0 0.0
    %1877 = vmatprep.subr.mxu0 0.0
    %1878 = vmatpush1.msra.mxu0 0.0
    %1879 = vmatprep.subr.mxu0 0.0
    %1880 = vmatpush1.msra.mxu0 0.0
    %1881 = vmatprep.subr.mxu0 0.0
    %1882 = vmatpush1.msra.mxu0 0.0
    %1883 = vmatprep.subr.mxu0 0.0
    %1884 = vmatpush1.msra.mxu0 0.0
    %1885 = vmatprep.subr.mxu0 0.0
    %1886 = vmatpush1.msra.mxu0 0.0
    %1887 = vmatprep.subr.mxu0 0.0
    %1888 = vmatpush1.msra.mxu0 0.0
    %1889 = vmatprep.mubr.f32.mxu0 0.0
    %1890 = vmatmul.mubr.f32.gmra.mrb[0].mxu0 %v1823
    %v1891 = vpop.f32.mrb[0].mxu0
    %v1892 = vadd.f32 0.0, %v1891
    %v1893 = vpop.f32.mrb[0].mxu0
    %1894 = vdwg.mxu0
    %1896 = vrot.lane.b32.xlu0 %v1892, 64
    %v1897 = vpop.permute.xlu0 %1896
    %v1899 = vadd.f32 %v191, %v1897
    %1901 = vrot.lane.b32.xlu0 %v1899, 64
    %v1902 = vpop.permute.xlu0 %1901
    %1904 = vst.msk [vmem:[#allocation14] sm:$0xff] %vm199, %v1902
    %1905 = vrot.lane.b32.xlu0 %v191, 56
    %v1906 = vpop.permute.xlu0 %1905
    %1907 = vrot.lane.b32.xlu0 %v1723, 120
    %v1908 = vpop.permute.xlu0 %1907
    %v1909 = vsel %vm199, %v1906, 0
    %v1911 = vsel %vm199, %v1908, 0
    %1913 = vmatprep.subr.mxu0 0.0
    %1914 = vmatpush1.xpose.msra.mxu0 %v1911
    %1915 = vmatprep.subr.mxu0 0.0
    %1916 = vmatpush1.xpose.msra.mxu0 0.0
    %1917 = vmatprep.subr.mxu0 0.0
    %1918 = vmatpush1.xpose.msra.mxu0 0.0
    %1919 = vmatprep.subr.mxu0 0.0
    %1920 = vmatpush1.xpose.msra.mxu0 0.0
    %1921 = vmatprep.subr.mxu0 0.0
    %1922 = vmatpush1.xpose.msra.mxu0 0.0
    %1923 = vmatprep.subr.mxu0 0.0
    %1924 = vmatpush1.xpose.msra.mxu0 0.0
    %1925 = vmatprep.subr.mxu0 0.0
    %1926 = vmatpush1.xpose.msra.mxu0 0.0
    %1927 = vmatprep.subr.mxu0 0.0
    %1928 = vmatpush1.xpose.msra.mxu0 0.0
    %1929 = vmatprep.subr.mxu0 0.0
    %1930 = vmatpush1.xpose.msra.mxu0 0.0
    %1931 = vmatprep.subr.mxu0 0.0
    %1932 = vmatpush1.xpose.msra.mxu0 0.0
    %1933 = vmatprep.subr.mxu0 0.0
    %1934 = vmatpush1.xpose.msra.mxu0 0.0
    %1935 = vmatprep.subr.mxu0 0.0
    %1936 = vmatpush1.xpose.msra.mxu0 0.0
    %1937 = vmatprep.subr.mxu0 0.0
    %1938 = vmatpush1.xpose.msra.mxu0 0.0
    %1939 = vmatprep.subr.mxu0 0.0
    %1940 = vmatpush1.xpose.msra.mxu0 0.0
    %1941 = vmatprep.subr.mxu0 0.0
    %1942 = vmatpush1.xpose.msra.mxu0 0.0
    %1943 = vmatprep.subr.mxu0 0.0
    %1944 = vmatpush1.xpose.msra.mxu0 0.0
    %1945 = vmatprep.subr.mxu0 0.0
    %1946 = vmatpush1.xpose.msra.mxu0 0.0
    %1947 = vmatprep.subr.mxu0 0.0
    %1948 = vmatpush1.xpose.msra.mxu0 0.0
    %1949 = vmatprep.subr.mxu0 0.0
    %1950 = vmatpush1.xpose.msra.mxu0 0.0
    %1951 = vmatprep.subr.mxu0 0.0
    %1952 = vmatpush1.xpose.msra.mxu0 0.0
    %1953 = vmatprep.subr.mxu0 0.0
    %1954 = vmatpush1.xpose.msra.mxu0 0.0
    %1955 = vmatprep.subr.mxu0 0.0
    %1956 = vmatpush1.xpose.msra.mxu0 0.0
    %1957 = vmatprep.subr.mxu0 0.0
    %1958 = vmatpush1.xpose.msra.mxu0 0.0
    %1959 = vmatprep.subr.mxu0 0.0
    %1960 = vmatpush1.xpose.msra.mxu0 0.0
    %1961 = vmatprep.subr.mxu0 0.0
    %1962 = vmatpush1.xpose.msra.mxu0 0.0
    %1963 = vmatprep.subr.mxu0 0.0
    %1964 = vmatpush1.xpose.msra.mxu0 0.0
    %1965 = vmatprep.subr.mxu0 0.0
    %1966 = vmatpush1.xpose.msra.mxu0 0.0
    %1967 = vmatprep.subr.mxu0 0.0
    %1968 = vmatpush1.xpose.msra.mxu0 0.0
    %1969 = vmatprep.subr.mxu0 0.0
    %1970 = vmatpush1.xpose.msra.mxu0 0.0
    %1971 = vmatprep.subr.mxu0 0.0
    %1972 = vmatpush1.xpose.msra.mxu0 0.0
    %1973 = vmatprep.subr.mxu0 0.0
    %1974 = vmatpush1.xpose.msra.mxu0 0.0
    %1975 = vmatprep.subr.mxu0 0.0
    %1976 = vmatpush1.xpose.msra.mxu0 0.0
    %1977 = vmatprep.mubr.f32.mxu0 0.0
    %1978 = vmatmul.mubr.f32.gmra.mrb[0].mxu0 %v1909
    %v1979 = vpop.f32.mrb[0].mxu0
    %v1980 = vadd.f32 0.0, %v1979
    %v1981 = vpop.f32.mrb[0].mxu0
    %1982 = vdwg.mxu0
    %v1983 = vsel %vm199, %v1980, -inf
    %1984 = vmax.xlane.f32.xlu0 %v1983
    %v1985 = vpop.xlane.xlu0 %1984
    %v1986 = vsub.f32 %v1980, %v1985
    %v1987 = vmul.f32 %v1986, 1.442695
    %v1988 = vpow.pop %v1987
    %v1989 = vsel %vm199, %v1988, 0.0
    %1990 = vadd.xlane.f32.xlu0 %v1989
    %v1991 = vpop.xlane.xlu0 %1990
    %v1992 = vrcp.pop %v1991
    %v1993 = vmul.f32 %v1988, %v1992
    %1994 = vrot.lane.b32.xlu0 %v1723, 88
    %v1995 = vpop.permute.xlu0 %1994
    %v1998 = vsel %vm199, %v1993, 0
    %2000 = vmatprep.subr.mxu0 0.0
    %2001 = vmatpush1.msra.mxu0 %v1995
    %2002 = vmatprep.subr.mxu0 0.0
    %2003 = vmatpush1.msra.mxu0 0.0
    %2004 = vmatprep.subr.mxu0 0.0
    %2005 = vmatpush1.msra.mxu0 0.0
    %2006 = vmatprep.subr.mxu0 0.0
    %2007 = vmatpush1.msra.mxu0 0.0
    %2008 = vmatprep.subr.mxu0 0.0
    %2009 = vmatpush1.msra.mxu0 0.0
    %2010 = vmatprep.subr.mxu0 0.0
    %2011 = vmatpush1.msra.mxu0 0.0
    %2012 = vmatprep.subr.mxu0 0.0
    %2013 = vmatpush1.msra.mxu0 0.0
    %2014 = vmatprep.subr.mxu0 0.0
    %2015 = vmatpush1.msra.mxu0 0.0
    %2016 = vmatprep.subr.mxu0 0.0
    %2017 = vmatpush1.msra.mxu0 0.0
    %2018 = vmatprep.subr.mxu0 0.0
    %2019 = vmatpush1.msra.mxu0 0.0
    %2020 = vmatprep.subr.mxu0 0.0
    %2021 = vmatpush1.msra.mxu0 0.0
    %2022 = vmatprep.subr.mxu0 0.0
    %2023 = vmatpush1.msra.mxu0 0.0
    %2024 = vmatprep.subr.mxu0 0.0
    %2025 = vmatpush1.msra.mxu0 0.0
    %2026 = vmatprep.subr.mxu0 0.0
    %2027 = vmatpush1.msra.mxu0 0.0
    %2028 = vmatprep.subr.mxu0 0.0
    %2029 = vmatpush1.msra.mxu0 0.0
    %2030 = vmatprep.subr.mxu0 0.0
    %2031 = vmatpush1.msra.mxu0 0.0
    %2032 = vmatprep.subr.mxu0 0.0
    %2033 = vmatpush1.msra.mxu0 0.0
    %2034 = vmatprep.subr.mxu0 0.0
    %2035 = vmatpush1.msra.mxu0 0.0
    %2036 = vmatprep.subr.mxu0 0.0
    %2037 = vmatpush1.msra.mxu0 0.0
    %2038 = vmatprep.subr.mxu0 0.0
    %2039 = vmatpush1.msra.mxu0 0.0
    %2040 = vmatprep.subr.mxu0 0.0
    %2041 = vmatpush1.msra.mxu0 0.0
    %2042 = vmatprep.subr.mxu0 0.0
    %2043 = vmatpush1.msra.mxu0 0.0
    %2044 = vmatprep.subr.mxu0 0.0
    %2045 = vmatpush1.msra.mxu0 0.0
    %2046 = vmatprep.subr.mxu0 0.0
    %2047 = vmatpush1.msra.mxu0 0.0
    %2048 = vmatprep.subr.mxu0 0.0
    %2049 = vmatpush1.msra.mxu0 0.0
    %2050 = vmatprep.subr.mxu0 0.0
    %2051 = vmatpush1.msra.mxu0 0.0
    %2052 = vmatprep.subr.mxu0 0.0
    %2053 = vmatpush1.msra.mxu0 0.0
    %2054 = vmatprep.subr.mxu0 0.0
    %2055 = vmatpush1.msra.mxu0 0.0
    %2056 = vmatprep.subr.mxu0 0.0
    %2057 = vmatpush1.msra.mxu0 0.0
    %2058 = vmatprep.subr.mxu0 0.0
    %2059 = vmatpush1.msra.mxu0 0.0
    %2060 = vmatprep.subr.mxu0 0.0
    %2061 = vmatpush1.msra.mxu0 0.0
    %2062 = vmatprep.subr.mxu0 0.0
    %2063 = vmatpush1.msra.mxu0 0.0
    %2064 = vmatprep.mubr.f32.mxu0 0.0
    %2065 = vmatmul.mubr.f32.gmra.mrb[0].mxu0 %v1998
    %v2066 = vpop.f32.mrb[0].mxu0
    %v2067 = vadd.f32 0.0, %v2066
    %v2068 = vpop.f32.mrb[0].mxu0
    %2069 = vdwg.mxu0
    %2071 = vrot.lane.b32.xlu0 %v2067, 72
    %v2072 = vpop.permute.xlu0 %2071
    %v2074 = vadd.f32 %v191, %v2072
    %2076 = vrot.lane.b32.xlu0 %v2074, 64
    %v2077 = vpop.permute.xlu0 %2076
    %2079 = vst.msk [vmem:[#allocation14] sm:$0xff] %vm535, %v2077
    %2080 = vrot.lane.b32.xlu0 %v191, 48
    %v2081 = vpop.permute.xlu0 %2080
    %2082 = vrot.lane.b32.xlu0 %v1723, 112
    %v2083 = vpop.permute.xlu0 %2082
    %v2084 = vsel %vm199, %v2081, 0
    %v2086 = vsel %vm199, %v2083, 0
    %2088 = vmatprep.subr.mxu0 0.0
    %2089 = vmatpush1.xpose.msra.mxu0 %v2086
    %2090 = vmatprep.subr.mxu0 0.0
    %2091 = vmatpush1.xpose.msra.mxu0 0.0
    %2092 = vmatprep.subr.mxu0 0.0
    %2093 = vmatpush1.xpose.msra.mxu0 0.0
    %2094 = vmatprep.subr.mxu0 0.0
    %2095 = vmatpush1.xpose.msra.mxu0 0.0
    %2096 = vmatprep.subr.mxu0 0.0
    %2097 = vmatpush1.xpose.msra.mxu0 0.0
    %2098 = vmatprep.subr.mxu0 0.0
    %2099 = vmatpush1.xpose.msra.mxu0 0.0
    %2100 = vmatprep.subr.mxu0 0.0
    %2101 = vmatpush1.xpose.msra.mxu0 0.0
    %2102 = vmatprep.subr.mxu0 0.0
    %2103 = vmatpush1.xpose.msra.mxu0 0.0
    %2104 = vmatprep.subr.mxu0 0.0
    %2105 = vmatpush1.xpose.msra.mxu0 0.0
    %2106 = vmatprep.subr.mxu0 0.0
    %2107 = vmatpush1.xpose.msra.mxu0 0.0
    %2108 = vmatprep.subr.mxu0 0.0
    %2109 = vmatpush1.xpose.msra.mxu0 0.0
    %2110 = vmatprep.subr.mxu0 0.0
    %2111 = vmatpush1.xpose.msra.mxu0 0.0
    %2112 = vmatprep.subr.mxu0 0.0
    %2113 = vmatpush1.xpose.msra.mxu0 0.0
    %2114 = vmatprep.subr.mxu0 0.0
    %2115 = vmatpush1.xpose.msra.mxu0 0.0
    %2116 = vmatprep.subr.mxu0 0.0
    %2117 = vmatpush1.xpose.msra.mxu0 0.0
    %2118 = vmatprep.subr.mxu0 0.0
    %2119 = vmatpush1.xpose.msra.mxu0 0.0
    %2120 = vmatprep.subr.mxu0 0.0
    %2121 = vmatpush1.xpose.msra.mxu0 0.0
    %2122 = vmatprep.subr.mxu0 0.0
    %2123 = vmatpush1.xpose.msra.mxu0 0.0
    %2124 = vmatprep.subr.mxu0 0.0
    %2125 = vmatpush1.xpose.msra.mxu0 0.0
    %2126 = vmatprep.subr.mxu0 0.0
    %2127 = vmatpush1.xpose.msra.mxu0 0.0
    %2128 = vmatprep.subr.mxu0 0.0
    %2129 = vmatpush1.xpose.msra.mxu0 0.0
    %2130 = vmatprep.subr.mxu0 0.0
    %2131 = vmatpush1.xpose.msra.mxu0 0.0
    %2132 = vmatprep.subr.mxu0 0.0
    %2133 = vmatpush1.xpose.msra.mxu0 0.0
    %2134 = vmatprep.subr.mxu0 0.0
    %2135 = vmatpush1.xpose.msra.mxu0 0.0
    %2136 = vmatprep.subr.mxu0 0.0
    %2137 = vmatpush1.xpose.msra.mxu0 0.0
    %2138 = vmatprep.subr.mxu0 0.0
    %2139 = vmatpush1.xpose.msra.mxu0 0.0
    %2140 = vmatprep.subr.mxu0 0.0
    %2141 = vmatpush1.xpose.msra.mxu0 0.0
    %2142 = vmatprep.subr.mxu0 0.0
    %2143 = vmatpush1.xpose.msra.mxu0 0.0
    %2144 = vmatprep.subr.mxu0 0.0
    %2145 = vmatpush1.xpose.msra.mxu0 0.0
    %2146 = vmatprep.subr.mxu0 0.0
    %2147 = vmatpush1.xpose.msra.mxu0 0.0
    %2148 = vmatprep.subr.mxu0 0.0
    %2149 = vmatpush1.xpose.msra.mxu0 0.0
    %2150 = vmatprep.subr.mxu0 0.0
    %2151 = vmatpush1.xpose.msra.mxu0 0.0
    %2152 = vmatprep.mubr.f32.mxu0 0.0
    %2153 = vmatmul.mubr.f32.gmra.mrb[0].mxu0 %v2084
    %v2154 = vpop.f32.mrb[0].mxu0
    %v2155 = vadd.f32 0.0, %v2154
    %v2156 = vpop.f32.mrb[0].mxu0
    %2157 = vdwg.mxu0
    %v2158 = vsel %vm199, %v2155, -inf
    %2159 = vmax.xlane.f32.xlu0 %v2158
    %v2160 = vpop.xlane.xlu0 %2159
    %v2161 = vsub.f32 %v2155, %v2160
    %v2162 = vmul.f32 %v2161, 1.442695
    %v2163 = vpow.pop %v2162
    %v2164 = vsel %vm199, %v2163, 0.0
    %2165 = vadd.xlane.f32.xlu0 %v2164
    %v2166 = vpop.xlane.xlu0 %2165
    %v2167 = vrcp.pop %v2166
    %v2168 = vmul.f32 %v2163, %v2167
    %2169 = vrot.lane.b32.xlu0 %v1723, 80
    %v2170 = vpop.permute.xlu0 %2169
    %v2173 = vsel %vm199, %v2168, 0
    %2175 = vmatprep.subr.mxu0 0.0
    %2176 = vmatpush1.msra.mxu0 %v2170
    %2177 = vmatprep.subr.mxu0 0.0
    %2178 = vmatpush1.msra.mxu0 0.0
    %2179 = vmatprep.subr.mxu0 0.0
    %2180 = vmatpush1.msra.mxu0 0.0
    %2181 = vmatprep.subr.mxu0 0.0
    %2182 = vmatpush1.msra.mxu0 0.0
    %2183 = vmatprep.subr.mxu0 0.0
    %2184 = vmatpush1.msra.mxu0 0.0
    %2185 = vmatprep.subr.mxu0 0.0
    %2186 = vmatpush1.msra.mxu0 0.0
    %2187 = vmatprep.subr.mxu0 0.0
    %2188 = vmatpush1.msra.mxu0 0.0
    %2189 = vmatprep.subr.mxu0 0.0
    %2190 = vmatpush1.msra.mxu0 0.0
    %2191 = vmatprep.subr.mxu0 0.0
    %2192 = vmatpush1.msra.mxu0 0.0
    %2193 = vmatprep.subr.mxu0 0.0
    %2194 = vmatpush1.msra.mxu0 0.0
    %2195 = vmatprep.subr.mxu0 0.0
    %2196 = vmatpush1.msra.mxu0 0.0
    %2197 = vmatprep.subr.mxu0 0.0
    %2198 = vmatpush1.msra.mxu0 0.0
    %2199 = vmatprep.subr.mxu0 0.0
    %2200 = vmatpush1.msra.mxu0 0.0
    %2201 = vmatprep.subr.mxu0 0.0
    %2202 = vmatpush1.msra.mxu0 0.0
    %2203 = vmatprep.subr.mxu0 0.0
    %2204 = vmatpush1.msra.mxu0 0.0
    %2205 = vmatprep.subr.mxu0 0.0
    %2206 = vmatpush1.msra.mxu0 0.0
    %2207 = vmatprep.subr.mxu0 0.0
    %2208 = vmatpush1.msra.mxu0 0.0
    %2209 = vmatprep.subr.mxu0 0.0
    %2210 = vmatpush1.msra.mxu0 0.0
    %2211 = vmatprep.subr.mxu0 0.0
    %2212 = vmatpush1.msra.mxu0 0.0
    %2213 = vmatprep.subr.mxu0 0.0
    %2214 = vmatpush1.msra.mxu0 0.0
    %2215 = vmatprep.subr.mxu0 0.0
    %2216 = vmatpush1.msra.mxu0 0.0
    %2217 = vmatprep.subr.mxu0 0.0
    %2218 = vmatpush1.msra.mxu0 0.0
    %2219 = vmatprep.subr.mxu0 0.0
    %2220 = vmatpush1.msra.mxu0 0.0
    %2221 = vmatprep.subr.mxu0 0.0
    %2222 = vmatpush1.msra.mxu0 0.0
    %2223 = vmatprep.subr.mxu0 0.0
    %2224 = vmatpush1.msra.mxu0 0.0
    %2225 = vmatprep.subr.mxu0 0.0
    %2226 = vmatpush1.msra.mxu0 0.0
    %2227 = vmatprep.subr.mxu0 0.0
    %2228 = vmatpush1.msra.mxu0 0.0
    %2229 = vmatprep.subr.mxu0 0.0
    %2230 = vmatpush1.msra.mxu0 0.0
    %2231 = vmatprep.subr.mxu0 0.0
    %2232 = vmatpush1.msra.mxu0 0.0
    %2233 = vmatprep.subr.mxu0 0.0
    %2234 = vmatpush1.msra.mxu0 0.0
    %2235 = vmatprep.subr.mxu0 0.0
    %2236 = vmatpush1.msra.mxu0 0.0
    %2237 = vmatprep.subr.mxu0 0.0
    %2238 = vmatpush1.msra.mxu0 0.0
    %2239 = vmatprep.mubr.f32.mxu0 0.0
    %2240 = vmatmul.mubr.f32.gmra.mrb[0].mxu0 %v2173
    %v2241 = vpop.f32.mrb[0].mxu0
    %v2242 = vadd.f32 0.0, %v2241
    %v2243 = vpop.f32.mrb[0].mxu0
    %2244 = vdwg.mxu0
    %2246 = vrot.lane.b32.xlu0 %v2242, 80
    %v2247 = vpop.permute.xlu0 %2246
    %v2249 = vadd.f32 %v191, %v2247
    %2251 = vrot.lane.b32.xlu0 %v2249, 64
    %v2252 = vpop.permute.xlu0 %2251
    %2254 = vst.msk [vmem:[#allocation14] sm:$0xff] %vm707, %v2252
    %2255 = vrot.lane.b32.xlu0 %v191, 40
    %v2256 = vpop.permute.xlu0 %2255
    %2257 = vrot.lane.b32.xlu0 %v1723, 104
    %v2258 = vpop.permute.xlu0 %2257
    %v2259 = vsel %vm199, %v2256, 0
    %v2261 = vsel %vm199, %v2258, 0
    %2263 = vmatprep.subr.mxu0 0.0
    %2264 = vmatpush1.xpose.msra.mxu0 %v2261
    %2265 = vmatprep.subr.mxu0 0.0
    %2266 = vmatpush1.xpose.msra.mxu0 0.0
    %2267 = vmatprep.subr.mxu0 0.0
    %2268 = vmatpush1.xpose.msra.mxu0 0.0
    %2269 = vmatprep.subr.mxu0 0.0
    %2270 = vmatpush1.xpose.msra.mxu0 0.0
    %2271 = vmatprep.subr.mxu0 0.0
    %2272 = vmatpush1.xpose.msra.mxu0 0.0
    %2273 = vmatprep.subr.mxu0 0.0
    %2274 = vmatpush1.xpose.msra.mxu0 0.0
    %2275 = vmatprep.subr.mxu0 0.0
    %2276 = vmatpush1.xpose.msra.mxu0 0.0
    %2277 = vmatprep.subr.mxu0 0.0
    %2278 = vmatpush1.xpose.msra.mxu0 0.0
    %2279 = vmatprep.subr.mxu0 0.0
    %2280 = vmatpush1.xpose.msra.mxu0 0.0
    %2281 = vmatprep.subr.mxu0 0.0
    %2282 = vmatpush1.xpose.msra.mxu0 0.0
    %2283 = vmatprep.subr.mxu0 0.0
    %2284 = vmatpush1.xpose.msra.mxu0 0.0
    %2285 = vmatprep.subr.mxu0 0.0
    %2286 = vmatpush1.xpose.msra.mxu0 0.0
    %2287 = vmatprep.subr.mxu0 0.0
    %2288 = vmatpush1.xpose.msra.mxu0 0.0
    %2289 = vmatprep.subr.mxu0 0.0
    %2290 = vmatpush1.xpose.msra.mxu0 0.0
    %2291 = vmatprep.subr.mxu0 0.0
    %2292 = vmatpush1.xpose.msra.mxu0 0.0
    %2293 = vmatprep.subr.mxu0 0.0
    %2294 = vmatpush1.xpose.msra.mxu0 0.0
    %2295 = vmatprep.subr.mxu0 0.0
    %2296 = vmatpush1.xpose.msra.mxu0 0.0
    %2297 = vmatprep.subr.mxu0 0.0
    %2298 = vmatpush1.xpose.msra.mxu0 0.0
    %2299 = vmatprep.subr.mxu0 0.0
    %2300 = vmatpush1.xpose.msra.mxu0 0.0
    %2301 = vmatprep.subr.mxu0 0.0
    %2302 = vmatpush1.xpose.msra.mxu0 0.0
    %2303 = vmatprep.subr.mxu0 0.0
    %2304 = vmatpush1.xpose.msra.mxu0 0.0
    %2305 = vmatprep.subr.mxu0 0.0
    %2306 = vmatpush1.xpose.msra.mxu0 0.0
    %2307 = vmatprep.subr.mxu0 0.0
    %2308 = vmatpush1.xpose.msra.mxu0 0.0
    %2309 = vmatprep.subr.mxu0 0.0
    %2310 = vmatpush1.xpose.msra.mxu0 0.0
    %2311 = vmatprep.subr.mxu0 0.0
    %2312 = vmatpush1.xpose.msra.mxu0 0.0
    %2313 = vmatprep.subr.mxu0 0.0
    %2314 = vmatpush1.xpose.msra.mxu0 0.0
    %2315 = vmatprep.subr.mxu0 0.0
    %2316 = vmatpush1.xpose.msra.mxu0 0.0
    %2317 = vmatprep.subr.mxu0 0.0
    %2318 = vmatpush1.xpose.msra.mxu0 0.0
    %2319 = vmatprep.subr.mxu0 0.0
    %2320 = vmatpush1.xpose.msra.mxu0 0.0
    %2321 = vmatprep.subr.mxu0 0.0
    %2322 = vmatpush1.xpose.msra.mxu0 0.0
    %2323 = vmatprep.subr.mxu0 0.0
    %2324 = vmatpush1.xpose.msra.mxu0 0.0
    %2325 = vmatprep.subr.mxu0 0.0
    %2326 = vmatpush1.xpose.msra.mxu0 0.0
    %2327 = vmatprep.mubr.f32.mxu0 0.0
    %2328 = vmatmul.mubr.f32.gmra.mrb[0].mxu0 %v2259
    %v2329 = vpop.f32.mrb[0].mxu0
    %v2330 = vadd.f32 0.0, %v2329
    %v2331 = vpop.f32.mrb[0].mxu0
    %2332 = vdwg.mxu0
    %v2333 = vsel %vm199, %v2330, -inf
    %2334 = vmax.xlane.f32.xlu0 %v2333
    %v2335 = vpop.xlane.xlu0 %2334
    %v2336 = vsub.f32 %v2330, %v2335
    %v2337 = vmul.f32 %v2336, 1.442695
    %v2338 = vpow.pop %v2337
    %v2339 = vsel %vm199, %v2338, 0.0
    %2340 = vadd.xlane.f32.xlu0 %v2339
    %v2341 = vpop.xlane.xlu0 %2340
    %v2342 = vrcp.pop %v2341
    %v2343 = vmul.f32 %v2338, %v2342
    %2344 = vrot.lane.b32.xlu0 %v1723, 72
    %v2345 = vpop.permute.xlu0 %2344
    %v2348 = vsel %vm199, %v2343, 0
    %2350 = vmatprep.subr.mxu0 0.0
    %2351 = vmatpush1.msra.mxu0 %v2345
    %2352 = vmatprep.subr.mxu0 0.0
    %2353 = vmatpush1.msra.mxu0 0.0
    %2354 = vmatprep.subr.mxu0 0.0
    %2355 = vmatpush1.msra.mxu0 0.0
    %2356 = vmatprep.subr.mxu0 0.0
    %2357 = vmatpush1.msra.mxu0 0.0
    %2358 = vmatprep.subr.mxu0 0.0
    %2359 = vmatpush1.msra.mxu0 0.0
    %2360 = vmatprep.subr.mxu0 0.0
    %2361 = vmatpush1.msra.mxu0 0.0
    %2362 = vmatprep.subr.mxu0 0.0
    %2363 = vmatpush1.msra.mxu0 0.0
    %2364 = vmatprep.subr.mxu0 0.0
    %2365 = vmatpush1.msra.mxu0 0.0
    %2366 = vmatprep.subr.mxu0 0.0
    %2367 = vmatpush1.msra.mxu0 0.0
    %2368 = vmatprep.subr.mxu0 0.0
    %2369 = vmatpush1.msra.mxu0 0.0
    %2370 = vmatprep.subr.mxu0 0.0
    %2371 = vmatpush1.msra.mxu0 0.0
    %2372 = vmatprep.subr.mxu0 0.0
    %2373 = vmatpush1.msra.mxu0 0.0
    %2374 = vmatprep.subr.mxu0 0.0
    %2375 = vmatpush1.msra.mxu0 0.0
    %2376 = vmatprep.subr.mxu0 0.0
    %2377 = vmatpush1.msra.mxu0 0.0
    %2378 = vmatprep.subr.mxu0 0.0
    %2379 = vmatpush1.msra.mxu0 0.0
    %2380 = vmatprep.subr.mxu0 0.0
    %2381 = vmatpush1.msra.mxu0 0.0
    %2382 = vmatprep.subr.mxu0 0.0
    %2383 = vmatpush1.msra.mxu0 0.0
    %2384 = vmatprep.subr.mxu0 0.0
    %2385 = vmatpush1.msra.mxu0 0.0
    %2386 = vmatprep.subr.mxu0 0.0
    %2387 = vmatpush1.msra.mxu0 0.0
    %2388 = vmatprep.subr.mxu0 0.0
    %2389 = vmatpush1.msra.mxu0 0.0
    %2390 = vmatprep.subr.mxu0 0.0
    %2391 = vmatpush1.msra.mxu0 0.0
    %2392 = vmatprep.subr.mxu0 0.0
    %2393 = vmatpush1.msra.mxu0 0.0
    %2394 = vmatprep.subr.mxu0 0.0
    %2395 = vmatpush1.msra.mxu0 0.0
    %2396 = vmatprep.subr.mxu0 0.0
    %2397 = vmatpush1.msra.mxu0 0.0
    %2398 = vmatprep.subr.mxu0 0.0
    %2399 = vmatpush1.msra.mxu0 0.0
    %2400 = vmatprep.subr.mxu0 0.0
    %2401 = vmatpush1.msra.mxu0 0.0
    %2402 = vmatprep.subr.mxu0 0.0
    %2403 = vmatpush1.msra.mxu0 0.0
    %2404 = vmatprep.subr.mxu0 0.0
    %2405 = vmatpush1.msra.mxu0 0.0
    %2406 = vmatprep.subr.mxu0 0.0
    %2407 = vmatpush1.msra.mxu0 0.0
    %2408 = vmatprep.subr.mxu0 0.0
    %2409 = vmatpush1.msra.mxu0 0.0
    %2410 = vmatprep.subr.mxu0 0.0
    %2411 = vmatpush1.msra.mxu0 0.0
    %2412 = vmatprep.subr.mxu0 0.0
    %2413 = vmatpush1.msra.mxu0 0.0
    %2414 = vmatprep.mubr.f32.mxu0 0.0
    %2415 = vmatmul.mubr.f32.gmra.mrb[0].mxu0 %v2348
    %v2416 = vpop.f32.mrb[0].mxu0
    %v2417 = vadd.f32 0.0, %v2416
    %v2418 = vpop.f32.mrb[0].mxu0
    %2419 = vdwg.mxu0
    %2421 = vrot.lane.b32.xlu0 %v2417, 88
    %v2422 = vpop.permute.xlu0 %2421
    %v2424 = vadd.f32 %v191, %v2422
    %2426 = vrot.lane.b32.xlu0 %v2424, 64
    %v2427 = vpop.permute.xlu0 %2426
    %2429 = vst.msk [vmem:[#allocation14] sm:$0xff] %vm879, %v2427
    %2430 = vrot.lane.b32.xlu0 %v196, 64
    %v2431 = vpop.permute.xlu0 %2430
    %v2432 = vsel %vm199, %v2431, 0
    %v2435 = vsel %vm199, %v1728, 0
    %2437 = vmatprep.subr.mxu0 0.0
    %2438 = vmatpush1.xpose.msra.mxu0 %v2435
    %2439 = vmatprep.subr.mxu0 0.0
    %2440 = vmatpush1.xpose.msra.mxu0 0.0
    %2441 = vmatprep.subr.mxu0 0.0
    %2442 = vmatpush1.xpose.msra.mxu0 0.0
    %2443 = vmatprep.subr.mxu0 0.0
    %2444 = vmatpush1.xpose.msra.mxu0 0.0
    %2445 = vmatprep.subr.mxu0 0.0
    %2446 = vmatpush1.xpose.msra.mxu0 0.0
    %2447 = vmatprep.subr.mxu0 0.0
    %2448 = vmatpush1.xpose.msra.mxu0 0.0
    %2449 = vmatprep.subr.mxu0 0.0
    %2450 = vmatpush1.xpose.msra.mxu0 0.0
    %2451 = vmatprep.subr.mxu0 0.0
    %2452 = vmatpush1.xpose.msra.mxu0 0.0
    %2453 = vmatprep.subr.mxu0 0.0
    %2454 = vmatpush1.xpose.msra.mxu0 0.0
    %2455 = vmatprep.subr.mxu0 0.0
    %2456 = vmatpush1.xpose.msra.mxu0 0.0
    %2457 = vmatprep.subr.mxu0 0.0
    %2458 = vmatpush1.xpose.msra.mxu0 0.0
    %2459 = vmatprep.subr.mxu0 0.0
    %2460 = vmatpush1.xpose.msra.mxu0 0.0
    %2461 = vmatprep.subr.mxu0 0.0
    %2462 = vmatpush1.xpose.msra.mxu0 0.0
    %2463 = vmatprep.subr.mxu0 0.0
    %2464 = vmatpush1.xpose.msra.mxu0 0.0
    %2465 = vmatprep.subr.mxu0 0.0
    %2466 = vmatpush1.xpose.msra.mxu0 0.0
    %2467 = vmatprep.subr.mxu0 0.0
    %2468 = vmatpush1.xpose.msra.mxu0 0.0
    %2469 = vmatprep.subr.mxu0 0.0
    %2470 = vmatpush1.xpose.msra.mxu0 0.0
    %2471 = vmatprep.subr.mxu0 0.0
    %2472 = vmatpush1.xpose.msra.mxu0 0.0
    %2473 = vmatprep.subr.mxu0 0.0
    %2474 = vmatpush1.xpose.msra.mxu0 0.0
    %2475 = vmatprep.subr.mxu0 0.0
    %2476 = vmatpush1.xpose.msra.mxu0 0.0
    %2477 = vmatprep.subr.mxu0 0.0
    %2478 = vmatpush1.xpose.msra.mxu0 0.0
    %2479 = vmatprep.subr.mxu0 0.0
    %2480 = vmatpush1.xpose.msra.mxu0 0.0
    %2481 = vmatprep.subr.mxu0 0.0
    %2482 = vmatpush1.xpose.msra.mxu0 0.0
    %2483 = vmatprep.subr.mxu0 0.0
    %2484 = vmatpush1.xpose.msra.mxu0 0.0
    %2485 = vmatprep.subr.mxu0 0.0
    %2486 = vmatpush1.xpose.msra.mxu0 0.0
    %2487 = vmatprep.subr.mxu0 0.0
    %2488 = vmatpush1.xpose.msra.mxu0 0.0
    %2489 = vmatprep.subr.mxu0 0.0
    %2490 = vmatpush1.xpose.msra.mxu0 0.0
    %2491 = vmatprep.subr.mxu0 0.0
    %2492 = vmatpush1.xpose.msra.mxu0 0.0
    %2493 = vmatprep.subr.mxu0 0.0
    %2494 = vmatpush1.xpose.msra.mxu0 0.0
    %2495 = vmatprep.subr.mxu0 0.0
    %2496 = vmatpush1.xpose.msra.mxu0 0.0
    %2497 = vmatprep.subr.mxu0 0.0
    %2498 = vmatpush1.xpose.msra.mxu0 0.0
    %2499 = vmatprep.subr.mxu0 0.0
    %2500 = vmatpush1.xpose.msra.mxu0 0.0
    %2501 = vmatprep.mubr.f32.mxu0 0.0
    %2502 = vmatmul.mubr.f32.gmra.mrb[0].mxu0 %v2432
    %v2503 = vpop.f32.mrb[0].mxu0
    %v2504 = vadd.f32 0.0, %v2503
    %v2505 = vpop.f32.mrb[0].mxu0
    %2506 = vdwg.mxu0
    %v2507 = vsel %vm199, %v2504, -inf
    %2508 = vmax.xlane.f32.xlu0 %v2507
    %v2509 = vpop.xlane.xlu0 %2508
    %v2510 = vsub.f32 %v2504, %v2509
    %v2511 = vmul.f32 %v2510, 1.442695
    %v2512 = vpow.pop %v2511
    %v2513 = vsel %vm199, %v2512, 0.0
    %2514 = vadd.xlane.f32.xlu0 %v2513
    %v2515 = vpop.xlane.xlu0 %2514
    %v2516 = vrcp.pop %v2515
    %v2517 = vmul.f32 %v2512, %v2516
    %2518 = vrot.lane.b32.xlu0 %v1728, 96
    %v2519 = vpop.permute.xlu0 %2518
    %v2522 = vsel %vm199, %v2517, 0
    %2524 = vmatprep.subr.mxu0 0.0
    %2525 = vmatpush1.msra.mxu0 %v2519
    %2526 = vmatprep.subr.mxu0 0.0
    %2527 = vmatpush1.msra.mxu0 0.0
    %2528 = vmatprep.subr.mxu0 0.0
    %2529 = vmatpush1.msra.mxu0 0.0
    %2530 = vmatprep.subr.mxu0 0.0
    %2531 = vmatpush1.msra.mxu0 0.0
    %2532 = vmatprep.subr.mxu0 0.0
    %2533 = vmatpush1.msra.mxu0 0.0
    %2534 = vmatprep.subr.mxu0 0.0
    %2535 = vmatpush1.msra.mxu0 0.0
    %2536 = vmatprep.subr.mxu0 0.0
    %2537 = vmatpush1.msra.mxu0 0.0
    %2538 = vmatprep.subr.mxu0 0.0
    %2539 = vmatpush1.msra.mxu0 0.0
    %2540 = vmatprep.subr.mxu0 0.0
    %2541 = vmatpush1.msra.mxu0 0.0
    %2542 = vmatprep.subr.mxu0 0.0
    %2543 = vmatpush1.msra.mxu0 0.0
    %2544 = vmatprep.subr.mxu0 0.0
    %2545 = vmatpush1.msra.mxu0 0.0
    %2546 = vmatprep.subr.mxu0 0.0
    %2547 = vmatpush1.msra.mxu0 0.0
    %2548 = vmatprep.subr.mxu0 0.0
    %2549 = vmatpush1.msra.mxu0 0.0
    %2550 = vmatprep.subr.mxu0 0.0
    %2551 = vmatpush1.msra.mxu0 0.0
    %2552 = vmatprep.subr.mxu0 0.0
    %2553 = vmatpush1.msra.mxu0 0.0
    %2554 = vmatprep.subr.mxu0 0.0
    %2555 = vmatpush1.msra.mxu0 0.0
    %2556 = vmatprep.subr.mxu0 0.0
    %2557 = vmatpush1.msra.mxu0 0.0
    %2558 = vmatprep.subr.mxu0 0.0
    %2559 = vmatpush1.msra.mxu0 0.0
    %2560 = vmatprep.subr.mxu0 0.0
    %2561 = vmatpush1.msra.mxu0 0.0
    %2562 = vmatprep.subr.mxu0 0.0
    %2563 = vmatpush1.msra.mxu0 0.0
    %2564 = vmatprep.subr.mxu0 0.0
    %2565 = vmatpush1.msra.mxu0 0.0
    %2566 = vmatprep.subr.mxu0 0.0
    %2567 = vmatpush1.msra.mxu0 0.0
    %2568 = vmatprep.subr.mxu0 0.0
    %2569 = vmatpush1.msra.mxu0 0.0
    %2570 = vmatprep.subr.mxu0 0.0
    %2571 = vmatpush1.msra.mxu0 0.0
    %2572 = vmatprep.subr.mxu0 0.0
    %2573 = vmatpush1.msra.mxu0 0.0
    %2574 = vmatprep.subr.mxu0 0.0
    %2575 = vmatpush1.msra.mxu0 0.0
    %2576 = vmatprep.subr.mxu0 0.0
    %2577 = vmatpush1.msra.mxu0 0.0
    %2578 = vmatprep.subr.mxu0 0.0
    %2579 = vmatpush1.msra.mxu0 0.0
    %2580 = vmatprep.subr.mxu0 0.0
    %2581 = vmatpush1.msra.mxu0 0.0
    %2582 = vmatprep.subr.mxu0 0.0
    %2583 = vmatpush1.msra.mxu0 0.0
    %2584 = vmatprep.subr.mxu0 0.0
    %2585 = vmatpush1.msra.mxu0 0.0
    %2586 = vmatprep.subr.mxu0 0.0
    %2587 = vmatpush1.msra.mxu0 0.0
    %2588 = vmatprep.mubr.f32.mxu0 0.0
    %2589 = vmatmul.mubr.f32.gmra.mrb[0].mxu0 %v2522
    %v2590 = vpop.f32.mrb[0].mxu0
    %v2591 = vadd.f32 0.0, %v2590
    %v2592 = vpop.f32.mrb[0].mxu0
    %2593 = vdwg.mxu0
    %2595 = vrot.lane.b32.xlu0 %v2591, 64
    %v2596 = vpop.permute.xlu0 %2595
    %v2598 = vadd.f32 %v196, %v2596
    %2600 = vrot.lane.b32.xlu0 %v2598, 64
    %v2601 = vpop.permute.xlu0 %2600
    %2603 = vst.msk [vmem:[#allocation14 + $0x8] sm:$0xff] %vm199, %v2601
    %2604 = vrot.lane.b32.xlu0 %v196, 56
    %v2605 = vpop.permute.xlu0 %2604
    %2606 = vrot.lane.b32.xlu0 %v1728, 120
    %v2607 = vpop.permute.xlu0 %2606
    %v2608 = vsel %vm199, %v2605, 0
    %v2610 = vsel %vm199, %v2607, 0
    %2612 = vmatprep.subr.mxu0 0.0
    %2613 = vmatpush1.xpose.msra.mxu0 %v2610
    %2614 = vmatprep.subr.mxu0 0.0
    %2615 = vmatpush1.xpose.msra.mxu0 0.0
    %2616 = vmatprep.subr.mxu0 0.0
    %2617 = vmatpush1.xpose.msra.mxu0 0.0
    %2618 = vmatprep.subr.mxu0 0.0
    %2619 = vmatpush1.xpose.msra.mxu0 0.0
    %2620 = vmatprep.subr.mxu0 0.0
    %2621 = vmatpush1.xpose.msra.mxu0 0.0
    %2622 = vmatprep.subr.mxu0 0.0
    %2623 = vmatpush1.xpose.msra.mxu0 0.0
    %2624 = vmatprep.subr.mxu0 0.0
    %2625 = vmatpush1.xpose.msra.mxu0 0.0
    %2626 = vmatprep.subr.mxu0 0.0
    %2627 = vmatpush1.xpose.msra.mxu0 0.0
    %2628 = vmatprep.subr.mxu0 0.0
    %2629 = vmatpush1.xpose.msra.mxu0 0.0
    %2630 = vmatprep.subr.mxu0 0.0
    %2631 = vmatpush1.xpose.msra.mxu0 0.0
    %2632 = vmatprep.subr.mxu0 0.0
    %2633 = vmatpush1.xpose.msra.mxu0 0.0
    %2634 = vmatprep.subr.mxu0 0.0
    %2635 = vmatpush1.xpose.msra.mxu0 0.0
    %2636 = vmatprep.subr.mxu0 0.0
    %2637 = vmatpush1.xpose.msra.mxu0 0.0
    %2638 = vmatprep.subr.mxu0 0.0
    %2639 = vmatpush1.xpose.msra.mxu0 0.0
    %2640 = vmatprep.subr.mxu0 0.0
    %2641 = vmatpush1.xpose.msra.mxu0 0.0
    %2642 = vmatprep.subr.mxu0 0.0
    %2643 = vmatpush1.xpose.msra.mxu0 0.0
    %2644 = vmatprep.subr.mxu0 0.0
    %2645 = vmatpush1.xpose.msra.mxu0 0.0
    %2646 = vmatprep.subr.mxu0 0.0
    %2647 = vmatpush1.xpose.msra.mxu0 0.0
    %2648 = vmatprep.subr.mxu0 0.0
    %2649 = vmatpush1.xpose.msra.mxu0 0.0
    %2650 = vmatprep.subr.mxu0 0.0
    %2651 = vmatpush1.xpose.msra.mxu0 0.0
    %2652 = vmatprep.subr.mxu0 0.0
    %2653 = vmatpush1.xpose.msra.mxu0 0.0
    %2654 = vmatprep.subr.mxu0 0.0
    %2655 = vmatpush1.xpose.msra.mxu0 0.0
    %2656 = vmatprep.subr.mxu0 0.0
    %2657 = vmatpush1.xpose.msra.mxu0 0.0
    %2658 = vmatprep.subr.mxu0 0.0
    %2659 = vmatpush1.xpose.msra.mxu0 0.0
    %2660 = vmatprep.subr.mxu0 0.0
    %2661 = vmatpush1.xpose.msra.mxu0 0.0
    %2662 = vmatprep.subr.mxu0 0.0
    %2663 = vmatpush1.xpose.msra.mxu0 0.0
    %2664 = vmatprep.subr.mxu0 0.0
    %2665 = vmatpush1.xpose.msra.mxu0 0.0
    %2666 = vmatprep.subr.mxu0 0.0
    %2667 = vmatpush1.xpose.msra.mxu0 0.0
    %2668 = vmatprep.subr.mxu0 0.0
    %2669 = vmatpush1.xpose.msra.mxu0 0.0
    %2670 = vmatprep.subr.mxu0 0.0
    %2671 = vmatpush1.xpose.msra.mxu0 0.0
    %2672 = vmatprep.subr.mxu0 0.0
    %2673 = vmatpush1.xpose.msra.mxu0 0.0
    %2674 = vmatprep.subr.mxu0 0.0
    %2675 = vmatpush1.xpose.msra.mxu0 0.0
    %2676 = vmatprep.mubr.f32.mxu0 0.0
    %2677 = vmatmul.mubr.f32.gmra.mrb[0].mxu0 %v2608
    %v2678 = vpop.f32.mrb[0].mxu0
    %v2679 = vadd.f32 0.0, %v2678
    %v2680 = vpop.f32.mrb[0].mxu0
    %2681 = vdwg.mxu0
    %v2682 = vsel %vm199, %v2679, -inf
    %2683 = vmax.xlane.f32.xlu0 %v2682
    %v2684 = vpop.xlane.xlu0 %2683
    %v2685 = vsub.f32 %v2679, %v2684
    %v2686 = vmul.f32 %v2685, 1.442695
    %v2687 = vpow.pop %v2686
    %v2688 = vsel %vm199, %v2687, 0.0
    %2689 = vadd.xlane.f32.xlu0 %v2688
    %v2690 = vpop.xlane.xlu0 %2689
    %v2691 = vrcp.pop %v2690
    %v2692 = vmul.f32 %v2687, %v2691
    %2693 = vrot.lane.b32.xlu0 %v1728, 88
    %v2694 = vpop.permute.xlu0 %2693
    %v2697 = vsel %vm199, %v2692, 0
    %2699 = vmatprep.subr.mxu0 0.0
    %2700 = vmatpush1.msra.mxu0 %v2694
    %2701 = vmatprep.subr.mxu0 0.0
    %2702 = vmatpush1.msra.mxu0 0.0
    %2703 = vmatprep.subr.mxu0 0.0
    %2704 = vmatpush1.msra.mxu0 0.0
    %2705 = vmatprep.subr.mxu0 0.0
    %2706 = vmatpush1.msra.mxu0 0.0
    %2707 = vmatprep.subr.mxu0 0.0
    %2708 = vmatpush1.msra.mxu0 0.0
    %2709 = vmatprep.subr.mxu0 0.0
    %2710 = vmatpush1.msra.mxu0 0.0
    %2711 = vmatprep.subr.mxu0 0.0
    %2712 = vmatpush1.msra.mxu0 0.0
    %2713 = vmatprep.subr.mxu0 0.0
    %2714 = vmatpush1.msra.mxu0 0.0
    %2715 = vmatprep.subr.mxu0 0.0
    %2716 = vmatpush1.msra.mxu0 0.0
    %2717 = vmatprep.subr.mxu0 0.0
    %2718 = vmatpush1.msra.mxu0 0.0
    %2719 = vmatprep.subr.mxu0 0.0
    %2720 = vmatpush1.msra.mxu0 0.0
    %2721 = vmatprep.subr.mxu0 0.0
    %2722 = vmatpush1.msra.mxu0 0.0
    %2723 = vmatprep.subr.mxu0 0.0
    %2724 = vmatpush1.msra.mxu0 0.0
    %2725 = vmatprep.subr.mxu0 0.0
    %2726 = vmatpush1.msra.mxu0 0.0
    %2727 = vmatprep.subr.mxu0 0.0
    %2728 = vmatpush1.msra.mxu0 0.0
    %2729 = vmatprep.subr.mxu0 0.0
    %2730 = vmatpush1.msra.mxu0 0.0
    %2731 = vmatprep.subr.mxu0 0.0
    %2732 = vmatpush1.msra.mxu0 0.0
    %2733 = vmatprep.subr.mxu0 0.0
    %2734 = vmatpush1.msra.mxu0 0.0
    %2735 = vmatprep.subr.mxu0 0.0
    %2736 = vmatpush1.msra.mxu0 0.0
    %2737 = vmatprep.subr.mxu0 0.0
    %2738 = vmatpush1.msra.mxu0 0.0
    %2739 = vmatprep.subr.mxu0 0.0
    %2740 = vmatpush1.msra.mxu0 0.0
    %2741 = vmatprep.subr.mxu0 0.0
    %2742 = vmatpush1.msra.mxu0 0.0
    %2743 = vmatprep.subr.mxu0 0.0
    %2744 = vmatpush1.msra.mxu0 0.0
    %2745 = vmatprep.subr.mxu0 0.0
    %2746 = vmatpush1.msra.mxu0 0.0
    %2747 = vmatprep.subr.mxu0 0.0
    %2748 = vmatpush1.msra.mxu0 0.0
    %2749 = vmatprep.subr.mxu0 0.0
    %2750 = vmatpush1.msra.mxu0 0.0
    %2751 = vmatprep.subr.mxu0 0.0
    %2752 = vmatpush1.msra.mxu0 0.0
    %2753 = vmatprep.subr.mxu0 0.0
    %2754 = vmatpush1.msra.mxu0 0.0
    %2755 = vmatprep.subr.mxu0 0.0
    %2756 = vmatpush1.msra.mxu0 0.0
    %2757 = vmatprep.subr.mxu0 0.0
    %2758 = vmatpush1.msra.mxu0 0.0
    %2759 = vmatprep.subr.mxu0 0.0
    %2760 = vmatpush1.msra.mxu0 0.0
    %2761 = vmatprep.subr.mxu0 0.0
    %2762 = vmatpush1.msra.mxu0 0.0
    %2763 = vmatprep.mubr.f32.mxu0 0.0
    %2764 = vmatmul.mubr.f32.gmra.mrb[0].mxu0 %v2697
    %v2765 = vpop.f32.mrb[0].mxu0
    %v2766 = vadd.f32 0.0, %v2765
    %v2767 = vpop.f32.mrb[0].mxu0
    %2768 = vdwg.mxu0
    %2770 = vrot.lane.b32.xlu0 %v2766, 72
    %v2771 = vpop.permute.xlu0 %2770
    %v2773 = vadd.f32 %v196, %v2771
    %2775 = vrot.lane.b32.xlu0 %v2773, 64
    %v2776 = vpop.permute.xlu0 %2775
    %2778 = vst.msk [vmem:[#allocation14 + $0x8] sm:$0xff] %vm535, %v2776
    %2779 = vrot.lane.b32.xlu0 %v196, 48
    %v2780 = vpop.permute.xlu0 %2779
    %2781 = vrot.lane.b32.xlu0 %v1728, 112
    %v2782 = vpop.permute.xlu0 %2781
    %v2783 = vsel %vm199, %v2780, 0
    %v2785 = vsel %vm199, %v2782, 0
    %2787 = vmatprep.subr.mxu0 0.0
    %2788 = vmatpush1.xpose.msra.mxu0 %v2785
    %2789 = vmatprep.subr.mxu0 0.0
    %2790 = vmatpush1.xpose.msra.mxu0 0.0
    %2791 = vmatprep.subr.mxu0 0.0
    %2792 = vmatpush1.xpose.msra.mxu0 0.0
    %2793 = vmatprep.subr.mxu0 0.0
    %2794 = vmatpush1.xpose.msra.mxu0 0.0
    %2795 = vmatprep.subr.mxu0 0.0
    %2796 = vmatpush1.xpose.msra.mxu0 0.0
    %2797 = vmatprep.subr.mxu0 0.0
    %2798 = vmatpush1.xpose.msra.mxu0 0.0
    %2799 = vmatprep.subr.mxu0 0.0
    %2800 = vmatpush1.xpose.msra.mxu0 0.0
    %2801 = vmatprep.subr.mxu0 0.0
    %2802 = vmatpush1.xpose.msra.mxu0 0.0
    %2803 = vmatprep.subr.mxu0 0.0
    %2804 = vmatpush1.xpose.msra.mxu0 0.0
    %2805 = vmatprep.subr.mxu0 0.0
    %2806 = vmatpush1.xpose.msra.mxu0 0.0
    %2807 = vmatprep.subr.mxu0 0.0
    %2808 = vmatpush1.xpose.msra.mxu0 0.0
    %2809 = vmatprep.subr.mxu0 0.0
    %2810 = vmatpush1.xpose.msra.mxu0 0.0
    %2811 = vmatprep.subr.mxu0 0.0
    %2812 = vmatpush1.xpose.msra.mxu0 0.0
    %2813 = vmatprep.subr.mxu0 0.0
    %2814 = vmatpush1.xpose.msra.mxu0 0.0
    %2815 = vmatprep.subr.mxu0 0.0
    %2816 = vmatpush1.xpose.msra.mxu0 0.0
    %2817 = vmatprep.subr.mxu0 0.0
    %2818 = vmatpush1.xpose.msra.mxu0 0.0
    %2819 = vmatprep.subr.mxu0 0.0
    %2820 = vmatpush1.xpose.msra.mxu0 0.0
    %2821 = vmatprep.subr.mxu0 0.0
    %2822 = vmatpush1.xpose.msra.mxu0 0.0
    %2823 = vmatprep.subr.mxu0 0.0
    %2824 = vmatpush1.xpose.msra.mxu0 0.0
    %2825 = vmatprep.subr.mxu0 0.0
    %2826 = vmatpush1.xpose.msra.mxu0 0.0
    %2827 = vmatprep.subr.mxu0 0.0
    %2828 = vmatpush1.xpose.msra.mxu0 0.0
    %2829 = vmatprep.subr.mxu0 0.0
    %2830 = vmatpush1.xpose.msra.mxu0 0.0
    %2831 = vmatprep.subr.mxu0 0.0
    %2832 = vmatpush1.xpose.msra.mxu0 0.0
    %2833 = vmatprep.subr.mxu0 0.0
    %2834 = vmatpush1.xpose.msra.mxu0 0.0
    %2835 = vmatprep.subr.mxu0 0.0
    %2836 = vmatpush1.xpose.msra.mxu0 0.0
    %2837 = vmatprep.subr.mxu0 0.0
    %2838 = vmatpush1.xpose.msra.mxu0 0.0
    %2839 = vmatprep.subr.mxu0 0.0
    %2840 = vmatpush1.xpose.msra.mxu0 0.0
    %2841 = vmatprep.subr.mxu0 0.0
    %2842 = vmatpush1.xpose.msra.mxu0 0.0
    %2843 = vmatprep.subr.mxu0 0.0
    %2844 = vmatpush1.xpose.msra.mxu0 0.0
    %2845 = vmatprep.subr.mxu0 0.0
    %2846 = vmatpush1.xpose.msra.mxu0 0.0
    %2847 = vmatprep.subr.mxu0 0.0
    %2848 = vmatpush1.xpose.msra.mxu0 0.0
    %2849 = vmatprep.subr.mxu0 0.0
    %2850 = vmatpush1.xpose.msra.mxu0 0.0
    %2851 = vmatprep.mubr.f32.mxu0 0.0
    %2852 = vmatmul.mubr.f32.gmra.mrb[0].mxu0 %v2783
    %v2853 = vpop.f32.mrb[0].mxu0
    %v2854 = vadd.f32 0.0, %v2853
    %v2855 = vpop.f32.mrb[0].mxu0
    %2856 = vdwg.mxu0
    %v2857 = vsel %vm199, %v2854, -inf
    %2858 = vmax.xlane.f32.xlu0 %v2857
    %v2859 = vpop.xlane.xlu0 %2858
    %v2860 = vsub.f32 %v2854, %v2859
    %v2861 = vmul.f32 %v2860, 1.442695
    %v2862 = vpow.pop %v2861
    %v2863 = vsel %vm199, %v2862, 0.0
    %2864 = vadd.xlane.f32.xlu0 %v2863
    %v2865 = vpop.xlane.xlu0 %2864
    %v2866 = vrcp.pop %v2865
    %v2867 = vmul.f32 %v2862, %v2866
    %2868 = vrot.lane.b32.xlu0 %v1728, 80
    %v2869 = vpop.permute.xlu0 %2868
    %v2872 = vsel %vm199, %v2867, 0
    %2874 = vmatprep.subr.mxu0 0.0
    %2875 = vmatpush1.msra.mxu0 %v2869
    %2876 = vmatprep.subr.mxu0 0.0
    %2877 = vmatpush1.msra.mxu0 0.0
    %2878 = vmatprep.subr.mxu0 0.0
    %2879 = vmatpush1.msra.mxu0 0.0
    %2880 = vmatprep.subr.mxu0 0.0
    %2881 = vmatpush1.msra.mxu0 0.0
    %2882 = vmatprep.subr.mxu0 0.0
    %2883 = vmatpush1.msra.mxu0 0.0
    %2884 = vmatprep.subr.mxu0 0.0
    %2885 = vmatpush1.msra.mxu0 0.0
    %2886 = vmatprep.subr.mxu0 0.0
    %2887 = vmatpush1.msra.mxu0 0.0
    %2888 = vmatprep.subr.mxu0 0.0
    %2889 = vmatpush1.msra.mxu0 0.0
    %2890 = vmatprep.subr.mxu0 0.0
    %2891 = vmatpush1.msra.mxu0 0.0
    %2892 = vmatprep.subr.mxu0 0.0
    %2893 = vmatpush1.msra.mxu0 0.0
    %2894 = vmatprep.subr.mxu0 0.0
    %2895 = vmatpush1.msra.mxu0 0.0
    %2896 = vmatprep.subr.mxu0 0.0
    %2897 = vmatpush1.msra.mxu0 0.0
    %2898 = vmatprep.subr.mxu0 0.0
    %2899 = vmatpush1.msra.mxu0 0.0
    %2900 = vmatprep.subr.mxu0 0.0
    %2901 = vmatpush1.msra.mxu0 0.0
    %2902 = vmatprep.subr.mxu0 0.0
    %2903 = vmatpush1.msra.mxu0 0.0
    %2904 = vmatprep.subr.mxu0 0.0
    %2905 = vmatpush1.msra.mxu0 0.0
    %2906 = vmatprep.subr.mxu0 0.0
    %2907 = vmatpush1.msra.mxu0 0.0
    %2908 = vmatprep.subr.mxu0 0.0
    %2909 = vmatpush1.msra.mxu0 0.0
    %2910 = vmatprep.subr.mxu0 0.0
    %2911 = vmatpush1.msra.mxu0 0.0
    %2912 = vmatprep.subr.mxu0 0.0
    %2913 = vmatpush1.msra.mxu0 0.0
    %2914 = vmatprep.subr.mxu0 0.0
    %2915 = vmatpush1.msra.mxu0 0.0
    %2916 = vmatprep.subr.mxu0 0.0
    %2917 = vmatpush1.msra.mxu0 0.0
    %2918 = vmatprep.subr.mxu0 0.0
    %2919 = vmatpush1.msra.mxu0 0.0
    %2920 = vmatprep.subr.mxu0 0.0
    %2921 = vmatpush1.msra.mxu0 0.0
    %2922 = vmatprep.subr.mxu0 0.0
    %2923 = vmatpush1.msra.mxu0 0.0
    %2924 = vmatprep.subr.mxu0 0.0
    %2925 = vmatpush1.msra.mxu0 0.0
    %2926 = vmatprep.subr.mxu0 0.0
    %2927 = vmatpush1.msra.mxu0 0.0
    %2928 = vmatprep.subr.mxu0 0.0
    %2929 = vmatpush1.msra.mxu0 0.0
    %2930 = vmatprep.subr.mxu0 0.0
    %2931 = vmatpush1.msra.mxu0 0.0
    %2932 = vmatprep.subr.mxu0 0.0
    %2933 = vmatpush1.msra.mxu0 0.0
    %2934 = vmatprep.subr.mxu0 0.0
    %2935 = vmatpush1.msra.mxu0 0.0
    %2936 = vmatprep.subr.mxu0 0.0
    %2937 = vmatpush1.msra.mxu0 0.0
    %2938 = vmatprep.mubr.f32.mxu0 0.0
    %2939 = vmatmul.mubr.f32.gmra.mrb[0].mxu0 %v2872
    %v2940 = vpop.f32.mrb[0].mxu0
    %v2941 = vadd.f32 0.0, %v2940
    %v2942 = vpop.f32.mrb[0].mxu0
    %2943 = vdwg.mxu0
    %2945 = vrot.lane.b32.xlu0 %v2941, 80
    %v2946 = vpop.permute.xlu0 %2945
    %v2948 = vadd.f32 %v196, %v2946
    %2950 = vrot.lane.b32.xlu0 %v2948, 64
    %v2951 = vpop.permute.xlu0 %2950
    %2953 = vst.msk [vmem:[#allocation14 + $0x8] sm:$0xff] %vm707, %v2951
    %2954 = vrot.lane.b32.xlu0 %v196, 40
    %v2955 = vpop.permute.xlu0 %2954
    %2956 = vrot.lane.b32.xlu0 %v1728, 104
    %v2957 = vpop.permute.xlu0 %2956
    %v2958 = vsel %vm199, %v2955, 0
    %v2960 = vsel %vm199, %v2957, 0
    %2962 = vmatprep.subr.mxu0 0.0
    %2963 = vmatpush1.xpose.msra.mxu0 %v2960
    %2964 = vmatprep.subr.mxu0 0.0
    %2965 = vmatpush1.xpose.msra.mxu0 0.0
    %2966 = vmatprep.subr.mxu0 0.0
    %2967 = vmatpush1.xpose.msra.mxu0 0.0
    %2968 = vmatprep.subr.mxu0 0.0
    %2969 = vmatpush1.xpose.msra.mxu0 0.0
    %2970 = vmatprep.subr.mxu0 0.0
    %2971 = vmatpush1.xpose.msra.mxu0 0.0
    %2972 = vmatprep.subr.mxu0 0.0
    %2973 = vmatpush1.xpose.msra.mxu0 0.0
    %2974 = vmatprep.subr.mxu0 0.0
    %2975 = vmatpush1.xpose.msra.mxu0 0.0
    %2976 = vmatprep.subr.mxu0 0.0
    %2977 = vmatpush1.xpose.msra.mxu0 0.0
    %2978 = vmatprep.subr.mxu0 0.0
    %2979 = vmatpush1.xpose.msra.mxu0 0.0
    %2980 = vmatprep.subr.mxu0 0.0
    %2981 = vmatpush1.xpose.msra.mxu0 0.0
    %2982 = vmatprep.subr.mxu0 0.0
    %2983 = vmatpush1.xpose.msra.mxu0 0.0
    %2984 = vmatprep.subr.mxu0 0.0
    %2985 = vmatpush1.xpose.msra.mxu0 0.0
    %2986 = vmatprep.subr.mxu0 0.0
    %2987 = vmatpush1.xpose.msra.mxu0 0.0
    %2988 = vmatprep.subr.mxu0 0.0
    %2989 = vmatpush1.xpose.msra.mxu0 0.0
    %2990 = vmatprep.subr.mxu0 0.0
    %2991 = vmatpush1.xpose.msra.mxu0 0.0
    %2992 = vmatprep.subr.mxu0 0.0
    %2993 = vmatpush1.xpose.msra.mxu0 0.0
    %2994 = vmatprep.subr.mxu0 0.0
    %2995 = vmatpush1.xpose.msra.mxu0 0.0
    %2996 = vmatprep.subr.mxu0 0.0
    %2997 = vmatpush1.xpose.msra.mxu0 0.0
    %2998 = vmatprep.subr.mxu0 0.0
    %2999 = vmatpush1.xpose.msra.mxu0 0.0
    %3000 = vmatprep.subr.mxu0 0.0
    %3001 = vmatpush1.xpose.msra.mxu0 0.0
    %3002 = vmatprep.subr.mxu0 0.0
    %3003 = vmatpush1.xpose.msra.mxu0 0.0
    %3004 = vmatprep.subr.mxu0 0.0
    %3005 = vmatpush1.xpose.msra.mxu0 0.0
    %3006 = vmatprep.subr.mxu0 0.0
    %3007 = vmatpush1.xpose.msra.mxu0 0.0
    %3008 = vmatprep.subr.mxu0 0.0
    %3009 = vmatpush1.xpose.msra.mxu0 0.0
    %3010 = vmatprep.subr.mxu0 0.0
    %3011 = vmatpush1.xpose.msra.mxu0 0.0
    %3012 = vmatprep.subr.mxu0 0.0
    %3013 = vmatpush1.xpose.msra.mxu0 0.0
    %3014 = vmatprep.subr.mxu0 0.0
    %3015 = vmatpush1.xpose.msra.mxu0 0.0
    %3016 = vmatprep.subr.mxu0 0.0
    %3017 = vmatpush1.xpose.msra.mxu0 0.0
    %3018 = vmatprep.subr.mxu0 0.0
    %3019 = vmatpush1.xpose.msra.mxu0 0.0
    %3020 = vmatprep.subr.mxu0 0.0
    %3021 = vmatpush1.xpose.msra.mxu0 0.0
    %3022 = vmatprep.subr.mxu0 0.0
    %3023 = vmatpush1.xpose.msra.mxu0 0.0
    %3024 = vmatprep.subr.mxu0 0.0
    %3025 = vmatpush1.xpose.msra.mxu0 0.0
    %3026 = vmatprep.mubr.f32.mxu0 0.0
    %3027 = vmatmul.mubr.f32.gmra.mrb[0].mxu0 %v2958
    %v3028 = vpop.f32.mrb[0].mxu0
    %v3029 = vadd.f32 0.0, %v3028
    %v3030 = vpop.f32.mrb[0].mxu0
    %3031 = vdwg.mxu0
    %v3032 = vsel %vm199, %v3029, -inf
    %3033 = vmax.xlane.f32.xlu0 %v3032
    %v3034 = vpop.xlane.xlu0 %3033
    %v3035 = vsub.f32 %v3029, %v3034
    %v3036 = vmul.f32 %v3035, 1.442695
    %v3037 = vpow.pop %v3036
    %v3038 = vsel %vm199, %v3037, 0.0
    %3039 = vadd.xlane.f32.xlu0 %v3038
    %v3040 = vpop.xlane.xlu0 %3039
    %v3041 = vrcp.pop %v3040
    %v3042 = vmul.f32 %v3037, %v3041
    %3043 = vrot.lane.b32.xlu0 %v1728, 72
    %v3044 = vpop.permute.xlu0 %3043
    %v3047 = vsel %vm199, %v3042, 0
    %3049 = vmatprep.subr.mxu0 0.0
    %3050 = vmatpush1.msra.mxu0 %v3044
    %3051 = vmatprep.subr.mxu0 0.0
    %3052 = vmatpush1.msra.mxu0 0.0
    %3053 = vmatprep.subr.mxu0 0.0
    %3054 = vmatpush1.msra.mxu0 0.0
    %3055 = vmatprep.subr.mxu0 0.0
    %3056 = vmatpush1.msra.mxu0 0.0
    %3057 = vmatprep.subr.mxu0 0.0
    %3058 = vmatpush1.msra.mxu0 0.0
    %3059 = vmatprep.subr.mxu0 0.0
    %3060 = vmatpush1.msra.mxu0 0.0
    %3061 = vmatprep.subr.mxu0 0.0
    %3062 = vmatpush1.msra.mxu0 0.0
    %3063 = vmatprep.subr.mxu0 0.0
    %3064 = vmatpush1.msra.mxu0 0.0
    %3065 = vmatprep.subr.mxu0 0.0
    %3066 = vmatpush1.msra.mxu0 0.0
    %3067 = vmatprep.subr.mxu0 0.0
    %3068 = vmatpush1.msra.mxu0 0.0
    %3069 = vmatprep.subr.mxu0 0.0
    %3070 = vmatpush1.msra.mxu0 0.0
    %3071 = vmatprep.subr.mxu0 0.0
    %3072 = vmatpush1.msra.mxu0 0.0
    %3073 = vmatprep.subr.mxu0 0.0
    %3074 = vmatpush1.msra.mxu0 0.0
    %3075 = vmatprep.subr.mxu0 0.0
    %3076 = vmatpush1.msra.mxu0 0.0
    %3077 = vmatprep.subr.mxu0 0.0
    %3078 = vmatpush1.msra.mxu0 0.0
    %3079 = vmatprep.subr.mxu0 0.0
    %3080 = vmatpush1.msra.mxu0 0.0
    %3081 = vmatprep.subr.mxu0 0.0
    %3082 = vmatpush1.msra.mxu0 0.0
    %3083 = vmatprep.subr.mxu0 0.0
    %3084 = vmatpush1.msra.mxu0 0.0
    %3085 = vmatprep.subr.mxu0 0.0
    %3086 = vmatpush1.msra.mxu0 0.0
    %3087 = vmatprep.subr.mxu0 0.0
    %3088 = vmatpush1.msra.mxu0 0.0
    %3089 = vmatprep.subr.mxu0 0.0
    %3090 = vmatpush1.msra.mxu0 0.0
    %3091 = vmatprep.subr.mxu0 0.0
    %3092 = vmatpush1.msra.mxu0 0.0
    %3093 = vmatprep.subr.mxu0 0.0
    %3094 = vmatpush1.msra.mxu0 0.0
    %3095 = vmatprep.subr.mxu0 0.0
    %3096 = vmatpush1.msra.mxu0 0.0
    %3097 = vmatprep.subr.mxu0 0.0
    %3098 = vmatpush1.msra.mxu0 0.0
    %3099 = vmatprep.subr.mxu0 0.0
    %3100 = vmatpush1.msra.mxu0 0.0
    %3101 = vmatprep.subr.mxu0 0.0
    %3102 = vmatpush1.msra.mxu0 0.0
    %3103 = vmatprep.subr.mxu0 0.0
    %3104 = vmatpush1.msra.mxu0 0.0
    %3105 = vmatprep.subr.mxu0 0.0
    %3106 = vmatpush1.msra.mxu0 0.0
    %3107 = vmatprep.subr.mxu0 0.0
    %3108 = vmatpush1.msra.mxu0 0.0
    %3109 = vmatprep.subr.mxu0 0.0
    %3110 = vmatpush1.msra.mxu0 0.0
    %3111 = vmatprep.subr.mxu0 0.0
    %3112 = vmatpush1.msra.mxu0 0.0
    %3113 = vmatprep.mubr.f32.mxu0 0.0
    %3114 = vmatmul.mubr.f32.gmra.mrb[0].mxu0 %v3047
    %v3115 = vpop.f32.mrb[0].mxu0
    %v3116 = vadd.f32 0.0, %v3115
    %v3117 = vpop.f32.mrb[0].mxu0
    %3118 = vdwg.mxu0
    %3120 = vrot.lane.b32.xlu0 %v3116, 88
    %v3121 = vpop.permute.xlu0 %3120
    %v3123 = vadd.f32 %v196, %v3121
    %3125 = vrot.lane.b32.xlu0 %v3123, 64
    %v3126 = vpop.permute.xlu0 %3125
    %3128 = vst.msk [vmem:[#allocation14 + $0x8] sm:$0xff] %vm879, %v3126
    %v3129 = vld [vmem:[#allocation14] sm:$0xff]
    %v3130 = vld [vmem:[#allocation14 + $0x8] sm:$0xff]
    %v3131 = vld [vmem:[%s6 + $0x3] sm:$0x1]
    %v3132 = vld [vmem:[#allocation12] sm:$0xff]
    %v3133 = vld [vmem:[#allocation12 + $0x8] sm:$0xff]
    %v3134 = vld [vmem:[#allocation12 + $0x10] sm:$0xff]
    %v3135 = vld [vmem:[#allocation12 + $0x18] sm:$0xff]
    %v3136 = vlaneseq
    %v3137 = vshrl.u32 %v3136, 7
    %v3138 = vsub.s32 0, %v3137
    %v3139 = vrot.slane %v3131, %v3138
    %v3141 = vsel %vm1555, %v3129, 0
    %v3144 = vsel %vm1555, %v3130, 0
    %3146 = vmatprep.subr.mxu0 0.0
    %3147 = vmatpush1.msra.mxu0 %v3132
    %3148 = vmatprep.subr.mxu0 0.0
    %3149 = vmatpush1.msra.mxu0 %v3133
    %3150 = vmatprep.subr.mxu0 0.0
    %3151 = vmatpush1.msra.mxu0 %v3134
    %3152 = vmatprep.subr.mxu0 0.0
    %3153 = vmatpush1.msra.mxu0 %v3135
    %3154 = vmatprep.subr.mxu0 0.0
    %3155 = vmatpush1.msra.mxu0 0.0
    %3156 = vmatprep.subr.mxu0 0.0
    %3157 = vmatpush1.msra.mxu0 0.0
    %3158 = vmatprep.subr.mxu0 0.0
    %3159 = vmatpush1.msra.mxu0 0.0
    %3160 = vmatprep.subr.mxu0 0.0
    %3161 = vmatpush1.msra.mxu0 0.0
    %3162 = vmatprep.subr.mxu0 0.0
    %3163 = vmatpush1.msra.mxu0 0.0
    %3164 = vmatprep.subr.mxu0 0.0
    %3165 = vmatpush1.msra.mxu0 0.0
    %3166 = vmatprep.subr.mxu0 0.0
    %3167 = vmatpush1.msra.mxu0 0.0
    %3168 = vmatprep.subr.mxu0 0.0
    %3169 = vmatpush1.msra.mxu0 0.0
    %3170 = vmatprep.subr.mxu0 0.0
    %3171 = vmatpush1.msra.mxu0 0.0
    %3172 = vmatprep.subr.mxu0 0.0
    %3173 = vmatpush1.msra.mxu0 0.0
    %3174 = vmatprep.subr.mxu0 0.0
    %3175 = vmatpush1.msra.mxu0 0.0
    %3176 = vmatprep.subr.mxu0 0.0
    %3177 = vmatpush1.msra.mxu0 0.0
    %3178 = vmatprep.subr.mxu0 0.0
    %3179 = vmatpush1.msra.mxu0 0.0
    %3180 = vmatprep.subr.mxu0 0.0
    %3181 = vmatpush1.msra.mxu0 0.0
    %3182 = vmatprep.subr.mxu0 0.0
    %3183 = vmatpush1.msra.mxu0 0.0
    %3184 = vmatprep.subr.mxu0 0.0
    %3185 = vmatpush1.msra.mxu0 0.0
    %3186 = vmatprep.subr.mxu0 0.0
    %3187 = vmatpush1.msra.mxu0 0.0
    %3188 = vmatprep.subr.mxu0 0.0
    %3189 = vmatpush1.msra.mxu0 0.0
    %3190 = vmatprep.subr.mxu0 0.0
    %3191 = vmatpush1.msra.mxu0 0.0
    %3192 = vmatprep.subr.mxu0 0.0
    %3193 = vmatpush1.msra.mxu0 0.0
    %3194 = vmatprep.subr.mxu0 0.0
    %3195 = vmatpush1.msra.mxu0 0.0
    %3196 = vmatprep.subr.mxu0 0.0
    %3197 = vmatpush1.msra.mxu0 0.0
    %3198 = vmatprep.subr.mxu0 0.0
    %3199 = vmatpush1.msra.mxu0 0.0
    %3200 = vmatprep.subr.mxu0 0.0
    %3201 = vmatpush1.msra.mxu0 0.0
    %3202 = vmatprep.subr.mxu0 0.0
    %3203 = vmatpush1.msra.mxu0 0.0
    %3204 = vmatprep.subr.mxu0 0.0
    %3205 = vmatpush1.msra.mxu0 0.0
    %3206 = vmatprep.subr.mxu0 0.0
    %3207 = vmatpush1.msra.mxu0 0.0
    %3208 = vmatprep.subr.mxu0 0.0
    %3209 = vmatpush1.msra.mxu0 0.0
    %3210 = vmatprep.mubr.f32.mxu0 0.0
    %3211 = vmatmul.mubr.f32.gmra.mrb[0].mxu0 %v3141
    %v3212 = vpop.f32.mrb[0].mxu0
    %v3213 = vadd.f32 %v3139, %v3212
    %v3214 = vpop.f32.mrb[0].mxu0
    %3215 = vmatprep.mubr.f32.mxu0 0.0
    %3216 = vmatmul.mubr.f32.gmra.mrb[0].mxu0 %v3144
    %v3217 = vpop.f32.mrb[0].mxu0
    %v3218 = vadd.f32 %v3139, %v3217
    %v3219 = vpop.f32.mrb[0].mxu0
    %3220 = vdwg.mxu0
    %v3221 = vmax.f32 %v3213, 0.0
    %v3222 = vmax.f32 %v3218, 0.0
    %v3223 = vadd.f32 %v3129, %v3221
    %v3224 = vadd.f32 %v3130, %v3222
    %3225 = vst.msk [vmem:[#allocation14] sm:$0xff] %vm1555, %v3223
    %3226 = vst.msk [vmem:[#allocation14 + $0x8] sm:$0xff] %vm1555, %v3224
    // Predicated region
    $region54: #{tpu_custom_call.1} parent=1 // pred_check
      _
    $region55: #{tpu_custom_call.1} parent=1 // pred_check_branch
      %3228 = sbr.rel (0) target = $region57
    $region56: #{tpu_custom_call.1} parent=1 // pred_region
      %s3230 = ssub.s32 256, 256
      %3231 = vsyncadd [#allocation5], %s3230
      %s3232 = sshll.u32 [#allocation14], 4
      %s3233 = int_to_ptr.vmem [resolvable:$true] %s3232
      %3238 = dma.vmem_to_hbm [thread:$0]  %s3233, 256, %s7, [#allocation5], 128, 128, 8
    $region57: #{tpu_custom_call.1} parent=1 // pred_fallthru
      _
    // Predicated region
    $region58: #{tpu_custom_call.1} parent=1 // pred_check
      _
    $region59: #{tpu_custom_call.1} parent=1 // pred_check_branch
      %3240 = sbr.rel (0) target = $region61
    $region60: #{tpu_custom_call.1} parent=1 // pred_region
      %3241 = dma.done [#allocation5], 256
    $region61: #{tpu_custom_call.1} parent=1 // pred_fallthru
      _
    %3242 = vsyncpa [#allocation4], 1
    %3243 = vsyncpa [#allocation7], 1
    %3244 = vsyncpa [#allocation10], 1
    %3245 = vsyncpa [#allocation13], 1
    %3246 = vsyncpa [#allocation5], 1

</llo_original>
